<compile_context>
chip_gen: v7x
topology: tpu7x:2x2x1
jax: 0.10.0
libtpu: 0.0.40
codegen_flags: <defaults>
</compile_context>

<pallas_src>
import jax
import jax.numpy as jnp
from jax import lax
from jax.experimental import pallas as pl
from jax.experimental.pallas import tpu as pltpu

EPS = 1e-5
KS = 3                                   # 'spadeinstance3x3'
HIGH = jax.lax.Precision.HIGHEST         # used only by the pure-JAX reference


# ----------------------------------------------------------------------------
# Fused per-(sample, row-tile) kernel.
#   x_ref    : [1, C, TH*W]        f32  (channels on sublanes, spatial on lanes)
#   seg_ref  : [1, L, H+4, W+2]    f32  (padded, channel-first, full frame)
#   stats_ref: [1, 2C, 1]          f32  (per-channel mean | inv_std)
#   w1_ref   : [NH, 9*L]           bf16 (shared conv weight, im2col order)
#   b1_ref   : [NH, 1]             f32
#   wgb_ref  : [9, 2C, NH]         bf16 (gamma|beta conv weights, per tap)
#   bgb_ref  : [2C, 1]             f32
#   out_ref  : [1, C, TH*W]        f32
#   actv_ref : [TH+2, W+2, NH]     bf16 VMEM scratch (zero-padded activation)
# ----------------------------------------------------------------------------
def _spade_fused_kernel(x_ref, seg_ref, stats_ref, w1_ref, b1_ref, wgb_ref,
                        bgb_ref, out_ref, actv_ref):
    _, L, _, Wp2 = seg_ref.shape
    W = Wp2 - 2
    TH = actv_ref.shape[0] - 2
    NH = actv_ref.shape[2]
    C2 = bgb_ref.shape[0]
    C = C2 // 2
    M = TH * W                          # output positions in this tile
    M2 = (TH + 2) * W                   # activation positions incl. row halo

    t = pl.program_id(1)
    nt = pl.num_programs(1)
    rh = t * TH                         # top of this tile's window in padded segmap rows

    # ---- shared 3x3 conv (label_nc -> NH) + ReLU: one K = 9*L matmul -------
    # Each patch row is a lane-dense [1, M2] flattening of a small (TH+2, W)
    # seg window (spatial on lanes), so building the [9L, M2] operand costs
    # ~one pass over the window instead of 9 lane-padded per-tap copies.
    pieces = []
    for l in range(L):
        for dy in range(KS):
            for dx in range(KS):
                win = seg_ref[0, l, pl.ds(rh + dy, TH + 2), dx:dx + W]  # [TH+2, W]
                pieces.append(win.reshape(1, M2))
    patch = jnp.concatenate(pieces, axis=0).astype(jnp.bfloat16)        # [9L, M2]
    act_t = jnp.dot(w1_ref[...], patch,
                    preferred_element_type=jnp.float32)                 # [NH, M2]
    act_t = jnp.maximum(act_t + b1_ref[...], 0.0).astype(jnp.bfloat16)

    # ---- bf16 activation, zero-padded, resident in VMEM for this tile ------
    # Invariant (do not break when changing tiling): the interior
    # [:, 1:W+1, :] is fully overwritten every grid step; the two halo
    # columns are re-zeroed every step (tiny, and megacore-safe since no
    # cross-step scratch state is relied on); the halo rows are only zeroed
    # on frame-border tiles, where the just-stored values are conv junk
    # computed from the zero-padded segmap rows.
    actv_ref[:, 1:W + 1, :] = act_t.T.reshape(TH + 2, W, NH)
    zcol = jnp.zeros((TH + 2, 1, NH), jnp.bfloat16)
    actv_ref[:, 0:1, :] = zcol
    actv_ref[:, W + 1:W + 2, :] = zcol

    @pl.when(t == 0)
    def _():
        actv_ref[0:1, :, :] = jnp.zeros((1, W + 2, NH), jnp.bfloat16)

    @pl.when(t == nt - 1)
    def _():
        actv_ref[TH + 1:TH + 2, :, :] = jnp.zeros((1, W + 2, NH), jnp.bfloat16)

    # ---- gamma/beta 3x3 convs (NH -> 2C): 9 per-tap K = NH matmuls ---------
    # 3 dx-shifted slabs; the dy shifts are 8-aligned sublane views of them
    # (W % 8 == 0 for the supported sizes), so only the dx relayouts copy data.
    # TODO(synk): storing actv directly in slab layout would remove even these
    # 3 per-tile copies at the cost of 3x activation VMEM.
    slabs = [actv_ref[:, dx:dx + W, :].reshape(M2, NH) for dx in range(KS)]
    dn = (((1,), (1,)), ((), ()))       # contract the NH (lane) dims: Wt @ tap^T
    acc = jnp.zeros((C2, M), jnp.float32)
    for tap in range(KS * KS):
        dy, dx = tap // KS, tap % KS
        a_tap = slabs[dx][dy * W:dy * W + M, :]                         # [M, NH]
        acc = acc + lax.dot_general(wgb_ref[tap], a_tap, dn,
                                    preferred_element_type=jnp.float32)
    acc = acc + bgb_ref[...]                                            # [2C, M]
    gamma = acc[:C, :]
    beta = acc[C:, :]

    # ---- instance-norm affine (mean / inv_std precomputed wrapper-side) ----
    xn = (x_ref[0].astype(jnp.float32) - stats_ref[0, :C, :]) * stats_ref[0, C:, :]
    out_ref[0] = (xn * (1.0 + gamma) + beta).astype(out_ref.dtype)


# ----------------------------------------------------------------------------
# Wrapper helpers.
# ----------------------------------------------------------------------------
def _pick_block_h(H, W, block_h):
    if block_h is None:
        # TODO(synk): sweep per TPU generation (smaller on v7x's 64 MiB VMEM).
        for cand in (64, 32, 16, 8):
            if H % cand == 0 and (cand * W) % 128 == 0:
                return cand
        return H
    assert H % block_h == 0, "block_h must divide H"
    assert block_h == H or (block_h * W) % 128 == 0, \
        "block_h * W must be a multiple of 128 (TPU lane tiling)"
    return block_h


def _vmem_limit_bytes():
    try:
        cap = int(pltpu.get_tpu_info().vmem_capacity_bytes)
    except Exception:
        cap = 64 * 1024 * 1024
    # ~25% headroom: 96 MiB on v5e/v6e (128 MiB physical), 48 MiB on v7x (64 MiB).
    return max(32 * 1024 * 1024, min((cap // 4) * 3, 112 * 1024 * 1024))


def spade_forward(x_nchw, segmap_nchw, params, block_h=None):
    N, C, H, W = x_nchw.shape
    _, L, hs, ws = segmap_nchw.shape
    NH = params["w1"].shape[-1]

    TH = _pick_block_h(H, W, block_h)
    nt = H // TH

    # Instance-norm statistics (tiny fused XLA reduction; prerequisite for
    # the row tiling and removes the in-kernel cross-lane reduction).
    xf = x_nchw.astype(jnp.float32)
    mean = jnp.mean(xf, axis=(2, 3))                                    # [N, C]
    var = jnp.mean(jnp.square(xf - mean[:, :, None, None]), axis=(2, 3))  # biased
    inv_std = lax.rsqrt(var + EPS)
    stats = jnp.concatenate([mean, inv_std], axis=1)[:, :, None]        # [N, 2C, 1]

    # Nearest-neighbour resize of segmap to (H, W) -- matches F.interpolate.
    idx_h = (jnp.arange(H) * hs) // H
    idx_w = (jnp.arange(W) * ws) // W
    seg = segmap_nchw[:, :, idx_h[:, None], idx_w[None, :]].astype(jnp.float32)
    # Channel-first (lane-dense) zero-padded segmap: 2 rows top/bottom
    # (shared conv pad + 1-row activation halo recompute), 1 column each side.
    segp = jnp.pad(seg, ((0, 0), (0, 0), (2, 2), (1, 1)))               # [N,L,H+4,W+2]

    # x / out stay channels-first: [N, C, H*W] is a free reshape of NCHW.
    x = x_nchw.reshape(N, C, H * W).astype(jnp.float32)

    # Weight packing (host/XLA side, negligible).
    w1f = jnp.transpose(params["w1"], (2, 0, 1, 3)).reshape(KS * KS * L, NH)
    w1f = jnp.transpose(w1f).astype(jnp.bfloat16)                       # [NH, 9L]
    b1 = params["b1"].reshape(NH, 1).astype(jnp.float32)
    wg = jnp.transpose(params["wg"], (0, 1, 3, 2)).reshape(KS * KS, C, NH)
    wb = jnp.transpose(params["wb"], (0, 1, 3, 2)).reshape(KS * KS, C, NH)
    wgb = jnp.concatenate([wg, wb], axis=1).astype(jnp.bfloat16)        # [9, 2C, NH]
    bgb = jnp.concatenate([params["bg"].reshape(-1), params["bb"].reshape(-1)]
                          ).reshape(2 * C, 1).astype(jnp.float32)

    flops = N * (2 * (H + 2 * nt) * W * (KS * KS * L) * NH
                 + 2 * H * W * (KS * KS) * NH * (2 * C))
    bytes_accessed = (4 * (2 * x.size + segp.size + stats.size)
                      + 2 * (w1f.size + wgb.size) + 4 * (b1.size + bgb.size))

    out = pl.pallas_call(
        _spade_fused_kernel,
        out_shape=jax.ShapeDtypeStruct((N, C, H * W), jnp.float32),
        grid=(N, nt),
        in_specs=[
            pl.BlockSpec((1, C, TH * W), lambda n, t: (n, 0, t)),
            pl.BlockSpec((1, L, H + 4, W + 2), lambda n, t: (n, 0, 0, 0)),
            pl.BlockSpec((1, 2 * C, 1), lambda n, t: (n, 0, 0)),
            pl.BlockSpec((NH, KS * KS * L), lambda n, t: (0, 0)),
            pl.BlockSpec((NH, 1), lambda n, t: (0, 0)),
            pl.BlockSpec((KS * KS, 2 * C, NH), lambda n, t: (0, 0, 0)),
            pl.BlockSpec((2 * C, 1), lambda n, t: (0, 0)),
        ],
        out_specs=pl.BlockSpec((1, C, TH * W), lambda n, t: (n, 0, t)),
        scratch_shapes=[
            pltpu.VMEM((TH + 2, W + 2, NH), jnp.bfloat16),   # padded activation tile
        ],
        compiler_params=pltpu.CompilerParams(
            dimension_semantics=("parallel", "parallel"),
            vmem_limit_bytes=_vmem_limit_bytes()),
        cost_estimate=pl.CostEstimate(flops=int(flops), transcendentals=0,
                                      bytes_accessed=int(bytes_accessed)),
    )(x, segp, stats, w1f, b1, wgb, bgb)

    return out.reshape(N, C, H, W)


# ----------------------------------------------------------------------------
# Pure-JAX reference (f32 HIGHEST XLA convs) for the correctness check.
# ----------------------------------------------------------------------------
def spade_reference(x_nchw, segmap_nchw, params):
    N, C, H, W = x_nchw.shape
    _, L, hs, ws = segmap_nchw.shape
    x = jnp.transpose(x_nchw, (0, 2, 3, 1)).astype(jnp.float32)
    mean = jnp.mean(x, axis=(1, 2), keepdims=True)
    var = jnp.mean((x - mean) ** 2, axis=(1, 2), keepdims=True)
    normalized = (x - mean) / jnp.sqrt(var + EPS)

    idx_h = (jnp.arange(H) * hs) // H
    idx_w = (jnp.arange(W) * ws) // W
    seg_up = segmap_nchw[:, :, idx_h[:, None], idx_w[None, :]]
    seg = jnp.transpose(seg_up, (0, 2, 3, 1)).astype(jnp.float32)

    def conv(inp, w, b):
        y = jax.lax.conv_general_dilated(
            inp, w, window_strides=(1, 1), padding="SAME",
            dimension_numbers=("NHWC", "HWIO", "NHWC"), precision=HIGH)
        return y + b.reshape(1, 1, 1, -1)

    actv = jax.nn.relu(conv(seg, params["w1"], params["b1"]))
    gamma = conv(actv, params["wg"], params["bg"])
    beta = conv(actv, params["wb"], params["bb"])
    out = normalized * (1.0 + gamma) + beta
    return jnp.transpose(out, (0, 3, 1, 2))


if __name__ == "__main__":
    # module config: SPADE('spadeinstance3x3', norm_nc=4, label_nc=3)
    N, C, L = 2, 4, 3        # batch, norm_nc, label_nc
    H, W = 16, 16            # x spatial
    hs, ws = 8, 8            # segmap spatial (nearest-upsampled to HxW)
    NH = 128                 # nhidden (hardcoded in module)

    key = jax.random.PRNGKey(0)
    k = jax.random.split(key, 8)
    x = jax.random.normal(k[0], (N, C, H, W), jnp.float32)
    segmap = jax.random.normal(k[1], (N, L, hs, ws), jnp.float32)

    # deterministic synthetic parameters (HWIO conv weight layout)
    params = {
        "w1": jax.random.normal(k[2], (KS, KS, L, NH), jnp.float32) * 0.1,
        "b1": jax.random.normal(k[3], (1, NH), jnp.float32) * 0.1,
        "wg": jax.random.normal(k[4], (KS, KS, NH, C), jnp.float32) * 0.05,
        "bg": jax.random.normal(k[5], (1, C), jnp.float32) * 0.1,
        "wb": jax.random.normal(k[6], (KS, KS, NH, C), jnp.float32) * 0.05,
        "bb": jax.random.normal(k[7], (1, C), jnp.float32) * 0.1,
    }

    ref = spade_reference(x, segmap, params)

    # block_h=8 exercises the row-tiled path (2 tiles: first/last halo logic);
    # block_h=16 is the single-tile path.  Both must match the f32 reference.
    for bh in (8, 16):
        out = spade_forward(x, segmap, params, block_h=bh)
        out = jax.block_until_ready(out)
        assert out.shape == (N, C, H, W), out.shape
        err = float(jnp.max(jnp.abs(out - ref)))
        # Tolerance sized for bf16 MXU operands + bf16 activation storage with
        # f32 accumulation vs. an all-f32 HIGHEST reference (real bugs show up
        # as O(0.1-1) errors).
        assert jnp.allclose(out, ref, atol=3e-2, rtol=2e-2), (
            "block_h=%d mismatch vs reference: max abs err = %e" % (bh, err))

    print("KERNEL_OK")
</pallas_src>

<mosaic_0001>
module attributes {stable_mosaic.version = 11 : i64} {
  func.func @_spade_fused_kernel(%arg0: i32, %arg1: i32, %arg2: memref<1x4x128xf32, #tpu.memory_space<vmem>>, %arg3: memref<1x3x20x18xf32, #tpu.memory_space<vmem>>, %arg4: memref<1x8x1xf32, #tpu.memory_space<vmem>>, %arg5: memref<128x27xbf16, #tpu.memory_space<vmem>>, %arg6: memref<128x1xf32, #tpu.memory_space<vmem>>, %arg7: memref<9x8x128xbf16, #tpu.memory_space<vmem>>, %arg8: memref<8x1xf32, #tpu.memory_space<vmem>>, %arg9: memref<1x4x128xf32, #tpu.memory_space<vmem>>, %arg10: memref<10x18x128xbf16, #tpu.memory_space<vmem>>) attributes {dimension_semantics = [#tpu.dimension_semantics<parallel>, #tpu.dimension_semantics<parallel>], iteration_bounds = array<i64: 2, 2>, scalar_prefetch = 0 : i64, scratch_operands = 1 : i64, tpu.core_type = #tpu.core_type<tc>, window_params = [{transform_indices = @transform_0, window_bounds = array<i64: 1, 4, 128>}, {transform_indices = @transform_1, window_bounds = array<i64: 1, 3, 20, 18>}, {transform_indices = @transform_2, window_bounds = array<i64: 1, 8, 1>}, {pipeline_mode = #tpu.pipeline_mode<synchronous>, transform_indices = @transform_3, window_bounds = array<i64: 128, 27>}, {pipeline_mode = #tpu.pipeline_mode<synchronous>, transform_indices = @transform_4, window_bounds = array<i64: 128, 1>}, {pipeline_mode = #tpu.pipeline_mode<synchronous>, transform_indices = @transform_5, window_bounds = array<i64: 9, 8, 128>}, {pipeline_mode = #tpu.pipeline_mode<synchronous>, transform_indices = @transform_6, window_bounds = array<i64: 8, 1>}, {transform_indices = @transform_7, window_bounds = array<i64: 1, 4, 128>}]} {
    %c8_i32 = arith.constant 8 : i32
    %0 = arith.muli %arg1, %c8_i32 : i32
    %c0_i32 = arith.constant 0 : i32
    %1 = arith.addi %0, %c0_i32 : i32
    %c0 = arith.constant 0 : index
    %c0_0 = arith.constant 0 : index
    %2 = arith.index_cast %1 : i32 to index
    %c0_1 = arith.constant 0 : index
    %3 = vector.load %arg3[%c0, %c0_0, %2, %c0_1] : memref<1x3x20x18xf32, #tpu.memory_space<vmem>>, vector<1x1x10x16xf32>
    %4 = vector.shape_cast %3 : vector<1x1x10x16xf32> to vector<10x16xf32>
    %5 = vector.shape_cast %4 : vector<10x16xf32> to vector<1x160xf32>
    %c0_i32_2 = arith.constant 0 : i32
    %6 = arith.addi %0, %c0_i32_2 : i32
    %c0_3 = arith.constant 0 : index
    %c0_4 = arith.constant 0 : index
    %7 = arith.index_cast %6 : i32 to index
    %c1 = arith.constant 1 : index
    %8 = vector.load %arg3[%c0_3, %c0_4, %7, %c1] : memref<1x3x20x18xf32, #tpu.memory_space<vmem>>, vector<1x1x10x16xf32>
    %9 = vector.shape_cast %8 : vector<1x1x10x16xf32> to vector<10x16xf32>
    %10 = vector.shape_cast %9 : vector<10x16xf32> to vector<1x160xf32>
    %c0_i32_5 = arith.constant 0 : i32
    %11 = arith.addi %0, %c0_i32_5 : i32
    %c0_6 = arith.constant 0 : index
    %c0_7 = arith.constant 0 : index
    %12 = arith.index_cast %11 : i32 to index
    %c2 = arith.constant 2 : index
    %13 = vector.load %arg3[%c0_6, %c0_7, %12, %c2] : memref<1x3x20x18xf32, #tpu.memory_space<vmem>>, vector<1x1x10x16xf32>
    %14 = vector.shape_cast %13 : vector<1x1x10x16xf32> to vector<10x16xf32>
    %15 = vector.shape_cast %14 : vector<10x16xf32> to vector<1x160xf32>
    %c1_i32 = arith.constant 1 : i32
    %16 = arith.addi %0, %c1_i32 : i32
    %c0_8 = arith.constant 0 : index
    %c0_9 = arith.constant 0 : index
    %17 = arith.index_cast %16 : i32 to index
    %c0_10 = arith.constant 0 : index
    %18 = vector.load %arg3[%c0_8, %c0_9, %17, %c0_10] : memref<1x3x20x18xf32, #tpu.memory_space<vmem>>, vector<1x1x10x16xf32>
    %19 = vector.shape_cast %18 : vector<1x1x10x16xf32> to vector<10x16xf32>
    %20 = vector.shape_cast %19 : vector<10x16xf32> to vector<1x160xf32>
    %c1_i32_11 = arith.constant 1 : i32
    %21 = arith.addi %0, %c1_i32_11 : i32
    %c0_12 = arith.constant 0 : index
    %c0_13 = arith.constant 0 : index
    %22 = arith.index_cast %21 : i32 to index
    %c1_14 = arith.constant 1 : index
    %23 = vector.load %arg3[%c0_12, %c0_13, %22, %c1_14] : memref<1x3x20x18xf32, #tpu.memory_space<vmem>>, vector<1x1x10x16xf32>
    %24 = vector.shape_cast %23 : vector<1x1x10x16xf32> to vector<10x16xf32>
    %25 = vector.shape_cast %24 : vector<10x16xf32> to vector<1x160xf32>
    %c1_i32_15 = arith.constant 1 : i32
    %26 = arith.addi %0, %c1_i32_15 : i32
    %c0_16 = arith.constant 0 : index
    %c0_17 = arith.constant 0 : index
    %27 = arith.index_cast %26 : i32 to index
    %c2_18 = arith.constant 2 : index
    %28 = vector.load %arg3[%c0_16, %c0_17, %27, %c2_18] : memref<1x3x20x18xf32, #tpu.memory_space<vmem>>, vector<1x1x10x16xf32>
    %29 = vector.shape_cast %28 : vector<1x1x10x16xf32> to vector<10x16xf32>
    %30 = vector.shape_cast %29 : vector<10x16xf32> to vector<1x160xf32>
    %c2_i32 = arith.constant 2 : i32
    %31 = arith.addi %0, %c2_i32 : i32
    %c0_19 = arith.constant 0 : index
    %c0_20 = arith.constant 0 : index
    %32 = arith.index_cast %31 : i32 to index
    %c0_21 = arith.constant 0 : index
    %33 = vector.load %arg3[%c0_19, %c0_20, %32, %c0_21] : memref<1x3x20x18xf32, #tpu.memory_space<vmem>>, vector<1x1x10x16xf32>
    %34 = vector.shape_cast %33 : vector<1x1x10x16xf32> to vector<10x16xf32>
    %35 = vector.shape_cast %34 : vector<10x16xf32> to vector<1x160xf32>
    %c2_i32_22 = arith.constant 2 : i32
    %36 = arith.addi %0, %c2_i32_22 : i32
    %c0_23 = arith.constant 0 : index
    %c0_24 = arith.constant 0 : index
    %37 = arith.index_cast %36 : i32 to index
    %c1_25 = arith.constant 1 : index
    %38 = vector.load %arg3[%c0_23, %c0_24, %37, %c1_25] : memref<1x3x20x18xf32, #tpu.memory_space<vmem>>, vector<1x1x10x16xf32>
    %39 = vector.shape_cast %38 : vector<1x1x10x16xf32> to vector<10x16xf32>
    %40 = vector.shape_cast %39 : vector<10x16xf32> to vector<1x160xf32>
    %c2_i32_26 = arith.constant 2 : i32
    %41 = arith.addi %0, %c2_i32_26 : i32
    %c0_27 = arith.constant 0 : index
    %c0_28 = arith.constant 0 : index
    %42 = arith.index_cast %41 : i32 to index
    %c2_29 = arith.constant 2 : index
    %43 = vector.load %arg3[%c0_27, %c0_28, %42, %c2_29] : memref<1x3x20x18xf32, #tpu.memory_space<vmem>>, vector<1x1x10x16xf32>
    %44 = vector.shape_cast %43 : vector<1x1x10x16xf32> to vector<10x16xf32>
    %45 = vector.shape_cast %44 : vector<10x16xf32> to vector<1x160xf32>
    %c0_i32_30 = arith.constant 0 : i32
    %46 = arith.addi %0, %c0_i32_30 : i32
    %c0_31 = arith.constant 0 : index
    %c1_32 = arith.constant 1 : index
    %47 = arith.index_cast %46 : i32 to index
    %c0_33 = arith.constant 0 : index
    %48 = vector.load %arg3[%c0_31, %c1_32, %47, %c0_33] : memref<1x3x20x18xf32, #tpu.memory_space<vmem>>, vector<1x1x10x16xf32>
    %49 = vector.shape_cast %48 : vector<1x1x10x16xf32> to vector<10x16xf32>
    %50 = vector.shape_cast %49 : vector<10x16xf32> to vector<1x160xf32>
    %c0_i32_34 = arith.constant 0 : i32
    %51 = arith.addi %0, %c0_i32_34 : i32
    %c0_35 = arith.constant 0 : index
    %c1_36 = arith.constant 1 : index
    %52 = arith.index_cast %51 : i32 to index
    %c1_37 = arith.constant 1 : index
    %53 = vector.load %arg3[%c0_35, %c1_36, %52, %c1_37] : memref<1x3x20x18xf32, #tpu.memory_space<vmem>>, vector<1x1x10x16xf32>
    %54 = vector.shape_cast %53 : vector<1x1x10x16xf32> to vector<10x16xf32>
    %55 = vector.shape_cast %54 : vector<10x16xf32> to vector<1x160xf32>
    %c0_i32_38 = arith.constant 0 : i32
    %56 = arith.addi %0, %c0_i32_38 : i32
    %c0_39 = arith.constant 0 : index
    %c1_40 = arith.constant 1 : index
    %57 = arith.index_cast %56 : i32 to index
    %c2_41 = arith.constant 2 : index
    %58 = vector.load %arg3[%c0_39, %c1_40, %57, %c2_41] : memref<1x3x20x18xf32, #tpu.memory_space<vmem>>, vector<1x1x10x16xf32>
    %59 = vector.shape_cast %58 : vector<1x1x10x16xf32> to vector<10x16xf32>
    %60 = vector.shape_cast %59 : vector<10x16xf32> to vector<1x160xf32>
    %c1_i32_42 = arith.constant 1 : i32
    %61 = arith.addi %0, %c1_i32_42 : i32
    %c0_43 = arith.constant 0 : index
    %c1_44 = arith.constant 1 : index
    %62 = arith.index_cast %61 : i32 to index
    %c0_45 = arith.constant 0 : index
    %63 = vector.load %arg3[%c0_43, %c1_44, %62, %c0_45] : memref<1x3x20x18xf32, #tpu.memory_space<vmem>>, vector<1x1x10x16xf32>
    %64 = vector.shape_cast %63 : vector<1x1x10x16xf32> to vector<10x16xf32>
    %65 = vector.shape_cast %64 : vector<10x16xf32> to vector<1x160xf32>
    %c1_i32_46 = arith.constant 1 : i32
    %66 = arith.addi %0, %c1_i32_46 : i32
    %c0_47 = arith.constant 0 : index
    %c1_48 = arith.constant 1 : index
    %67 = arith.index_cast %66 : i32 to index
    %c1_49 = arith.constant 1 : index
    %68 = vector.load %arg3[%c0_47, %c1_48, %67, %c1_49] : memref<1x3x20x18xf32, #tpu.memory_space<vmem>>, vector<1x1x10x16xf32>
    %69 = vector.shape_cast %68 : vector<1x1x10x16xf32> to vector<10x16xf32>
    %70 = vector.shape_cast %69 : vector<10x16xf32> to vector<1x160xf32>
    %c1_i32_50 = arith.constant 1 : i32
    %71 = arith.addi %0, %c1_i32_50 : i32
    %c0_51 = arith.constant 0 : index
    %c1_52 = arith.constant 1 : index
    %72 = arith.index_cast %71 : i32 to index
    %c2_53 = arith.constant 2 : index
    %73 = vector.load %arg3[%c0_51, %c1_52, %72, %c2_53] : memref<1x3x20x18xf32, #tpu.memory_space<vmem>>, vector<1x1x10x16xf32>
    %74 = vector.shape_cast %73 : vector<1x1x10x16xf32> to vector<10x16xf32>
    %75 = vector.shape_cast %74 : vector<10x16xf32> to vector<1x160xf32>
    %c2_i32_54 = arith.constant 2 : i32
    %76 = arith.addi %0, %c2_i32_54 : i32
    %c0_55 = arith.constant 0 : index
    %c1_56 = arith.constant 1 : index
    %77 = arith.index_cast %76 : i32 to index
    %c0_57 = arith.constant 0 : index
    %78 = vector.load %arg3[%c0_55, %c1_56, %77, %c0_57] : memref<1x3x20x18xf32, #tpu.memory_space<vmem>>, vector<1x1x10x16xf32>
    %79 = vector.shape_cast %78 : vector<1x1x10x16xf32> to vector<10x16xf32>
    %80 = vector.shape_cast %79 : vector<10x16xf32> to vector<1x160xf32>
    %c2_i32_58 = arith.constant 2 : i32
    %81 = arith.addi %0, %c2_i32_58 : i32
    %c0_59 = arith.constant 0 : index
    %c1_60 = arith.constant 1 : index
    %82 = arith.index_cast %81 : i32 to index
    %c1_61 = arith.constant 1 : index
    %83 = vector.load %arg3[%c0_59, %c1_60, %82, %c1_61] : memref<1x3x20x18xf32, #tpu.memory_space<vmem>>, vector<1x1x10x16xf32>
    %84 = vector.shape_cast %83 : vector<1x1x10x16xf32> to vector<10x16xf32>
    %85 = vector.shape_cast %84 : vector<10x16xf32> to vector<1x160xf32>
    %c2_i32_62 = arith.constant 2 : i32
    %86 = arith.addi %0, %c2_i32_62 : i32
    %c0_63 = arith.constant 0 : index
    %c1_64 = arith.constant 1 : index
    %87 = arith.index_cast %86 : i32 to index
    %c2_65 = arith.constant 2 : index
    %88 = vector.load %arg3[%c0_63, %c1_64, %87, %c2_65] : memref<1x3x20x18xf32, #tpu.memory_space<vmem>>, vector<1x1x10x16xf32>
    %89 = vector.shape_cast %88 : vector<1x1x10x16xf32> to vector<10x16xf32>
    %90 = vector.shape_cast %89 : vector<10x16xf32> to vector<1x160xf32>
    %c0_i32_66 = arith.constant 0 : i32
    %91 = arith.addi %0, %c0_i32_66 : i32
    %c0_67 = arith.constant 0 : index
    %c2_68 = arith.constant 2 : index
    %92 = arith.index_cast %91 : i32 to index
    %c0_69 = arith.constant 0 : index
    %93 = vector.load %arg3[%c0_67, %c2_68, %92, %c0_69] : memref<1x3x20x18xf32, #tpu.memory_space<vmem>>, vector<1x1x10x16xf32>
    %94 = vector.shape_cast %93 : vector<1x1x10x16xf32> to vector<10x16xf32>
    %95 = vector.shape_cast %94 : vector<10x16xf32> to vector<1x160xf32>
    %c0_i32_70 = arith.constant 0 : i32
    %96 = arith.addi %0, %c0_i32_70 : i32
    %c0_71 = arith.constant 0 : index
    %c2_72 = arith.constant 2 : index
    %97 = arith.index_cast %96 : i32 to index
    %c1_73 = arith.constant 1 : index
    %98 = vector.load %arg3[%c0_71, %c2_72, %97, %c1_73] : memref<1x3x20x18xf32, #tpu.memory_space<vmem>>, vector<1x1x10x16xf32>
    %99 = vector.shape_cast %98 : vector<1x1x10x16xf32> to vector<10x16xf32>
    %100 = vector.shape_cast %99 : vector<10x16xf32> to vector<1x160xf32>
    %c0_i32_74 = arith.constant 0 : i32
    %101 = arith.addi %0, %c0_i32_74 : i32
    %c0_75 = arith.constant 0 : index
    %c2_76 = arith.constant 2 : index
    %102 = arith.index_cast %101 : i32 to index
    %c2_77 = arith.constant 2 : index
    %103 = vector.load %arg3[%c0_75, %c2_76, %102, %c2_77] : memref<1x3x20x18xf32, #tpu.memory_space<vmem>>, vector<1x1x10x16xf32>
    %104 = vector.shape_cast %103 : vector<1x1x10x16xf32> to vector<10x16xf32>
    %105 = vector.shape_cast %104 : vector<10x16xf32> to vector<1x160xf32>
    %c1_i32_78 = arith.constant 1 : i32
    %106 = arith.addi %0, %c1_i32_78 : i32
    %c0_79 = arith.constant 0 : index
    %c2_80 = arith.constant 2 : index
    %107 = arith.index_cast %106 : i32 to index
    %c0_81 = arith.constant 0 : index
    %108 = vector.load %arg3[%c0_79, %c2_80, %107, %c0_81] : memref<1x3x20x18xf32, #tpu.memory_space<vmem>>, vector<1x1x10x16xf32>
    %109 = vector.shape_cast %108 : vector<1x1x10x16xf32> to vector<10x16xf32>
    %110 = vector.shape_cast %109 : vector<10x16xf32> to vector<1x160xf32>
    %c1_i32_82 = arith.constant 1 : i32
    %111 = arith.addi %0, %c1_i32_82 : i32
    %c0_83 = arith.constant 0 : index
    %c2_84 = arith.constant 2 : index
    %112 = arith.index_cast %111 : i32 to index
    %c1_85 = arith.constant 1 : index
    %113 = vector.load %arg3[%c0_83, %c2_84, %112, %c1_85] : memref<1x3x20x18xf32, #tpu.memory_space<vmem>>, vector<1x1x10x16xf32>
    %114 = vector.shape_cast %113 : vector<1x1x10x16xf32> to vector<10x16xf32>
    %115 = vector.shape_cast %114 : vector<10x16xf32> to vector<1x160xf32>
    %c1_i32_86 = arith.constant 1 : i32
    %116 = arith.addi %0, %c1_i32_86 : i32
    %c0_87 = arith.constant 0 : index
    %c2_88 = arith.constant 2 : index
    %117 = arith.index_cast %116 : i32 to index
    %c2_89 = arith.constant 2 : index
    %118 = vector.load %arg3[%c0_87, %c2_88, %117, %c2_89] : memref<1x3x20x18xf32, #tpu.memory_space<vmem>>, vector<1x1x10x16xf32>
    %119 = vector.shape_cast %118 : vector<1x1x10x16xf32> to vector<10x16xf32>
    %120 = vector.shape_cast %119 : vector<10x16xf32> to vector<1x160xf32>
    %c2_i32_90 = arith.constant 2 : i32
    %121 = arith.addi %0, %c2_i32_90 : i32
    %c0_91 = arith.constant 0 : index
    %c2_92 = arith.constant 2 : index
    %122 = arith.index_cast %121 : i32 to index
    %c0_93 = arith.constant 0 : index
    %123 = vector.load %arg3[%c0_91, %c2_92, %122, %c0_93] : memref<1x3x20x18xf32, #tpu.memory_space<vmem>>, vector<1x1x10x16xf32>
    %124 = vector.shape_cast %123 : vector<1x1x10x16xf32> to vector<10x16xf32>
    %125 = vector.shape_cast %124 : vector<10x16xf32> to vector<1x160xf32>
    %c2_i32_94 = arith.constant 2 : i32
    %126 = arith.addi %0, %c2_i32_94 : i32
    %c0_95 = arith.constant 0 : index
    %c2_96 = arith.constant 2 : index
    %127 = arith.index_cast %126 : i32 to index
    %c1_97 = arith.constant 1 : index
    %128 = vector.load %arg3[%c0_95, %c2_96, %127, %c1_97] : memref<1x3x20x18xf32, #tpu.memory_space<vmem>>, vector<1x1x10x16xf32>
    %129 = vector.shape_cast %128 : vector<1x1x10x16xf32> to vector<10x16xf32>
    %130 = vector.shape_cast %129 : vector<10x16xf32> to vector<1x160xf32>
    %c2_i32_98 = arith.constant 2 : i32
    %131 = arith.addi %0, %c2_i32_98 : i32
    %c0_99 = arith.constant 0 : index
    %c2_100 = arith.constant 2 : index
    %132 = arith.index_cast %131 : i32 to index
    %c2_101 = arith.constant 2 : index
    %133 = vector.load %arg3[%c0_99, %c2_100, %132, %c2_101] : memref<1x3x20x18xf32, #tpu.memory_space<vmem>>, vector<1x1x10x16xf32>
    %134 = vector.shape_cast %133 : vector<1x1x10x16xf32> to vector<10x16xf32>
    %135 = vector.shape_cast %134 : vector<10x16xf32> to vector<1x160xf32>
    %136 = tpu.concatenate %5, %10, %15, %20, %25, %30, %35, %40, %45, %50, %55, %60, %65, %70, %75, %80 in 0 : vector<1x160xf32>, vector<1x160xf32>, vector<1x160xf32>, vector<1x160xf32>, vector<1x160xf32>, vector<1x160xf32>, vector<1x160xf32>, vector<1x160xf32>, vector<1x160xf32>, vector<1x160xf32>, vector<1x160xf32>, vector<1x160xf32>, vector<1x160xf32>, vector<1x160xf32>, vector<1x160xf32>, vector<1x160xf32> -> vector<16x160xf32>
    %137 = tpu.concatenate %85, %90, %95, %100, %105, %110, %115, %120, %125, %130, %135 in 0 : vector<1x160xf32>, vector<1x160xf32>, vector<1x160xf32>, vector<1x160xf32>, vector<1x160xf32>, vector<1x160xf32>, vector<1x160xf32>, vector<1x160xf32>, vector<1x160xf32>, vector<1x160xf32>, vector<1x160xf32> -> vector<11x160xf32>
    %138 = tpu.concatenate %136, %137 in 0 : vector<16x160xf32>, vector<11x160xf32> -> vector<27x160xf32>
    %139 = arith.truncf %138 : vector<27x160xf32> to vector<27x160xbf16>
    %c0_102 = arith.constant 0 : index
    %c0_103 = arith.constant 0 : index
    %140 = vector.load %arg5[%c0_102, %c0_103] : memref<128x27xbf16, #tpu.memory_space<vmem>>, vector<128x27xbf16>
    %cst = arith.constant dense<0.000000e+00> : vector<128x160xf32>
    %141 = tpu.matmul %140, %139, %cst {dimension_numbers = #tpu.dot_dimension_numbers<[1], [0], [0], [1], [0, 0, 1, 1], [], []>} : vector<128x27xbf16>, vector<27x160xbf16>, vector<128x160xf32> -> vector<128x160xf32>
    %c0_104 = arith.constant 0 : index
    %c0_105 = arith.constant 0 : index
    %142 = vector.load %arg6[%c0_104, %c0_105] : memref<128x1xf32, #tpu.memory_space<vmem>>, vector<128x1xf32>
    %143 = vector.broadcast %142 : vector<128x1xf32> to vector<128x160xf32>
    %144 = arith.addf %141, %143 : vector<128x160xf32>
    %cst_106 = arith.constant 0.000000e+00 : f32
    %145 = vector.broadcast %cst_106 : f32 to vector<128x160xf32>
    %146 = arith.maximumf %144, %145 : vector<128x160xf32>
    %147 = arith.truncf %146 : vector<128x160xf32> to vector<128x160xbf16>
    %148 = tpu.transpose %147, [1, 0] : vector<128x160xbf16> -> vector<160x128xbf16>
    %149 = vector.shape_cast %148 : vector<160x128xbf16> to vector<10x16x128xbf16>
    %c0_107 = arith.constant 0 : index
    %c1_108 = arith.constant 1 : index
    %c0_109 = arith.constant 0 : index
    %150 = vector.load %arg10[%c0_107, %c1_108, %c0_109] : memref<10x18x128xbf16, #tpu.memory_space<vmem>>, vector<10x16x128xbf16>
    tpu.vector_store %arg10[%c0_107, %c1_108, %c0_109], %149 {strides = array<i32>} : memref<10x18x128xbf16, #tpu.memory_space<vmem>>, vector<10x16x128xbf16>,
    %cst_110 = arith.constant 0.000000e+00 : bf16
    %151 = vector.broadcast %cst_110 : bf16 to vector<10x1x128xbf16>
    %c0_111 = arith.constant 0 : index
    %c0_112 = arith.constant 0 : index
    %c0_113 = arith.constant 0 : index
    %152 = vector.load %arg10[%c0_111, %c0_112, %c0_113] : memref<10x18x128xbf16, #tpu.memory_space<vmem>>, vector<10x1x128xbf16>
    tpu.vector_store %arg10[%c0_111, %c0_112, %c0_113], %151 {strides = array<i32>} : memref<10x18x128xbf16, #tpu.memory_space<vmem>>, vector<10x1x128xbf16>,
    %c0_114 = arith.constant 0 : index
    %c17 = arith.constant 17 : index
    %c0_115 = arith.constant 0 : index
    %153 = vector.load %arg10[%c0_114, %c17, %c0_115] : memref<10x18x128xbf16, #tpu.memory_space<vmem>>, vector<10x1x128xbf16>
    tpu.vector_store %arg10[%c0_114, %c17, %c0_115], %151 {strides = array<i32>} : memref<10x18x128xbf16, #tpu.memory_space<vmem>>, vector<10x1x128xbf16>,
    %c0_i32_116 = arith.constant 0 : i32
    %154 = arith.cmpi eq, %arg1, %c0_i32_116 : i32
    %155 = arith.extui %154 : i1 to i32
    %c0_i32_117 = arith.constant 0 : i32
    %156 = arith.cmpi ne, %155, %c0_i32_117 : i32
    scf.if %156 {
      %cst_175 = arith.constant 0.000000e+00 : bf16
      %234 = vector.broadcast %cst_175 : bf16 to vector<1x18x128xbf16>
      %c0_176 = arith.constant 0 : index
      %c0_177 = arith.constant 0 : index
      %c0_178 = arith.constant 0 : index
      %235 = vector.load %arg10[%c0_176, %c0_177, %c0_178] : memref<10x18x128xbf16, #tpu.memory_space<vmem>>, vector<1x18x128xbf16>
      tpu.vector_store %arg10[%c0_176, %c0_177, %c0_178], %234 {strides = array<i32>} : memref<10x18x128xbf16, #tpu.memory_space<vmem>>, vector<1x18x128xbf16>,
    } else {
    }
    %c1_i32_118 = arith.constant 1 : i32
    %157 = arith.cmpi eq, %arg1, %c1_i32_118 : i32
    %158 = arith.extui %157 : i1 to i32
    %c0_i32_119 = arith.constant 0 : i32
    %159 = arith.cmpi ne, %158, %c0_i32_119 : i32
    scf.if %159 {
      %cst_175 = arith.constant 0.000000e+00 : bf16
      %234 = vector.broadcast %cst_175 : bf16 to vector<1x18x128xbf16>
      %c9 = arith.constant 9 : index
      %c0_176 = arith.constant 0 : index
      %c0_177 = arith.constant 0 : index
      %235 = vector.load %arg10[%c9, %c0_176, %c0_177] : memref<10x18x128xbf16, #tpu.memory_space<vmem>>, vector<1x18x128xbf16>
      tpu.vector_store %arg10[%c9, %c0_176, %c0_177], %234 {strides = array<i32>} : memref<10x18x128xbf16, #tpu.memory_space<vmem>>, vector<1x18x128xbf16>,
    } else {
    }
    %c0_120 = arith.constant 0 : index
    %c0_121 = arith.constant 0 : index
    %c0_122 = arith.constant 0 : index
    %160 = vector.load %arg10[%c0_120, %c0_121, %c0_122] : memref<10x18x128xbf16, #tpu.memory_space<vmem>>, vector<10x16x128xbf16>
    %161 = vector.shape_cast %160 : vector<10x16x128xbf16> to vector<160x128xbf16>
    %c0_123 = arith.constant 0 : index
    %c1_124 = arith.constant 1 : index
    %c0_125 = arith.constant 0 : index
    %162 = vector.load %arg10[%c0_123, %c1_124, %c0_125] : memref<10x18x128xbf16, #tpu.memory_space<vmem>>, vector<10x16x128xbf16>
    %163 = vector.shape_cast %162 : vector<10x16x128xbf16> to vector<160x128xbf16>
    %c0_126 = arith.constant 0 : index
    %c2_127 = arith.constant 2 : index
    %c0_128 = arith.constant 0 : index
    %164 = vector.load %arg10[%c0_126, %c2_127, %c0_128] : memref<10x18x128xbf16, #tpu.memory_space<vmem>>, vector<10x16x128xbf16>
    %165 = vector.shape_cast %164 : vector<10x16x128xbf16> to vector<160x128xbf16>
    %cst_129 = arith.constant 0.000000e+00 : f32
    %166 = vector.broadcast %cst_129 : f32 to vector<8x128xf32>
    %167 = vector.extract_strided_slice %161 {offsets = [0, 0], sizes = [128, 128], strides = [1, 1]} : vector<160x128xbf16> to vector<128x128xbf16>
    %c0_130 = arith.constant 0 : index
    %c0_131 = arith.constant 0 : index
    %c0_132 = arith.constant 0 : index
    %168 = vector.load %arg7[%c0_130, %c0_131, %c0_132] : memref<9x8x128xbf16, #tpu.memory_space<vmem>>, vector<1x8x128xbf16>
    %169 = vector.shape_cast %168 : vector<1x8x128xbf16> to vector<8x128xbf16>
    %cst_133 = arith.constant dense<0.000000e+00> : vector<8x128xf32>
    %170 = tpu.matmul %169, %167, %cst_133 {dimension_numbers = #tpu.dot_dimension_numbers<[1], [1], [0], [0], [0, 0, 1, 0], [], []>} : vector<8x128xbf16>, vector<128x128xbf16>, vector<8x128xf32> -> vector<8x128xf32>
    %171 = arith.addf %166, %170 : vector<8x128xf32>
    %172 = vector.extract_strided_slice %163 {offsets = [0, 0], sizes = [128, 128], strides = [1, 1]} : vector<160x128xbf16> to vector<128x128xbf16>
    %c1_134 = arith.constant 1 : index
    %c0_135 = arith.constant 0 : index
    %c0_136 = arith.constant 0 : index
    %173 = vector.load %arg7[%c1_134, %c0_135, %c0_136] : memref<9x8x128xbf16, #tpu.memory_space<vmem>>, vector<1x8x128xbf16>
    %174 = vector.shape_cast %173 : vector<1x8x128xbf16> to vector<8x128xbf16>
    %cst_137 = arith.constant dense<0.000000e+00> : vector<8x128xf32>
    %175 = tpu.matmul %174, %172, %cst_137 {dimension_numbers = #tpu.dot_dimension_numbers<[1], [1], [0], [0], [0, 0, 1, 0], [], []>} : vector<8x128xbf16>, vector<128x128xbf16>, vector<8x128xf32> -> vector<8x128xf32>
    %176 = arith.addf %171, %175 : vector<8x128xf32>
    %177 = vector.extract_strided_slice %165 {offsets = [0, 0], sizes = [128, 128], strides = [1, 1]} : vector<160x128xbf16> to vector<128x128xbf16>
    %c2_138 = arith.constant 2 : index
    %c0_139 = arith.constant 0 : index
    %c0_140 = arith.constant 0 : index
    %178 = vector.load %arg7[%c2_138, %c0_139, %c0_140] : memref<9x8x128xbf16, #tpu.memory_space<vmem>>, vector<1x8x128xbf16>
    %179 = vector.shape_cast %178 : vector<1x8x128xbf16> to vector<8x128xbf16>
    %cst_141 = arith.constant dense<0.000000e+00> : vector<8x128xf32>
    %180 = tpu.matmul %179, %177, %cst_141 {dimension_numbers = #tpu.dot_dimension_numbers<[1], [1], [0], [0], [0, 0, 1, 0], [], []>} : vector<8x128xbf16>, vector<128x128xbf16>, vector<8x128xf32> -> vector<8x128xf32>
    %181 = arith.addf %176, %180 : vector<8x128xf32>
    %182 = vector.extract_strided_slice %161 {offsets = [16, 0], sizes = [128, 128], strides = [1, 1]} : vector<160x128xbf16> to vector<128x128xbf16>
    %c3 = arith.constant 3 : index
    %c0_142 = arith.constant 0 : index
    %c0_143 = arith.constant 0 : index
    %183 = vector.load %arg7[%c3, %c0_142, %c0_143] : memref<9x8x128xbf16, #tpu.memory_space<vmem>>, vector<1x8x128xbf16>
    %184 = vector.shape_cast %183 : vector<1x8x128xbf16> to vector<8x128xbf16>
    %cst_144 = arith.constant dense<0.000000e+00> : vector<8x128xf32>
    %185 = tpu.matmul %184, %182, %cst_144 {dimension_numbers = #tpu.dot_dimension_numbers<[1], [1], [0], [0], [0, 0, 1, 0], [], []>} : vector<8x128xbf16>, vector<128x128xbf16>, vector<8x128xf32> -> vector<8x128xf32>
    %186 = arith.addf %181, %185 : vector<8x128xf32>
    %187 = vector.extract_strided_slice %163 {offsets = [16, 0], sizes = [128, 128], strides = [1, 1]} : vector<160x128xbf16> to vector<128x128xbf16>
    %c4 = arith.constant 4 : index
    %c0_145 = arith.constant 0 : index
    %c0_146 = arith.constant 0 : index
    %188 = vector.load %arg7[%c4, %c0_145, %c0_146] : memref<9x8x128xbf16, #tpu.memory_space<vmem>>, vector<1x8x128xbf16>
    %189 = vector.shape_cast %188 : vector<1x8x128xbf16> to vector<8x128xbf16>
    %cst_147 = arith.constant dense<0.000000e+00> : vector<8x128xf32>
    %190 = tpu.matmul %189, %187, %cst_147 {dimension_numbers = #tpu.dot_dimension_numbers<[1], [1], [0], [0], [0, 0, 1, 0], [], []>} : vector<8x128xbf16>, vector<128x128xbf16>, vector<8x128xf32> -> vector<8x128xf32>
    %191 = arith.addf %186, %190 : vector<8x128xf32>
    %192 = vector.extract_strided_slice %165 {offsets = [16, 0], sizes = [128, 128], strides = [1, 1]} : vector<160x128xbf16> to vector<128x128xbf16>
    %c5 = arith.constant 5 : index
    %c0_148 = arith.constant 0 : index
    %c0_149 = arith.constant 0 : index
    %193 = vector.load %arg7[%c5, %c0_148, %c0_149] : memref<9x8x128xbf16, #tpu.memory_space<vmem>>, vector<1x8x128xbf16>
    %194 = vector.shape_cast %193 : vector<1x8x128xbf16> to vector<8x128xbf16>
    %cst_150 = arith.constant dense<0.000000e+00> : vector<8x128xf32>
    %195 = tpu.matmul %194, %192, %cst_150 {dimension_numbers = #tpu.dot_dimension_numbers<[1], [1], [0], [0], [0, 0, 1, 0], [], []>} : vector<8x128xbf16>, vector<128x128xbf16>, vector<8x128xf32> -> vector<8x128xf32>
    %196 = arith.addf %191, %195 : vector<8x128xf32>
    %197 = vector.extract_strided_slice %161 {offsets = [32, 0], sizes = [128, 128], strides = [1, 1]} : vector<160x128xbf16> to vector<128x128xbf16>
    %c6 = arith.constant 6 : index
    %c0_151 = arith.constant 0 : index
    %c0_152 = arith.constant 0 : index
    %198 = vector.load %arg7[%c6, %c0_151, %c0_152] : memref<9x8x128xbf16, #tpu.memory_space<vmem>>, vector<1x8x128xbf16>
    %199 = vector.shape_cast %198 : vector<1x8x128xbf16> to vector<8x128xbf16>
    %cst_153 = arith.constant dense<0.000000e+00> : vector<8x128xf32>
    %200 = tpu.matmul %199, %197, %cst_153 {dimension_numbers = #tpu.dot_dimension_numbers<[1], [1], [0], [0], [0, 0, 1, 0], [], []>} : vector<8x128xbf16>, vector<128x128xbf16>, vector<8x128xf32> -> vector<8x128xf32>
    %201 = arith.addf %196, %200 : vector<8x128xf32>
    %202 = vector.extract_strided_slice %163 {offsets = [32, 0], sizes = [128, 128], strides = [1, 1]} : vector<160x128xbf16> to vector<128x128xbf16>
    %c7 = arith.constant 7 : index
    %c0_154 = arith.constant 0 : index
    %c0_155 = arith.constant 0 : index
    %203 = vector.load %arg7[%c7, %c0_154, %c0_155] : memref<9x8x128xbf16, #tpu.memory_space<vmem>>, vector<1x8x128xbf16>
    %204 = vector.shape_cast %203 : vector<1x8x128xbf16> to vector<8x128xbf16>
    %cst_156 = arith.constant dense<0.000000e+00> : vector<8x128xf32>
    %205 = tpu.matmul %204, %202, %cst_156 {dimension_numbers = #tpu.dot_dimension_numbers<[1], [1], [0], [0], [0, 0, 1, 0], [], []>} : vector<8x128xbf16>, vector<128x128xbf16>, vector<8x128xf32> -> vector<8x128xf32>
    %206 = arith.addf %201, %205 : vector<8x128xf32>
    %207 = vector.extract_strided_slice %165 {offsets = [32, 0], sizes = [128, 128], strides = [1, 1]} : vector<160x128xbf16> to vector<128x128xbf16>
    %c8 = arith.constant 8 : index
    %c0_157 = arith.constant 0 : index
    %c0_158 = arith.constant 0 : index
    %208 = vector.load %arg7[%c8, %c0_157, %c0_158] : memref<9x8x128xbf16, #tpu.memory_space<vmem>>, vector<1x8x128xbf16>
    %209 = vector.shape_cast %208 : vector<1x8x128xbf16> to vector<8x128xbf16>
    %cst_159 = arith.constant dense<0.000000e+00> : vector<8x128xf32>
    %210 = tpu.matmul %209, %207, %cst_159 {dimension_numbers = #tpu.dot_dimension_numbers<[1], [1], [0], [0], [0, 0, 1, 0], [], []>} : vector<8x128xbf16>, vector<128x128xbf16>, vector<8x128xf32> -> vector<8x128xf32>
    %211 = arith.addf %206, %210 : vector<8x128xf32>
    %c0_160 = arith.constant 0 : index
    %c0_161 = arith.constant 0 : index
    %212 = vector.load %arg8[%c0_160, %c0_161] : memref<8x1xf32, #tpu.memory_space<vmem>>, vector<8x1xf32>
    %213 = vector.broadcast %212 : vector<8x1xf32> to vector<8x128xf32>
    %214 = arith.addf %211, %213 : vector<8x128xf32>
    %215 = vector.extract_strided_slice %214 {offsets = [0, 0], sizes = [4, 128], strides = [1, 1]} : vector<8x128xf32> to vector<4x128xf32>
    %216 = vector.extract_strided_slice %214 {offsets = [4, 0], sizes = [4, 128], strides = [1, 1]} : vector<8x128xf32> to vector<4x128xf32>
    %c0_162 = arith.constant 0 : index
    %c0_163 = arith.constant 0 : index
    %c0_164 = arith.constant 0 : index
    %217 = vector.load %arg2[%c0_162, %c0_163, %c0_164] : memref<1x4x128xf32, #tpu.memory_space<vmem>>, vector<1x4x128xf32>
    %218 = vector.shape_cast %217 : vector<1x4x128xf32> to vector<4x128xf32>
    %c0_165 = arith.constant 0 : index
    %c0_166 = arith.constant 0 : index
    %c0_167 = arith.constant 0 : index
    %219 = vector.load %arg4[%c0_165, %c0_166, %c0_167] : memref<1x8x1xf32, #tpu.memory_space<vmem>>, vector<1x4x1xf32>
    %220 = vector.shape_cast %219 : vector<1x4x1xf32> to vector<4x1xf32>
    %221 = vector.broadcast %220 : vector<4x1xf32> to vector<4x128xf32>
    %222 = arith.subf %218, %221 : vector<4x128xf32>
    %c0_168 = arith.constant 0 : index
    %c4_169 = arith.constant 4 : index
    %c0_170 = arith.constant 0 : index
    %223 = vector.load %arg4[%c0_168, %c4_169, %c0_170] : memref<1x8x1xf32, #tpu.memory_space<vmem>>, vector<1x4x1xf32>
    %224 = vector.shape_cast %223 : vector<1x4x1xf32> to vector<4x1xf32>
    %225 = vector.broadcast %224 : vector<4x1xf32> to vector<4x128xf32>
    %226 = arith.mulf %222, %225 : vector<4x128xf32>
    %cst_171 = arith.constant 1.000000e+00 : f32
    %227 = vector.broadcast %cst_171 : f32 to vector<4x128xf32>
    %228 = arith.addf %227, %215 : vector<4x128xf32>
    %229 = arith.mulf %226, %228 : vector<4x128xf32>
    %230 = arith.addf %229, %216 : vector<4x128xf32>
    %c0_172 = arith.constant 0 : index
    %c0_173 = arith.constant 0 : index
    %c0_174 = arith.constant 0 : index
    %231 = vector.load %arg9[%c0_172, %c0_173, %c0_174] : memref<1x4x128xf32, #tpu.memory_space<vmem>>, vector<1x4x128xf32>
    %232 = vector.shape_cast %231 : vector<1x4x128xf32> to vector<4x128xf32>
    %233 = vector.shape_cast %230 : vector<4x128xf32> to vector<1x4x128xf32>
    tpu.vector_store %arg9[%c0_172, %c0_173, %c0_174], %233 {strides = array<i32>} : memref<1x4x128xf32, #tpu.memory_space<vmem>>, vector<1x4x128xf32>,
    return
  }
  func.func @transform_0(%arg0: i32, %arg1: i32) -> (i32, i32, i32) {
    %c0_i32 = arith.constant 0 : i32
    %c0_i32_0 = arith.constant 0 : i32
    return %arg0, %c0_i32, %arg1 : i32, i32, i32
  }
  func.func @transform_1(%arg0: i32, %arg1: i32) -> (i32, i32, i32, i32) {
    %c0_i32 = arith.constant 0 : i32
    %c0_i32_0 = arith.constant 0 : i32
    %c0_i32_1 = arith.constant 0 : i32
    %c0_i32_2 = arith.constant 0 : i32
    return %arg0, %c0_i32, %c0_i32_0, %c0_i32_1 : i32, i32, i32, i32
  }
  func.func @transform_2(%arg0: i32, %arg1: i32) -> (i32, i32, i32) {
    %c0_i32 = arith.constant 0 : i32
    %c0_i32_0 = arith.constant 0 : i32
    %c0_i32_1 = arith.constant 0 : i32
    return %arg0, %c0_i32, %c0_i32_0 : i32, i32, i32
  }
  func.func @transform_3(%arg0: i32, %arg1: i32) -> (i32, i32) {
    %c0_i32 = arith.constant 0 : i32
    %c0_i32_0 = arith.constant 0 : i32
    %c0_i32_1 = arith.constant 0 : i32
    return %c0_i32, %c0_i32_0 : i32, i32
  }
  func.func @transform_4(%arg0: i32, %arg1: i32) -> (i32, i32) {
    %c0_i32 = arith.constant 0 : i32
    %c0_i32_0 = arith.constant 0 : i32
    %c0_i32_1 = arith.constant 0 : i32
    return %c0_i32, %c0_i32_0 : i32, i32
  }
  func.func @transform_5(%arg0: i32, %arg1: i32) -> (i32, i32, i32) {
    %c0_i32 = arith.constant 0 : i32
    %c0_i32_0 = arith.constant 0 : i32
    %c0_i32_1 = arith.constant 0 : i32
    %c0_i32_2 = arith.constant 0 : i32
    return %c0_i32, %c0_i32_0, %c0_i32_1 : i32, i32, i32
  }
  func.func @transform_6(%arg0: i32, %arg1: i32) -> (i32, i32) {
    %c0_i32 = arith.constant 0 : i32
    %c0_i32_0 = arith.constant 0 : i32
    %c0_i32_1 = arith.constant 0 : i32
    return %c0_i32, %c0_i32_0 : i32, i32
  }
  func.func @transform_7(%arg0: i32, %arg1: i32) -> (i32, i32, i32) {
    %c0_i32 = arith.constant 0 : i32
    %c0_i32_0 = arith.constant 0 : i32
    return %arg0, %c0_i32, %arg1 : i32, i32, i32
  }
}

</mosaic_0001>

<llo_original>
// kernel: tpu_custom_call.1
$region0: #{tpu_custom_call.1}
  #allocation0 [shape = 'u32[]', space=smem, size = 0x4, offset = 0x4, fixed_abs, tag = 'smem constant byte address 0x4 - core index']
  #allocation1 [shape = 'u32[144,128]{1,0:T(1,128)}', space=vmem, size = 0x12000, scoped, tag = 'internal scratch']
  #allocation2 [shape = 'bf16[10,18,128]{2,1,0:T(8,128)(2,1)}', space=vmem, size = 0xf000, scoped, tag = 'scratch operand']
  %s0 = inlined_call_operand.vmem [shape: f32[2,4,256], index: 0, kind: input, shape index: {}]
  %s1 = inlined_call_operand.vmem [shape: f32[2,3,20,18], index: 1, kind: input, shape index: {}]
  %s2 = inlined_call_operand.vmem [shape: f32[2,8,1], index: 2, kind: input, shape index: {}]
  %s3 = inlined_call_operand.vmem [shape: bf16[128,27], index: 3, kind: input, shape index: {}]
  %s4 = inlined_call_operand.vmem [shape: f32[128,1], index: 4, kind: input, shape index: {}]
  %s5 = inlined_call_operand.vmem [shape: bf16[9,8,128], index: 5, kind: input, shape index: {}]
  %s6 = inlined_call_operand.vmem [shape: f32[8,1], index: 6, kind: input, shape index: {}]
  %s7 = inlined_call_operand.hbm [shape: f32[2,4,256], index: 7, kind: output, shape index: {}]
  %s8 = sld [smem:[#allocation0]]
  $region69: #{tpu_custom_call.1} parent=0
    _
  %s10 = ssub.s32 1, %s8
  %s11 = scalar_select 0, %s10, %s8
  $region1: #{tpu_custom_call.1} parent=0
    #allocation3 [shape = 'u8[4096]{0}', space=vmem, size = 0x1000, scoped, tag = 'output window, operand 0']
    #allocation4 [shape = 's32[2]{0}', space=sflag, size = 0x8, scoped, tag = 'scoped memory for tpu_custom_call.1']
    %12 = vsyncpa [#allocation4], 0
    %s13 = scalar_lea.sflag [#allocation4], 1
    %14 = vsyncpa %s13, 0
    loop: start=0, step=1, limit=6
    $region2: #{tpu_custom_call.1} parent=1 // loop_pre_header
      _
    $region3: #{tpu_custom_call.1} parent=1 // loop_header
      %s16 = sphi 0, %s20
      %p17 = scmp.ge.s32.totalorder %s16, 6
      %s23 = sphi 0, %s35
      %s24 = sphi 0, %s31
      %s25 = sphi 0, %s23
      %s26 = sphi 0, %s24
      %s27 = sphi 0, %s25
      %s28 = sphi 0, %s26
      %s40 = sphi 0, %s42
      %s43 = sphi 0, %s40
      %s44 = sphi 0, %s43
      %s60 = sphi 0, %s44
      %s66 = sphi 0, %s68
      %s69 = sphi 0, %s66
      %s70 = sphi 0, %s69
      %s86 = sphi 0, %s70
      %s92 = sphi 0, %s94
      %s95 = sphi 0, %s92
      %s96 = sphi 0, %s95
      %s112 = sphi 0, %s96
      %s116 = sphi 0, %s116
      %s118 = sphi 0, %s116
      %s119 = sphi 0, %s118
      %s133 = sphi 0, %s119
      %s137 = sphi 0, %s137
      %s139 = sphi 0, %s137
      %s140 = sphi 0, %s139
      %s154 = sphi 0, %s140
      %s158 = sphi 0, %s158
      %s160 = sphi 0, %s158
      %s161 = sphi 0, %s160
      %s175 = sphi 0, %s161
      %s179 = sphi 0, %s179
      %s181 = sphi 0, %s179
      %s182 = sphi 0, %s181
      %s196 = sphi 0, %s182
      %s204 = sphi 0, %s206
      %s207 = sphi 0, %s204
      %s208 = sphi 0, %s207
      %s224 = sphi 0, %s208
    $region4: #{tpu_custom_call.1} parent=1 // loop_header_branch
      %19 = sbr.rel (%p17) target = $region8
    $region5: #{tpu_custom_call.1} parent=1 // loop_body
      %s21 = ssub.s32 %s16, 1
      %s22 = ssub.s32 %s16, 2
      %s29 = sadd.s32 1, %s24
      %p30 = scmp.ge.s32.totalorder %s29, 2
      %s31 = scalar_select %p30, 0, %s29
      %s32 = sadd.s32 1, %s23
      %s33 = scalar_select %p30, %s32, %s23
      %p34 = scmp.ge.s32.totalorder %s33, 2
      %s35 = scalar_select %p34, 0, %s33
      %s36 = ssub.s32 %s23, %s35
      %s37 = ssub.s32 %s24, %s31
      %s38 = sor.u32 %s36, %s37
      %p39 = scmp.eq.s32.totalorder %s38, 0
      %s41 = sadd.s32 %s40, 1
      %s42 = scalar_select %p39, %s40, %s41
      %p45 = pneg %p39
      %p46 = scmp.eq.s32.totalorder %s16, 3
      %p47 = por %p45, %p46
      %p48 = scmp.ne.s32.totalorder %s40, %s43
      %p49 = scmp.eq.s32.totalorder %s16, 0
      %p50 = por %p48, %p49
      %p51 = scmp.ne.s32.totalorder %s40, %s43
      %p52 = scmp.eq.s32.totalorder %s21, 3
      %p53 = por %p51, %p52
      %p54 = scmp.ne.s32.totalorder %s43, %s44
      %p55 = scmp.eq.s32.totalorder %s21, 0
      %p56 = por %p54, %p55
      %p57 = scmp.ne.s32.totalorder %s43, %s44
      %p58 = scmp.eq.s32.totalorder %s22, 3
      %p59 = por %p57, %p58
      %p61 = scmp.ne.s32.totalorder %s44, %s60
      %p62 = scmp.eq.s32.totalorder %s22, 0
      %p63 = por %p61, %p62
      %s64 = ssub.s32 %s23, %s35
      %p65 = scmp.eq.s32.totalorder %s64, 0
      %s67 = sadd.s32 %s66, 1
      %s68 = scalar_select %p65, %s66, %s67
      %p71 = pneg %p65
      %p72 = scmp.eq.s32.totalorder %s16, 3
      %p73 = por %p71, %p72
      %p74 = scmp.ne.s32.totalorder %s66, %s69
      %p75 = scmp.eq.s32.totalorder %s16, 0
      %p76 = por %p74, %p75
      %p77 = scmp.ne.s32.totalorder %s66, %s69
      %p78 = scmp.eq.s32.totalorder %s21, 3
      %p79 = por %p77, %p78
      %p80 = scmp.ne.s32.totalorder %s69, %s70
      %p81 = scmp.eq.s32.totalorder %s21, 0
      %p82 = por %p80, %p81
      %p83 = scmp.ne.s32.totalorder %s69, %s70
      %p84 = scmp.eq.s32.totalorder %s22, 3
      %p85 = por %p83, %p84
      %p87 = scmp.ne.s32.totalorder %s70, %s86
      %p88 = scmp.eq.s32.totalorder %s22, 0
      %p89 = por %p87, %p88
      %s90 = ssub.s32 %s23, %s35
      %p91 = scmp.eq.s32.totalorder %s90, 0
      %s93 = sadd.s32 %s92, 1
      %s94 = scalar_select %p91, %s92, %s93
      %p97 = pneg %p91
      %p98 = scmp.eq.s32.totalorder %s16, 3
      %p99 = por %p97, %p98
      %p100 = scmp.ne.s32.totalorder %s92, %s95
      %p101 = scmp.eq.s32.totalorder %s16, 0
      %p102 = por %p100, %p101
      %p103 = scmp.ne.s32.totalorder %s92, %s95
      %p104 = scmp.eq.s32.totalorder %s21, 3
      %p105 = por %p103, %p104
      %p106 = scmp.ne.s32.totalorder %s95, %s96
      %p107 = scmp.eq.s32.totalorder %s21, 0
      %p108 = por %p106, %p107
      %p109 = scmp.ne.s32.totalorder %s95, %s96
      %p110 = scmp.eq.s32.totalorder %s22, 3
      %p111 = por %p109, %p110
      %p113 = scmp.ne.s32.totalorder %s96, %s112
      %p114 = scmp.eq.s32.totalorder %s22, 0
      %p115 = por %p113, %p114
      %s117 = sadd.s32 %s116, 1
      %p120 = scmp.eq.s32.totalorder %s16, 3
      %p121 = scmp.ne.s32.totalorder %s116, %s118
      %p122 = scmp.eq.s32.totalorder %s16, 0
      %p123 = por %p121, %p122
      %p124 = scmp.ne.s32.totalorder %s116, %s118
      %p125 = scmp.eq.s32.totalorder %s21, 3
      %p126 = por %p124, %p125
      %p127 = scmp.ne.s32.totalorder %s118, %s119
      %p128 = scmp.eq.s32.totalorder %s21, 0
      %p129 = por %p127, %p128
      %p130 = scmp.ne.s32.totalorder %s118, %s119
      %p131 = scmp.eq.s32.totalorder %s22, 3
      %p132 = por %p130, %p131
      %p134 = scmp.ne.s32.totalorder %s119, %s133
      %p135 = scmp.eq.s32.totalorder %s22, 0
      %p136 = por %p134, %p135
      %s138 = sadd.s32 %s137, 1
      %p141 = scmp.eq.s32.totalorder %s16, 3
      %p142 = scmp.ne.s32.totalorder %s137, %s139
      %p143 = scmp.eq.s32.totalorder %s16, 0
      %p144 = por %p142, %p143
      %p145 = scmp.ne.s32.totalorder %s137, %s139
      %p146 = scmp.eq.s32.totalorder %s21, 3
      %p147 = por %p145, %p146
      %p148 = scmp.ne.s32.totalorder %s139, %s140
      %p149 = scmp.eq.s32.totalorder %s21, 0
      %p150 = por %p148, %p149
      %p151 = scmp.ne.s32.totalorder %s139, %s140
      %p152 = scmp.eq.s32.totalorder %s22, 3
      %p153 = por %p151, %p152
      %p155 = scmp.ne.s32.totalorder %s140, %s154
      %p156 = scmp.eq.s32.totalorder %s22, 0
      %p157 = por %p155, %p156
      %s159 = sadd.s32 %s158, 1
      %p162 = scmp.eq.s32.totalorder %s16, 3
      %p163 = scmp.ne.s32.totalorder %s158, %s160
      %p164 = scmp.eq.s32.totalorder %s16, 0
      %p165 = por %p163, %p164
      %p166 = scmp.ne.s32.totalorder %s158, %s160
      %p167 = scmp.eq.s32.totalorder %s21, 3
      %p168 = por %p166, %p167
      %p169 = scmp.ne.s32.totalorder %s160, %s161
      %p170 = scmp.eq.s32.totalorder %s21, 0
      %p171 = por %p169, %p170
      %p172 = scmp.ne.s32.totalorder %s160, %s161
      %p173 = scmp.eq.s32.totalorder %s22, 3
      %p174 = por %p172, %p173
      %p176 = scmp.ne.s32.totalorder %s161, %s175
      %p177 = scmp.eq.s32.totalorder %s22, 0
      %p178 = por %p176, %p177
      %s180 = sadd.s32 %s179, 1
      %p183 = scmp.eq.s32.totalorder %s16, 3
      %p184 = scmp.ne.s32.totalorder %s179, %s181
      %p185 = scmp.eq.s32.totalorder %s16, 0
      %p186 = por %p184, %p185
      %p187 = scmp.ne.s32.totalorder %s179, %s181
      %p188 = scmp.eq.s32.totalorder %s21, 3
      %p189 = por %p187, %p188
      %p190 = scmp.ne.s32.totalorder %s181, %s182
      %p191 = scmp.eq.s32.totalorder %s21, 0
      %p192 = por %p190, %p191
      %p193 = scmp.ne.s32.totalorder %s181, %s182
      %p194 = scmp.eq.s32.totalorder %s22, 3
      %p195 = por %p193, %p194
      %p197 = scmp.ne.s32.totalorder %s182, %s196
      %p198 = scmp.eq.s32.totalorder %s22, 0
      %p199 = por %p197, %p198
      %s200 = ssub.s32 %s23, %s35
      %s201 = ssub.s32 %s24, %s31
      %s202 = sor.u32 %s200, %s201
      %p203 = scmp.eq.s32.totalorder %s202, 0
      %s205 = sadd.s32 %s204, 1
      %s206 = scalar_select %p203, %s204, %s205
      %p209 = pneg %p203
      %p210 = scmp.eq.s32.totalorder %s16, 3
      %p211 = por %p209, %p210
      %p212 = scmp.ne.s32.totalorder %s204, %s207
      %p213 = scmp.eq.s32.totalorder %s16, 0
      %p214 = por %p212, %p213
      %p215 = scmp.ne.s32.totalorder %s204, %s207
      %p216 = scmp.eq.s32.totalorder %s21, 3
      %p217 = por %p215, %p216
      %p218 = scmp.ne.s32.totalorder %s207, %s208
      %p219 = scmp.eq.s32.totalorder %s21, 0
      %p220 = por %p218, %p219
      %p221 = scmp.ne.s32.totalorder %s207, %s208
      %p222 = scmp.eq.s32.totalorder %s22, 3
      %p223 = por %p221, %p222
      %p225 = scmp.ne.s32.totalorder %s208, %s224
      %p226 = scmp.eq.s32.totalorder %s22, 0
      %p227 = por %p225, %p226
      %p228 = scmp.le.s32.totalorder 1, %s16
      %p229 = scmp.lt.s32.totalorder %s16, 5
      %p230 = pnand %p228, %p229
      %p231 = pneg %p230
      // Predicated region
      $region9: #{tpu_custom_call.1} parent=5 // pred_check
        _
      $region10: #{tpu_custom_call.1} parent=5 // pred_check_branch
        %233 = sbr.rel (%p230) target = $region12
      $region11: #{tpu_custom_call.1} parent=5 // pred_region
        %s234 = ssub.s32 %s16, 1
        // Predicated region
        $region13: #{tpu_custom_call.1} parent=11 // pred_check
          %p235 = pneg %p129
        $region14: #{tpu_custom_call.1} parent=11 // pred_check_branch
          %237 = sbr.rel (%p235) target = $region16
        $region15: #{tpu_custom_call.1} parent=11 // pred_region
          _
        $region16: #{tpu_custom_call.1} parent=11 // pred_fallthru
          _
        // Predicated region
        $region17: #{tpu_custom_call.1} parent=11 // pred_check
          %p238 = pneg %p150
        $region18: #{tpu_custom_call.1} parent=11 // pred_check_branch
          %240 = sbr.rel (%p238) target = $region20
        $region19: #{tpu_custom_call.1} parent=11 // pred_region
          _
        $region20: #{tpu_custom_call.1} parent=11 // pred_fallthru
          _
        // Predicated region
        $region21: #{tpu_custom_call.1} parent=11 // pred_check
          %p241 = pneg %p171
        $region22: #{tpu_custom_call.1} parent=11 // pred_check_branch
          %243 = sbr.rel (%p241) target = $region24
        $region23: #{tpu_custom_call.1} parent=11 // pred_region
          _
        $region24: #{tpu_custom_call.1} parent=11 // pred_fallthru
          _
        // Predicated region
        $region25: #{tpu_custom_call.1} parent=11 // pred_check
          %p244 = pneg %p192
        $region26: #{tpu_custom_call.1} parent=11 // pred_check_branch
          %246 = sbr.rel (%p244) target = $region28
        $region27: #{tpu_custom_call.1} parent=11 // pred_region
          _
        $region28: #{tpu_custom_call.1} parent=11 // pred_fallthru
          _
      $region12: #{tpu_custom_call.1} parent=5 // pred_fallthru
        _
      %p247 = scmp.lt.s32.totalorder %s16, 4
      // Predicated region
      $region29: #{tpu_custom_call.1} parent=5 // pred_check
        %p248 = pneg %p247
      $region30: #{tpu_custom_call.1} parent=5 // pred_check_branch
        %250 = sbr.rel (%p248) target = $region32
      $region31: #{tpu_custom_call.1} parent=5 // pred_region
        // Predicated region
        $region33: #{tpu_custom_call.1} parent=31 // pred_check
          %p251 = pneg %p50
        $region34: #{tpu_custom_call.1} parent=31 // pred_check_branch
          %253 = sbr.rel (%p251) target = $region36
        $region35: #{tpu_custom_call.1} parent=31 // pred_region
          %p254 = scmp.lt.s32.totalorder %s23, 1
          %s255 = scalar_select %p254, %s23, 1
          %p256 = scmp.lt.s32.totalorder %s24, 1
          %s257 = scalar_select %p256, %s24, 1
          %s258 = smul.addr %s255, 2
          %s259 = sadd.s32 %s257, %s258
          %s260 = smul.addr %s259, 4
          %s261 = scalar_lea.vmem %s0, %s260
        $region36: #{tpu_custom_call.1} parent=31 // pred_fallthru
          _
        // Predicated region
        $region37: #{tpu_custom_call.1} parent=31 // pred_check
          %p262 = pneg %p76
        $region38: #{tpu_custom_call.1} parent=31 // pred_check_branch
          %264 = sbr.rel (%p262) target = $region40
        $region39: #{tpu_custom_call.1} parent=31 // pred_region
          %p265 = scmp.lt.s32.totalorder %s23, 1
          %s266 = scalar_select %p265, %s23, 1
          %s267 = smul.addr %s266, 9
          %s268 = smul.addr %s267, 8
          %s269 = scalar_lea.vmem %s1, %s268
        $region40: #{tpu_custom_call.1} parent=31 // pred_fallthru
          _
        // Predicated region
        $region41: #{tpu_custom_call.1} parent=31 // pred_check
          %p270 = pneg %p102
        $region42: #{tpu_custom_call.1} parent=31 // pred_check_branch
          %272 = sbr.rel (%p270) target = $region44
        $region43: #{tpu_custom_call.1} parent=31 // pred_region
          %p273 = scmp.lt.s32.totalorder %s23, 1
          %s274 = scalar_select %p273, %s23, 1
          %s275 = smul.addr %s274, 8
          %s276 = scalar_lea.vmem %s2, %s275
        $region44: #{tpu_custom_call.1} parent=31 // pred_fallthru
          _
      $region32: #{tpu_custom_call.1} parent=5 // pred_fallthru
        _
      %p277 = scmp.le.s32.totalorder 1, %s16
      %p278 = scmp.lt.s32.totalorder %s16, 5
      %p279 = pnand %p277, %p278
      %p280 = pneg %p279
      // Predicated region
      $region45: #{tpu_custom_call.1} parent=5 // pred_check
        _
      $region46: #{tpu_custom_call.1} parent=5 // pred_check_branch
        %282 = sbr.rel (%p279) target = $region48
      $region47: #{tpu_custom_call.1} parent=5 // pred_region
        %s283 = ssub.s32 %s16, 1
        %p284 = scmp.lt.s32.totalorder %s25, 1
        %s285 = scalar_select %p284, %s25, 1
        %p286 = scmp.lt.s32.totalorder %s26, 1
        %s287 = scalar_select %p286, %s26, 1
        %s288 = smul.addr %s285, 2
        %s289 = sadd.s32 %s287, %s288
        %s290 = smul.addr %s289, 4
        %s291 = scalar_lea.vmem %s0, %s290
        %p292 = pneg %p56
        %p293 = pneg %p53
        %p294 = scmp.lt.s32.totalorder %s25, 1
        %s295 = scalar_select %p294, %s25, 1
        %s296 = smul.addr %s295, 9
        %s297 = smul.addr %s296, 8
        %s298 = scalar_lea.vmem %s1, %s297
        %p299 = pneg %p82
        %p300 = pneg %p79
        %p301 = scmp.lt.s32.totalorder %s25, 1
        %s302 = scalar_select %p301, %s25, 1
        %s303 = smul.addr %s302, 8
        %s304 = scalar_lea.vmem %s2, %s303
        %p305 = pneg %p108
        %p306 = pneg %p105
        %p307 = pneg %p129
        %p308 = pneg %p126
        %p309 = pneg %p150
        %p310 = pneg %p147
        %p311 = pneg %p171
        %p312 = pneg %p168
        %p313 = pneg %p192
        %p314 = pneg %p189
        %p315 = pneg %p220
        %p316 = pneg %p217
        %s317 = sand.u32 %s207, 1
        %s318 = scalar_lea.sflag [#allocation4], %s317
        %s319 = sand.u32 %s207, 1
        %s320 = smul.addr %s319, 4
        %s321 = scalar_lea.vmem [#allocation3], %s320
        %p322 = scmp.lt.s32.totalorder %s25, 1
        %s323 = scalar_select %p322, %s25, 1
        %p324 = scmp.lt.s32.totalorder %s26, 1
        %s325 = scalar_select %p324, %s26, 1
        %s326 = smul.addr %s323, 2
        %s327 = sadd.s32 %s325, %s326
        %s328 = smul.addr %s327, 4
        %s329 = scalar_lea.vmem %s0, %s328
        %p330 = scmp.lt.s32.totalorder %s25, 1
        %s331 = scalar_select %p330, %s25, 1
        %s332 = smul.addr %s331, 9
        %s333 = smul.addr %s332, 8
        %s334 = scalar_lea.vmem %s1, %s333
        %p335 = scmp.lt.s32.totalorder %s25, 1
        %s336 = scalar_select %p335, %s25, 1
        %s337 = smul.addr %s336, 8
        %s338 = scalar_lea.vmem %s2, %s337
        %s340 = smul.u32 %s26, 8
        %s341 = scalar_lea.vmem %s334, %s340
        %v342 = vld [vmem:[%s341] sm:$0xff]
        %v343 = vcombine.high %v342, 0.0
        %v345 = vunpack.c.l.s4 1983009808
        %v346 = vunpack.c.0.s8 %v345
        %v347 = vlaneseq
        %v348 = vshrl.u32 %v347, 7
        %v349 = vsub.s32 %v346, %v348
        %v350 = vrot.slane %v342, %v349
        %v352 = vunpack.c.l.s4 1983009808
        %v353 = vunpack.c.0.s8 %v352
        %v354 = vlaneseq
        %v355 = vshrl.u32 %v354, 7
        %v356 = vsub.s32 %v353, %v355
        %v357 = vrot.slane %v343, %v356
        %v358 = vcombine.high %v350, 0.0
        %v360 = vunpack.c.l.s4 1934713408
        %v361 = vunpack.c.0.s8 %v360
        %v362 = vlaneseq
        %v363 = vshrl.u32 %v362, 7
        %v364 = vsub.s32 %v361, %v363
        %v365 = vrot.slane %v350, %v364
        %v367 = vunpack.c.l.s4 1934713408
        %v368 = vunpack.c.0.s8 %v367
        %v369 = vlaneseq
        %v370 = vshrl.u32 %v369, 7
        %v371 = vsub.s32 %v368, %v370
        %v372 = vrot.slane %v358, %v371
        %v373 = vcombine.high %v357, 0.0
        %v375 = vunpack.c.l.s4 1934713408
        %v376 = vunpack.c.0.s8 %v375
        %v377 = vlaneseq
        %v378 = vshrl.u32 %v377, 7
        %v379 = vsub.s32 %v376, %v378
        %v380 = vrot.slane %v357, %v379
        %v382 = vunpack.c.l.s4 1934713408
        %v383 = vunpack.c.0.s8 %v382
        %v384 = vlaneseq
        %v385 = vshrl.u32 %v384, 7
        %v386 = vsub.s32 %v383, %v385
        %v387 = vrot.slane %v373, %v386
        %v388 = vcombine.high %v365, 0.0
        %v389 = vcombine.high %v372, 0.0
        %v390 = vcombine.high %v380, 0.0
        %v391 = vcombine.high %v387, 0.0
        %v392 = vld [vmem:[%s341 + $0x8] sm:$0x3]
        %v394 = vunpack.c.l.s4 1934713408
        %v395 = vunpack.c.0.s8 %v394
        %v396 = vlaneseq
        %v397 = vshrl.u32 %v396, 7
        %v398 = vsub.s32 %v395, %v397
        %v399 = vrot.slane %v392, %v398
        %v400 = vcombine.high %v399, 0.0
        %402 = vrot.lane.b32.xlu0 %v388, 16
        %v403 = vpop.permute.xlu0 %402
        %406 = vrot.lane.b32.xlu0 %v372, 32
        %v407 = vpop.permute.xlu0 %406
        %410 = vrot.lane.b32.xlu0 %v389, 48
        %v411 = vpop.permute.xlu0 %410
        %414 = vrot.lane.b32.xlu0 %v380, 64
        %v415 = vpop.permute.xlu0 %414
        %418 = vrot.lane.b32.xlu0 %v390, 80
        %v419 = vpop.permute.xlu0 %418
        %422 = vrot.lane.b32.xlu0 %v387, 96
        %v423 = vpop.permute.xlu0 %422
        %426 = vrot.lane.b32.xlu0 %v391, 112
        %v427 = vpop.permute.xlu0 %426
        %430 = vrot.lane.b32.xlu0 %v400, 16
        %v431 = vpop.permute.xlu0 %430
        %vm433 = vcmask 130048
        %v434 = vsel %vm433, %v365, %v403
        %vm435 = vcmask 261120
        %v436 = vsel %vm435, %v434, %v407
        %vm437 = vcmask 392192
        %v438 = vsel %vm437, %v436, %v411
        %vm439 = vcmask 523264
        %v440 = vsel %vm439, %v438, %v415
        %vm441 = vcmask 654336
        %v442 = vsel %vm441, %v440, %v419
        %vm443 = vcmask 785408
        %v444 = vsel %vm443, %v442, %v423
        %vm445 = vcmask 916480
        %v446 = vsel %vm445, %v444, %v427
        %v447 = vsel %vm433, %v399, %v431
        %450 = vrot.lane.b32.xlu0 %v342, 127
        %v451 = vpop.permute.xlu0 %450
        %452 = vrot.lane.b32.xlu0 %v392, 127
        %v453 = vpop.permute.xlu0 %452
        %v455 = vcombine.high %v451, 0.0
        %v457 = vunpack.c.l.s4 1983009808
        %v458 = vunpack.c.0.s8 %v457
        %v459 = vlaneseq
        %v460 = vshrl.u32 %v459, 7
        %v461 = vsub.s32 %v458, %v460
        %v462 = vrot.slane %v451, %v461
        %v464 = vunpack.c.l.s4 1983009808
        %v465 = vunpack.c.0.s8 %v464
        %v466 = vlaneseq
        %v467 = vshrl.u32 %v466, 7
        %v468 = vsub.s32 %v465, %v467
        %v469 = vrot.slane %v455, %v468
        %v470 = vcombine.high %v462, 0.0
        %v472 = vunpack.c.l.s4 1934713408
        %v473 = vunpack.c.0.s8 %v472
        %v474 = vlaneseq
        %v475 = vshrl.u32 %v474, 7
        %v476 = vsub.s32 %v473, %v475
        %v477 = vrot.slane %v462, %v476
        %v479 = vunpack.c.l.s4 1934713408
        %v480 = vunpack.c.0.s8 %v479
        %v481 = vlaneseq
        %v482 = vshrl.u32 %v481, 7
        %v483 = vsub.s32 %v480, %v482
        %v484 = vrot.slane %v470, %v483
        %v485 = vcombine.high %v469, 0.0
        %v487 = vunpack.c.l.s4 1934713408
        %v488 = vunpack.c.0.s8 %v487
        %v489 = vlaneseq
        %v490 = vshrl.u32 %v489, 7
        %v491 = vsub.s32 %v488, %v490
        %v492 = vrot.slane %v469, %v491
        %v494 = vunpack.c.l.s4 1934713408
        %v495 = vunpack.c.0.s8 %v494
        %v496 = vlaneseq
        %v497 = vshrl.u32 %v496, 7
        %v498 = vsub.s32 %v495, %v497
        %v499 = vrot.slane %v485, %v498
        %v500 = vcombine.high %v477, 0.0
        %v501 = vcombine.high %v484, 0.0
        %v502 = vcombine.high %v492, 0.0
        %v503 = vcombine.high %v499, 0.0
        %v506 = vunpack.c.l.s4 1934713408
        %v507 = vunpack.c.0.s8 %v506
        %v508 = vlaneseq
        %v509 = vshrl.u32 %v508, 7
        %v510 = vsub.s32 %v507, %v509
        %v511 = vrot.slane %v453, %v510
        %v512 = vcombine.high %v511, 0.0
        %514 = vrot.lane.b32.xlu0 %v500, 16
        %v515 = vpop.permute.xlu0 %514
        %518 = vrot.lane.b32.xlu0 %v484, 32
        %v519 = vpop.permute.xlu0 %518
        %522 = vrot.lane.b32.xlu0 %v501, 48
        %v523 = vpop.permute.xlu0 %522
        %526 = vrot.lane.b32.xlu0 %v492, 64
        %v527 = vpop.permute.xlu0 %526
        %530 = vrot.lane.b32.xlu0 %v502, 80
        %v531 = vpop.permute.xlu0 %530
        %534 = vrot.lane.b32.xlu0 %v499, 96
        %v535 = vpop.permute.xlu0 %534
        %538 = vrot.lane.b32.xlu0 %v503, 112
        %v539 = vpop.permute.xlu0 %538
        %542 = vrot.lane.b32.xlu0 %v512, 16
        %v543 = vpop.permute.xlu0 %542
        %v545 = vsel %vm433, %v477, %v515
        %v546 = vsel %vm435, %v545, %v519
        %v547 = vsel %vm437, %v546, %v523
        %v548 = vsel %vm439, %v547, %v527
        %v549 = vsel %vm441, %v548, %v531
        %v550 = vsel %vm443, %v549, %v535
        %v551 = vsel %vm445, %v550, %v539
        %v552 = vsel %vm433, %v511, %v543
        %553 = vrot.lane.b32.xlu0 %v342, 126
        %v554 = vpop.permute.xlu0 %553
        %555 = vrot.lane.b32.xlu0 %v392, 126
        %v556 = vpop.permute.xlu0 %555
        %v558 = vcombine.high %v554, 0.0
        %v560 = vunpack.c.l.s4 1983009808
        %v561 = vunpack.c.0.s8 %v560
        %v562 = vlaneseq
        %v563 = vshrl.u32 %v562, 7
        %v564 = vsub.s32 %v561, %v563
        %v565 = vrot.slane %v554, %v564
        %v567 = vunpack.c.l.s4 1983009808
        %v568 = vunpack.c.0.s8 %v567
        %v569 = vlaneseq
        %v570 = vshrl.u32 %v569, 7
        %v571 = vsub.s32 %v568, %v570
        %v572 = vrot.slane %v558, %v571
        %v573 = vcombine.high %v565, 0.0
        %v575 = vunpack.c.l.s4 1934713408
        %v576 = vunpack.c.0.s8 %v575
        %v577 = vlaneseq
        %v578 = vshrl.u32 %v577, 7
        %v579 = vsub.s32 %v576, %v578
        %v580 = vrot.slane %v565, %v579
        %v582 = vunpack.c.l.s4 1934713408
        %v583 = vunpack.c.0.s8 %v582
        %v584 = vlaneseq
        %v585 = vshrl.u32 %v584, 7
        %v586 = vsub.s32 %v583, %v585
        %v587 = vrot.slane %v573, %v586
        %v588 = vcombine.high %v572, 0.0
        %v590 = vunpack.c.l.s4 1934713408
        %v591 = vunpack.c.0.s8 %v590
        %v592 = vlaneseq
        %v593 = vshrl.u32 %v592, 7
        %v594 = vsub.s32 %v591, %v593
        %v595 = vrot.slane %v572, %v594
        %v597 = vunpack.c.l.s4 1934713408
        %v598 = vunpack.c.0.s8 %v597
        %v599 = vlaneseq
        %v600 = vshrl.u32 %v599, 7
        %v601 = vsub.s32 %v598, %v600
        %v602 = vrot.slane %v588, %v601
        %v603 = vcombine.high %v580, 0.0
        %v604 = vcombine.high %v587, 0.0
        %v605 = vcombine.high %v595, 0.0
        %v606 = vcombine.high %v602, 0.0
        %v609 = vunpack.c.l.s4 1934713408
        %v610 = vunpack.c.0.s8 %v609
        %v611 = vlaneseq
        %v612 = vshrl.u32 %v611, 7
        %v613 = vsub.s32 %v610, %v612
        %v614 = vrot.slane %v556, %v613
        %v615 = vcombine.high %v614, 0.0
        %617 = vrot.lane.b32.xlu0 %v603, 16
        %v618 = vpop.permute.xlu0 %617
        %621 = vrot.lane.b32.xlu0 %v587, 32
        %v622 = vpop.permute.xlu0 %621
        %625 = vrot.lane.b32.xlu0 %v604, 48
        %v626 = vpop.permute.xlu0 %625
        %629 = vrot.lane.b32.xlu0 %v595, 64
        %v630 = vpop.permute.xlu0 %629
        %633 = vrot.lane.b32.xlu0 %v605, 80
        %v634 = vpop.permute.xlu0 %633
        %637 = vrot.lane.b32.xlu0 %v602, 96
        %v638 = vpop.permute.xlu0 %637
        %641 = vrot.lane.b32.xlu0 %v606, 112
        %v642 = vpop.permute.xlu0 %641
        %645 = vrot.lane.b32.xlu0 %v615, 16
        %v646 = vpop.permute.xlu0 %645
        %v648 = vsel %vm433, %v580, %v618
        %v649 = vsel %vm435, %v648, %v622
        %v650 = vsel %vm437, %v649, %v626
        %v651 = vsel %vm439, %v650, %v630
        %v652 = vsel %vm441, %v651, %v634
        %v653 = vsel %vm443, %v652, %v638
        %v654 = vsel %vm445, %v653, %v642
        %v655 = vsel %vm433, %v614, %v646
        %s656 = sadd.s32 %s340, 1
        %s657 = scalar_lea.vmem %s334, %s656
        %v658 = vld [vmem:[%s657] sm:$0xff]
        %v659 = vcombine.high %v658, 0.0
        %v661 = vunpack.c.l.s4 1983009808
        %v662 = vunpack.c.0.s8 %v661
        %v663 = vlaneseq
        %v664 = vshrl.u32 %v663, 7
        %v665 = vsub.s32 %v662, %v664
        %v666 = vrot.slane %v658, %v665
        %v668 = vunpack.c.l.s4 1983009808
        %v669 = vunpack.c.0.s8 %v668
        %v670 = vlaneseq
        %v671 = vshrl.u32 %v670, 7
        %v672 = vsub.s32 %v669, %v671
        %v673 = vrot.slane %v659, %v672
        %v674 = vcombine.high %v666, 0.0
        %v676 = vunpack.c.l.s4 1934713408
        %v677 = vunpack.c.0.s8 %v676
        %v678 = vlaneseq
        %v679 = vshrl.u32 %v678, 7
        %v680 = vsub.s32 %v677, %v679
        %v681 = vrot.slane %v666, %v680
        %v683 = vunpack.c.l.s4 1934713408
        %v684 = vunpack.c.0.s8 %v683
        %v685 = vlaneseq
        %v686 = vshrl.u32 %v685, 7
        %v687 = vsub.s32 %v684, %v686
        %v688 = vrot.slane %v674, %v687
        %v689 = vcombine.high %v673, 0.0
        %v691 = vunpack.c.l.s4 1934713408
        %v692 = vunpack.c.0.s8 %v691
        %v693 = vlaneseq
        %v694 = vshrl.u32 %v693, 7
        %v695 = vsub.s32 %v692, %v694
        %v696 = vrot.slane %v673, %v695
        %v698 = vunpack.c.l.s4 1934713408
        %v699 = vunpack.c.0.s8 %v698
        %v700 = vlaneseq
        %v701 = vshrl.u32 %v700, 7
        %v702 = vsub.s32 %v699, %v701
        %v703 = vrot.slane %v689, %v702
        %v704 = vcombine.high %v681, 0.0
        %v705 = vcombine.high %v688, 0.0
        %v706 = vcombine.high %v696, 0.0
        %v707 = vcombine.high %v703, 0.0
        %v708 = vld [vmem:[%s657 + $0x8] sm:$0x3]
        %v710 = vunpack.c.l.s4 1934713408
        %v711 = vunpack.c.0.s8 %v710
        %v712 = vlaneseq
        %v713 = vshrl.u32 %v712, 7
        %v714 = vsub.s32 %v711, %v713
        %v715 = vrot.slane %v708, %v714
        %v716 = vcombine.high %v715, 0.0
        %718 = vrot.lane.b32.xlu0 %v704, 16
        %v719 = vpop.permute.xlu0 %718
        %722 = vrot.lane.b32.xlu0 %v688, 32
        %v723 = vpop.permute.xlu0 %722
        %726 = vrot.lane.b32.xlu0 %v705, 48
        %v727 = vpop.permute.xlu0 %726
        %730 = vrot.lane.b32.xlu0 %v696, 64
        %v731 = vpop.permute.xlu0 %730
        %734 = vrot.lane.b32.xlu0 %v706, 80
        %v735 = vpop.permute.xlu0 %734
        %738 = vrot.lane.b32.xlu0 %v703, 96
        %v739 = vpop.permute.xlu0 %738
        %742 = vrot.lane.b32.xlu0 %v707, 112
        %v743 = vpop.permute.xlu0 %742
        %746 = vrot.lane.b32.xlu0 %v716, 16
        %v747 = vpop.permute.xlu0 %746
        %v749 = vsel %vm433, %v681, %v719
        %v750 = vsel %vm435, %v749, %v723
        %v751 = vsel %vm437, %v750, %v727
        %v752 = vsel %vm439, %v751, %v731
        %v753 = vsel %vm441, %v752, %v735
        %v754 = vsel %vm443, %v753, %v739
        %v755 = vsel %vm445, %v754, %v743
        %v756 = vsel %vm433, %v715, %v747
        %759 = vrot.lane.b32.xlu0 %v658, 127
        %v760 = vpop.permute.xlu0 %759
        %761 = vrot.lane.b32.xlu0 %v708, 127
        %v762 = vpop.permute.xlu0 %761
        %v764 = vcombine.high %v760, 0.0
        %v766 = vunpack.c.l.s4 1983009808
        %v767 = vunpack.c.0.s8 %v766
        %v768 = vlaneseq
        %v769 = vshrl.u32 %v768, 7
        %v770 = vsub.s32 %v767, %v769
        %v771 = vrot.slane %v760, %v770
        %v773 = vunpack.c.l.s4 1983009808
        %v774 = vunpack.c.0.s8 %v773
        %v775 = vlaneseq
        %v776 = vshrl.u32 %v775, 7
        %v777 = vsub.s32 %v774, %v776
        %v778 = vrot.slane %v764, %v777
        %v779 = vcombine.high %v771, 0.0
        %v781 = vunpack.c.l.s4 1934713408
        %v782 = vunpack.c.0.s8 %v781
        %v783 = vlaneseq
        %v784 = vshrl.u32 %v783, 7
        %v785 = vsub.s32 %v782, %v784
        %v786 = vrot.slane %v771, %v785
        %v788 = vunpack.c.l.s4 1934713408
        %v789 = vunpack.c.0.s8 %v788
        %v790 = vlaneseq
        %v791 = vshrl.u32 %v790, 7
        %v792 = vsub.s32 %v789, %v791
        %v793 = vrot.slane %v779, %v792
        %v794 = vcombine.high %v778, 0.0
        %v796 = vunpack.c.l.s4 1934713408
        %v797 = vunpack.c.0.s8 %v796
        %v798 = vlaneseq
        %v799 = vshrl.u32 %v798, 7
        %v800 = vsub.s32 %v797, %v799
        %v801 = vrot.slane %v778, %v800
        %v803 = vunpack.c.l.s4 1934713408
        %v804 = vunpack.c.0.s8 %v803
        %v805 = vlaneseq
        %v806 = vshrl.u32 %v805, 7
        %v807 = vsub.s32 %v804, %v806
        %v808 = vrot.slane %v794, %v807
        %v809 = vcombine.high %v786, 0.0
        %v810 = vcombine.high %v793, 0.0
        %v811 = vcombine.high %v801, 0.0
        %v812 = vcombine.high %v808, 0.0
        %v815 = vunpack.c.l.s4 1934713408
        %v816 = vunpack.c.0.s8 %v815
        %v817 = vlaneseq
        %v818 = vshrl.u32 %v817, 7
        %v819 = vsub.s32 %v816, %v818
        %v820 = vrot.slane %v762, %v819
        %v821 = vcombine.high %v820, 0.0
        %823 = vrot.lane.b32.xlu0 %v809, 16
        %v824 = vpop.permute.xlu0 %823
        %827 = vrot.lane.b32.xlu0 %v793, 32
        %v828 = vpop.permute.xlu0 %827
        %831 = vrot.lane.b32.xlu0 %v810, 48
        %v832 = vpop.permute.xlu0 %831
        %835 = vrot.lane.b32.xlu0 %v801, 64
        %v836 = vpop.permute.xlu0 %835
        %839 = vrot.lane.b32.xlu0 %v811, 80
        %v840 = vpop.permute.xlu0 %839
        %843 = vrot.lane.b32.xlu0 %v808, 96
        %v844 = vpop.permute.xlu0 %843
        %847 = vrot.lane.b32.xlu0 %v812, 112
        %v848 = vpop.permute.xlu0 %847
        %851 = vrot.lane.b32.xlu0 %v821, 16
        %v852 = vpop.permute.xlu0 %851
        %v854 = vsel %vm433, %v786, %v824
        %v855 = vsel %vm435, %v854, %v828
        %v856 = vsel %vm437, %v855, %v832
        %v857 = vsel %vm439, %v856, %v836
        %v858 = vsel %vm441, %v857, %v840
        %v859 = vsel %vm443, %v858, %v844
        %v860 = vsel %vm445, %v859, %v848
        %v861 = vsel %vm433, %v820, %v852
        %862 = vrot.lane.b32.xlu0 %v658, 126
        %v863 = vpop.permute.xlu0 %862
        %864 = vrot.lane.b32.xlu0 %v708, 126
        %v865 = vpop.permute.xlu0 %864
        %v867 = vcombine.high %v863, 0.0
        %v869 = vunpack.c.l.s4 1983009808
        %v870 = vunpack.c.0.s8 %v869
        %v871 = vlaneseq
        %v872 = vshrl.u32 %v871, 7
        %v873 = vsub.s32 %v870, %v872
        %v874 = vrot.slane %v863, %v873
        %v876 = vunpack.c.l.s4 1983009808
        %v877 = vunpack.c.0.s8 %v876
        %v878 = vlaneseq
        %v879 = vshrl.u32 %v878, 7
        %v880 = vsub.s32 %v877, %v879
        %v881 = vrot.slane %v867, %v880
        %v882 = vcombine.high %v874, 0.0
        %v884 = vunpack.c.l.s4 1934713408
        %v885 = vunpack.c.0.s8 %v884
        %v886 = vlaneseq
        %v887 = vshrl.u32 %v886, 7
        %v888 = vsub.s32 %v885, %v887
        %v889 = vrot.slane %v874, %v888
        %v891 = vunpack.c.l.s4 1934713408
        %v892 = vunpack.c.0.s8 %v891
        %v893 = vlaneseq
        %v894 = vshrl.u32 %v893, 7
        %v895 = vsub.s32 %v892, %v894
        %v896 = vrot.slane %v882, %v895
        %v897 = vcombine.high %v881, 0.0
        %v899 = vunpack.c.l.s4 1934713408
        %v900 = vunpack.c.0.s8 %v899
        %v901 = vlaneseq
        %v902 = vshrl.u32 %v901, 7
        %v903 = vsub.s32 %v900, %v902
        %v904 = vrot.slane %v881, %v903
        %v906 = vunpack.c.l.s4 1934713408
        %v907 = vunpack.c.0.s8 %v906
        %v908 = vlaneseq
        %v909 = vshrl.u32 %v908, 7
        %v910 = vsub.s32 %v907, %v909
        %v911 = vrot.slane %v897, %v910
        %v912 = vcombine.high %v889, 0.0
        %v913 = vcombine.high %v896, 0.0
        %v914 = vcombine.high %v904, 0.0
        %v915 = vcombine.high %v911, 0.0
        %v918 = vunpack.c.l.s4 1934713408
        %v919 = vunpack.c.0.s8 %v918
        %v920 = vlaneseq
        %v921 = vshrl.u32 %v920, 7
        %v922 = vsub.s32 %v919, %v921
        %v923 = vrot.slane %v865, %v922
        %v924 = vcombine.high %v923, 0.0
        %926 = vrot.lane.b32.xlu0 %v912, 16
        %v927 = vpop.permute.xlu0 %926
        %930 = vrot.lane.b32.xlu0 %v896, 32
        %v931 = vpop.permute.xlu0 %930
        %934 = vrot.lane.b32.xlu0 %v913, 48
        %v935 = vpop.permute.xlu0 %934
        %938 = vrot.lane.b32.xlu0 %v904, 64
        %v939 = vpop.permute.xlu0 %938
        %942 = vrot.lane.b32.xlu0 %v914, 80
        %v943 = vpop.permute.xlu0 %942
        %946 = vrot.lane.b32.xlu0 %v911, 96
        %v947 = vpop.permute.xlu0 %946
        %950 = vrot.lane.b32.xlu0 %v915, 112
        %v951 = vpop.permute.xlu0 %950
        %954 = vrot.lane.b32.xlu0 %v924, 16
        %v955 = vpop.permute.xlu0 %954
        %v957 = vsel %vm433, %v889, %v927
        %v958 = vsel %vm435, %v957, %v931
        %v959 = vsel %vm437, %v958, %v935
        %v960 = vsel %vm439, %v959, %v939
        %v961 = vsel %vm441, %v960, %v943
        %v962 = vsel %vm443, %v961, %v947
        %v963 = vsel %vm445, %v962, %v951
        %v964 = vsel %vm433, %v923, %v955
        %s965 = sadd.s32 %s340, 2
        %s966 = scalar_lea.vmem %s334, %s965
        %v967 = vld [vmem:[%s966] sm:$0xff]
        %v968 = vcombine.high %v967, 0.0
        %v970 = vunpack.c.l.s4 1983009808
        %v971 = vunpack.c.0.s8 %v970
        %v972 = vlaneseq
        %v973 = vshrl.u32 %v972, 7
        %v974 = vsub.s32 %v971, %v973
        %v975 = vrot.slane %v967, %v974
        %v977 = vunpack.c.l.s4 1983009808
        %v978 = vunpack.c.0.s8 %v977
        %v979 = vlaneseq
        %v980 = vshrl.u32 %v979, 7
        %v981 = vsub.s32 %v978, %v980
        %v982 = vrot.slane %v968, %v981
        %v983 = vcombine.high %v975, 0.0
        %v985 = vunpack.c.l.s4 1934713408
        %v986 = vunpack.c.0.s8 %v985
        %v987 = vlaneseq
        %v988 = vshrl.u32 %v987, 7
        %v989 = vsub.s32 %v986, %v988
        %v990 = vrot.slane %v975, %v989
        %v992 = vunpack.c.l.s4 1934713408
        %v993 = vunpack.c.0.s8 %v992
        %v994 = vlaneseq
        %v995 = vshrl.u32 %v994, 7
        %v996 = vsub.s32 %v993, %v995
        %v997 = vrot.slane %v983, %v996
        %v998 = vcombine.high %v982, 0.0
        %v1000 = vunpack.c.l.s4 1934713408
        %v1001 = vunpack.c.0.s8 %v1000
        %v1002 = vlaneseq
        %v1003 = vshrl.u32 %v1002, 7
        %v1004 = vsub.s32 %v1001, %v1003
        %v1005 = vrot.slane %v982, %v1004
        %v1007 = vunpack.c.l.s4 1934713408
        %v1008 = vunpack.c.0.s8 %v1007
        %v1009 = vlaneseq
        %v1010 = vshrl.u32 %v1009, 7
        %v1011 = vsub.s32 %v1008, %v1010
        %v1012 = vrot.slane %v998, %v1011
        %v1013 = vcombine.high %v990, 0.0
        %v1014 = vcombine.high %v997, 0.0
        %v1015 = vcombine.high %v1005, 0.0
        %v1016 = vcombine.high %v1012, 0.0
        %v1017 = vld [vmem:[%s966 + $0x8] sm:$0x3]
        %v1019 = vunpack.c.l.s4 1934713408
        %v1020 = vunpack.c.0.s8 %v1019
        %v1021 = vlaneseq
        %v1022 = vshrl.u32 %v1021, 7
        %v1023 = vsub.s32 %v1020, %v1022
        %v1024 = vrot.slane %v1017, %v1023
        %v1025 = vcombine.high %v1024, 0.0
        %1027 = vrot.lane.b32.xlu0 %v1013, 16
        %v1028 = vpop.permute.xlu0 %1027
        %1031 = vrot.lane.b32.xlu0 %v997, 32
        %v1032 = vpop.permute.xlu0 %1031
        %1035 = vrot.lane.b32.xlu0 %v1014, 48
        %v1036 = vpop.permute.xlu0 %1035
        %1039 = vrot.lane.b32.xlu0 %v1005, 64
        %v1040 = vpop.permute.xlu0 %1039
        %1043 = vrot.lane.b32.xlu0 %v1015, 80
        %v1044 = vpop.permute.xlu0 %1043
        %1047 = vrot.lane.b32.xlu0 %v1012, 96
        %v1048 = vpop.permute.xlu0 %1047
        %1051 = vrot.lane.b32.xlu0 %v1016, 112
        %v1052 = vpop.permute.xlu0 %1051
        %1055 = vrot.lane.b32.xlu0 %v1025, 16
        %v1056 = vpop.permute.xlu0 %1055
        %v1058 = vsel %vm433, %v990, %v1028
        %v1059 = vsel %vm435, %v1058, %v1032
        %v1060 = vsel %vm437, %v1059, %v1036
        %v1061 = vsel %vm439, %v1060, %v1040
        %v1062 = vsel %vm441, %v1061, %v1044
        %v1063 = vsel %vm443, %v1062, %v1048
        %v1064 = vsel %vm445, %v1063, %v1052
        %v1065 = vsel %vm433, %v1024, %v1056
        %1068 = vrot.lane.b32.xlu0 %v967, 127
        %v1069 = vpop.permute.xlu0 %1068
        %1070 = vrot.lane.b32.xlu0 %v1017, 127
        %v1071 = vpop.permute.xlu0 %1070
        %v1073 = vcombine.high %v1069, 0.0
        %v1075 = vunpack.c.l.s4 1983009808
        %v1076 = vunpack.c.0.s8 %v1075
        %v1077 = vlaneseq
        %v1078 = vshrl.u32 %v1077, 7
        %v1079 = vsub.s32 %v1076, %v1078
        %v1080 = vrot.slane %v1069, %v1079
        %v1082 = vunpack.c.l.s4 1983009808
        %v1083 = vunpack.c.0.s8 %v1082
        %v1084 = vlaneseq
        %v1085 = vshrl.u32 %v1084, 7
        %v1086 = vsub.s32 %v1083, %v1085
        %v1087 = vrot.slane %v1073, %v1086
        %v1088 = vcombine.high %v1080, 0.0
        %v1090 = vunpack.c.l.s4 1934713408
        %v1091 = vunpack.c.0.s8 %v1090
        %v1092 = vlaneseq
        %v1093 = vshrl.u32 %v1092, 7
        %v1094 = vsub.s32 %v1091, %v1093
        %v1095 = vrot.slane %v1080, %v1094
        %v1097 = vunpack.c.l.s4 1934713408
        %v1098 = vunpack.c.0.s8 %v1097
        %v1099 = vlaneseq
        %v1100 = vshrl.u32 %v1099, 7
        %v1101 = vsub.s32 %v1098, %v1100
        %v1102 = vrot.slane %v1088, %v1101
        %v1103 = vcombine.high %v1087, 0.0
        %v1105 = vunpack.c.l.s4 1934713408
        %v1106 = vunpack.c.0.s8 %v1105
        %v1107 = vlaneseq
        %v1108 = vshrl.u32 %v1107, 7
        %v1109 = vsub.s32 %v1106, %v1108
        %v1110 = vrot.slane %v1087, %v1109
        %v1112 = vunpack.c.l.s4 1934713408
        %v1113 = vunpack.c.0.s8 %v1112
        %v1114 = vlaneseq
        %v1115 = vshrl.u32 %v1114, 7
        %v1116 = vsub.s32 %v1113, %v1115
        %v1117 = vrot.slane %v1103, %v1116
        %v1118 = vcombine.high %v1095, 0.0
        %v1119 = vcombine.high %v1102, 0.0
        %v1120 = vcombine.high %v1110, 0.0
        %v1121 = vcombine.high %v1117, 0.0
        %v1124 = vunpack.c.l.s4 1934713408
        %v1125 = vunpack.c.0.s8 %v1124
        %v1126 = vlaneseq
        %v1127 = vshrl.u32 %v1126, 7
        %v1128 = vsub.s32 %v1125, %v1127
        %v1129 = vrot.slane %v1071, %v1128
        %v1130 = vcombine.high %v1129, 0.0
        %1132 = vrot.lane.b32.xlu0 %v1118, 16
        %v1133 = vpop.permute.xlu0 %1132
        %1136 = vrot.lane.b32.xlu0 %v1102, 32
        %v1137 = vpop.permute.xlu0 %1136
        %1140 = vrot.lane.b32.xlu0 %v1119, 48
        %v1141 = vpop.permute.xlu0 %1140
        %1144 = vrot.lane.b32.xlu0 %v1110, 64
        %v1145 = vpop.permute.xlu0 %1144
        %1148 = vrot.lane.b32.xlu0 %v1120, 80
        %v1149 = vpop.permute.xlu0 %1148
        %1152 = vrot.lane.b32.xlu0 %v1117, 96
        %v1153 = vpop.permute.xlu0 %1152
        %1156 = vrot.lane.b32.xlu0 %v1121, 112
        %v1157 = vpop.permute.xlu0 %1156
        %1160 = vrot.lane.b32.xlu0 %v1130, 16
        %v1161 = vpop.permute.xlu0 %1160
        %v1163 = vsel %vm433, %v1095, %v1133
        %v1164 = vsel %vm435, %v1163, %v1137
        %v1165 = vsel %vm437, %v1164, %v1141
        %v1166 = vsel %vm439, %v1165, %v1145
        %v1167 = vsel %vm441, %v1166, %v1149
        %v1168 = vsel %vm443, %v1167, %v1153
        %v1169 = vsel %vm445, %v1168, %v1157
        %v1170 = vsel %vm433, %v1129, %v1161
        %1171 = vrot.lane.b32.xlu0 %v967, 126
        %v1172 = vpop.permute.xlu0 %1171
        %1173 = vrot.lane.b32.xlu0 %v1017, 126
        %v1174 = vpop.permute.xlu0 %1173
        %v1176 = vcombine.high %v1172, 0.0
        %v1178 = vunpack.c.l.s4 1983009808
        %v1179 = vunpack.c.0.s8 %v1178
        %v1180 = vlaneseq
        %v1181 = vshrl.u32 %v1180, 7
        %v1182 = vsub.s32 %v1179, %v1181
        %v1183 = vrot.slane %v1172, %v1182
        %v1185 = vunpack.c.l.s4 1983009808
        %v1186 = vunpack.c.0.s8 %v1185
        %v1187 = vlaneseq
        %v1188 = vshrl.u32 %v1187, 7
        %v1189 = vsub.s32 %v1186, %v1188
        %v1190 = vrot.slane %v1176, %v1189
        %v1191 = vcombine.high %v1183, 0.0
        %v1193 = vunpack.c.l.s4 1934713408
        %v1194 = vunpack.c.0.s8 %v1193
        %v1195 = vlaneseq
        %v1196 = vshrl.u32 %v1195, 7
        %v1197 = vsub.s32 %v1194, %v1196
        %v1198 = vrot.slane %v1183, %v1197
        %v1200 = vunpack.c.l.s4 1934713408
        %v1201 = vunpack.c.0.s8 %v1200
        %v1202 = vlaneseq
        %v1203 = vshrl.u32 %v1202, 7
        %v1204 = vsub.s32 %v1201, %v1203
        %v1205 = vrot.slane %v1191, %v1204
        %v1206 = vcombine.high %v1190, 0.0
        %v1208 = vunpack.c.l.s4 1934713408
        %v1209 = vunpack.c.0.s8 %v1208
        %v1210 = vlaneseq
        %v1211 = vshrl.u32 %v1210, 7
        %v1212 = vsub.s32 %v1209, %v1211
        %v1213 = vrot.slane %v1190, %v1212
        %v1215 = vunpack.c.l.s4 1934713408
        %v1216 = vunpack.c.0.s8 %v1215
        %v1217 = vlaneseq
        %v1218 = vshrl.u32 %v1217, 7
        %v1219 = vsub.s32 %v1216, %v1218
        %v1220 = vrot.slane %v1206, %v1219
        %v1221 = vcombine.high %v1198, 0.0
        %v1222 = vcombine.high %v1205, 0.0
        %v1223 = vcombine.high %v1213, 0.0
        %v1224 = vcombine.high %v1220, 0.0
        %v1227 = vunpack.c.l.s4 1934713408
        %v1228 = vunpack.c.0.s8 %v1227
        %v1229 = vlaneseq
        %v1230 = vshrl.u32 %v1229, 7
        %v1231 = vsub.s32 %v1228, %v1230
        %v1232 = vrot.slane %v1174, %v1231
        %v1233 = vcombine.high %v1232, 0.0
        %1235 = vrot.lane.b32.xlu0 %v1221, 16
        %v1236 = vpop.permute.xlu0 %1235
        %1239 = vrot.lane.b32.xlu0 %v1205, 32
        %v1240 = vpop.permute.xlu0 %1239
        %1243 = vrot.lane.b32.xlu0 %v1222, 48
        %v1244 = vpop.permute.xlu0 %1243
        %1247 = vrot.lane.b32.xlu0 %v1213, 64
        %v1248 = vpop.permute.xlu0 %1247
        %1251 = vrot.lane.b32.xlu0 %v1223, 80
        %v1252 = vpop.permute.xlu0 %1251
        %1255 = vrot.lane.b32.xlu0 %v1220, 96
        %v1256 = vpop.permute.xlu0 %1255
        %1259 = vrot.lane.b32.xlu0 %v1224, 112
        %v1260 = vpop.permute.xlu0 %1259
        %1263 = vrot.lane.b32.xlu0 %v1233, 16
        %v1264 = vpop.permute.xlu0 %1263
        %v1266 = vsel %vm433, %v1198, %v1236
        %v1267 = vsel %vm435, %v1266, %v1240
        %v1268 = vsel %vm437, %v1267, %v1244
        %v1269 = vsel %vm439, %v1268, %v1248
        %v1270 = vsel %vm441, %v1269, %v1252
        %v1271 = vsel %vm443, %v1270, %v1256
        %v1272 = vsel %vm445, %v1271, %v1260
        %v1273 = vsel %vm433, %v1232, %v1264
        %s1274 = sadd.s32 %s340, 24
        %s1275 = scalar_lea.vmem %s334, %s1274
        %v1276 = vld [vmem:[%s1275] sm:$0xff]
        %v1277 = vcombine.high %v1276, 0.0
        %v1279 = vunpack.c.l.s4 1983009808
        %v1280 = vunpack.c.0.s8 %v1279
        %v1281 = vlaneseq
        %v1282 = vshrl.u32 %v1281, 7
        %v1283 = vsub.s32 %v1280, %v1282
        %v1284 = vrot.slane %v1276, %v1283
        %v1286 = vunpack.c.l.s4 1983009808
        %v1287 = vunpack.c.0.s8 %v1286
        %v1288 = vlaneseq
        %v1289 = vshrl.u32 %v1288, 7
        %v1290 = vsub.s32 %v1287, %v1289
        %v1291 = vrot.slane %v1277, %v1290
        %v1292 = vcombine.high %v1284, 0.0
        %v1294 = vunpack.c.l.s4 1934713408
        %v1295 = vunpack.c.0.s8 %v1294
        %v1296 = vlaneseq
        %v1297 = vshrl.u32 %v1296, 7
        %v1298 = vsub.s32 %v1295, %v1297
        %v1299 = vrot.slane %v1284, %v1298
        %v1301 = vunpack.c.l.s4 1934713408
        %v1302 = vunpack.c.0.s8 %v1301
        %v1303 = vlaneseq
        %v1304 = vshrl.u32 %v1303, 7
        %v1305 = vsub.s32 %v1302, %v1304
        %v1306 = vrot.slane %v1292, %v1305
        %v1307 = vcombine.high %v1291, 0.0
        %v1309 = vunpack.c.l.s4 1934713408
        %v1310 = vunpack.c.0.s8 %v1309
        %v1311 = vlaneseq
        %v1312 = vshrl.u32 %v1311, 7
        %v1313 = vsub.s32 %v1310, %v1312
        %v1314 = vrot.slane %v1291, %v1313
        %v1316 = vunpack.c.l.s4 1934713408
        %v1317 = vunpack.c.0.s8 %v1316
        %v1318 = vlaneseq
        %v1319 = vshrl.u32 %v1318, 7
        %v1320 = vsub.s32 %v1317, %v1319
        %v1321 = vrot.slane %v1307, %v1320
        %v1322 = vcombine.high %v1299, 0.0
        %v1323 = vcombine.high %v1306, 0.0
        %v1324 = vcombine.high %v1314, 0.0
        %v1325 = vcombine.high %v1321, 0.0
        %v1326 = vld [vmem:[%s1275 + $0x8] sm:$0x3]
        %v1328 = vunpack.c.l.s4 1934713408
        %v1329 = vunpack.c.0.s8 %v1328
        %v1330 = vlaneseq
        %v1331 = vshrl.u32 %v1330, 7
        %v1332 = vsub.s32 %v1329, %v1331
        %v1333 = vrot.slane %v1326, %v1332
        %v1334 = vcombine.high %v1333, 0.0
        %1336 = vrot.lane.b32.xlu0 %v1322, 16
        %v1337 = vpop.permute.xlu0 %1336
        %1340 = vrot.lane.b32.xlu0 %v1306, 32
        %v1341 = vpop.permute.xlu0 %1340
        %1344 = vrot.lane.b32.xlu0 %v1323, 48
        %v1345 = vpop.permute.xlu0 %1344
        %1348 = vrot.lane.b32.xlu0 %v1314, 64
        %v1349 = vpop.permute.xlu0 %1348
        %1352 = vrot.lane.b32.xlu0 %v1324, 80
        %v1353 = vpop.permute.xlu0 %1352
        %1356 = vrot.lane.b32.xlu0 %v1321, 96
        %v1357 = vpop.permute.xlu0 %1356
        %1360 = vrot.lane.b32.xlu0 %v1325, 112
        %v1361 = vpop.permute.xlu0 %1360
        %1364 = vrot.lane.b32.xlu0 %v1334, 16
        %v1365 = vpop.permute.xlu0 %1364
        %v1367 = vsel %vm433, %v1299, %v1337
        %v1368 = vsel %vm435, %v1367, %v1341
        %v1369 = vsel %vm437, %v1368, %v1345
        %v1370 = vsel %vm439, %v1369, %v1349
        %v1371 = vsel %vm441, %v1370, %v1353
        %v1372 = vsel %vm443, %v1371, %v1357
        %v1373 = vsel %vm445, %v1372, %v1361
        %v1374 = vsel %vm433, %v1333, %v1365
        %1377 = vrot.lane.b32.xlu0 %v1276, 127
        %v1378 = vpop.permute.xlu0 %1377
        %1379 = vrot.lane.b32.xlu0 %v1326, 127
        %v1380 = vpop.permute.xlu0 %1379
        %v1382 = vcombine.high %v1378, 0.0
        %v1384 = vunpack.c.l.s4 1983009808
        %v1385 = vunpack.c.0.s8 %v1384
        %v1386 = vlaneseq
        %v1387 = vshrl.u32 %v1386, 7
        %v1388 = vsub.s32 %v1385, %v1387
        %v1389 = vrot.slane %v1378, %v1388
        %v1391 = vunpack.c.l.s4 1983009808
        %v1392 = vunpack.c.0.s8 %v1391
        %v1393 = vlaneseq
        %v1394 = vshrl.u32 %v1393, 7
        %v1395 = vsub.s32 %v1392, %v1394
        %v1396 = vrot.slane %v1382, %v1395
        %v1397 = vcombine.high %v1389, 0.0
        %v1399 = vunpack.c.l.s4 1934713408
        %v1400 = vunpack.c.0.s8 %v1399
        %v1401 = vlaneseq
        %v1402 = vshrl.u32 %v1401, 7
        %v1403 = vsub.s32 %v1400, %v1402
        %v1404 = vrot.slane %v1389, %v1403
        %v1406 = vunpack.c.l.s4 1934713408
        %v1407 = vunpack.c.0.s8 %v1406
        %v1408 = vlaneseq
        %v1409 = vshrl.u32 %v1408, 7
        %v1410 = vsub.s32 %v1407, %v1409
        %v1411 = vrot.slane %v1397, %v1410
        %v1412 = vcombine.high %v1396, 0.0
        %v1414 = vunpack.c.l.s4 1934713408
        %v1415 = vunpack.c.0.s8 %v1414
        %v1416 = vlaneseq
        %v1417 = vshrl.u32 %v1416, 7
        %v1418 = vsub.s32 %v1415, %v1417
        %v1419 = vrot.slane %v1396, %v1418
        %v1421 = vunpack.c.l.s4 1934713408
        %v1422 = vunpack.c.0.s8 %v1421
        %v1423 = vlaneseq
        %v1424 = vshrl.u32 %v1423, 7
        %v1425 = vsub.s32 %v1422, %v1424
        %v1426 = vrot.slane %v1412, %v1425
        %v1427 = vcombine.high %v1404, 0.0
        %v1428 = vcombine.high %v1411, 0.0
        %v1429 = vcombine.high %v1419, 0.0
        %v1430 = vcombine.high %v1426, 0.0
        %v1433 = vunpack.c.l.s4 1934713408
        %v1434 = vunpack.c.0.s8 %v1433
        %v1435 = vlaneseq
        %v1436 = vshrl.u32 %v1435, 7
        %v1437 = vsub.s32 %v1434, %v1436
        %v1438 = vrot.slane %v1380, %v1437
        %v1439 = vcombine.high %v1438, 0.0
        %1441 = vrot.lane.b32.xlu0 %v1427, 16
        %v1442 = vpop.permute.xlu0 %1441
        %1445 = vrot.lane.b32.xlu0 %v1411, 32
        %v1446 = vpop.permute.xlu0 %1445
        %1449 = vrot.lane.b32.xlu0 %v1428, 48
        %v1450 = vpop.permute.xlu0 %1449
        %1453 = vrot.lane.b32.xlu0 %v1419, 64
        %v1454 = vpop.permute.xlu0 %1453
        %1457 = vrot.lane.b32.xlu0 %v1429, 80
        %v1458 = vpop.permute.xlu0 %1457
        %1461 = vrot.lane.b32.xlu0 %v1426, 96
        %v1462 = vpop.permute.xlu0 %1461
        %1465 = vrot.lane.b32.xlu0 %v1430, 112
        %v1466 = vpop.permute.xlu0 %1465
        %1469 = vrot.lane.b32.xlu0 %v1439, 16
        %v1470 = vpop.permute.xlu0 %1469
        %v1472 = vsel %vm433, %v1404, %v1442
        %v1473 = vsel %vm435, %v1472, %v1446
        %v1474 = vsel %vm437, %v1473, %v1450
        %v1475 = vsel %vm439, %v1474, %v1454
        %v1476 = vsel %vm441, %v1475, %v1458
        %v1477 = vsel %vm443, %v1476, %v1462
        %v1478 = vsel %vm445, %v1477, %v1466
        %v1479 = vsel %vm433, %v1438, %v1470
        %1480 = vrot.lane.b32.xlu0 %v1276, 126
        %v1481 = vpop.permute.xlu0 %1480
        %1482 = vrot.lane.b32.xlu0 %v1326, 126
        %v1483 = vpop.permute.xlu0 %1482
        %v1485 = vcombine.high %v1481, 0.0
        %v1487 = vunpack.c.l.s4 1983009808
        %v1488 = vunpack.c.0.s8 %v1487
        %v1489 = vlaneseq
        %v1490 = vshrl.u32 %v1489, 7
        %v1491 = vsub.s32 %v1488, %v1490
        %v1492 = vrot.slane %v1481, %v1491
        %v1494 = vunpack.c.l.s4 1983009808
        %v1495 = vunpack.c.0.s8 %v1494
        %v1496 = vlaneseq
        %v1497 = vshrl.u32 %v1496, 7
        %v1498 = vsub.s32 %v1495, %v1497
        %v1499 = vrot.slane %v1485, %v1498
        %v1500 = vcombine.high %v1492, 0.0
        %v1502 = vunpack.c.l.s4 1934713408
        %v1503 = vunpack.c.0.s8 %v1502
        %v1504 = vlaneseq
        %v1505 = vshrl.u32 %v1504, 7
        %v1506 = vsub.s32 %v1503, %v1505
        %v1507 = vrot.slane %v1492, %v1506
        %v1509 = vunpack.c.l.s4 1934713408
        %v1510 = vunpack.c.0.s8 %v1509
        %v1511 = vlaneseq
        %v1512 = vshrl.u32 %v1511, 7
        %v1513 = vsub.s32 %v1510, %v1512
        %v1514 = vrot.slane %v1500, %v1513
        %v1515 = vcombine.high %v1499, 0.0
        %v1517 = vunpack.c.l.s4 1934713408
        %v1518 = vunpack.c.0.s8 %v1517
        %v1519 = vlaneseq
        %v1520 = vshrl.u32 %v1519, 7
        %v1521 = vsub.s32 %v1518, %v1520
        %v1522 = vrot.slane %v1499, %v1521
        %v1524 = vunpack.c.l.s4 1934713408
        %v1525 = vunpack.c.0.s8 %v1524
        %v1526 = vlaneseq
        %v1527 = vshrl.u32 %v1526, 7
        %v1528 = vsub.s32 %v1525, %v1527
        %v1529 = vrot.slane %v1515, %v1528
        %v1530 = vcombine.high %v1507, 0.0
        %v1531 = vcombine.high %v1514, 0.0
        %v1532 = vcombine.high %v1522, 0.0
        %v1533 = vcombine.high %v1529, 0.0
        %v1536 = vunpack.c.l.s4 1934713408
        %v1537 = vunpack.c.0.s8 %v1536
        %v1538 = vlaneseq
        %v1539 = vshrl.u32 %v1538, 7
        %v1540 = vsub.s32 %v1537, %v1539
        %v1541 = vrot.slane %v1483, %v1540
        %v1542 = vcombine.high %v1541, 0.0
        %1544 = vrot.lane.b32.xlu0 %v1530, 16
        %v1545 = vpop.permute.xlu0 %1544
        %1548 = vrot.lane.b32.xlu0 %v1514, 32
        %v1549 = vpop.permute.xlu0 %1548
        %1552 = vrot.lane.b32.xlu0 %v1531, 48
        %v1553 = vpop.permute.xlu0 %1552
        %1556 = vrot.lane.b32.xlu0 %v1522, 64
        %v1557 = vpop.permute.xlu0 %1556
        %1560 = vrot.lane.b32.xlu0 %v1532, 80
        %v1561 = vpop.permute.xlu0 %1560
        %1564 = vrot.lane.b32.xlu0 %v1529, 96
        %v1565 = vpop.permute.xlu0 %1564
        %1568 = vrot.lane.b32.xlu0 %v1533, 112
        %v1569 = vpop.permute.xlu0 %1568
        %1572 = vrot.lane.b32.xlu0 %v1542, 16
        %v1573 = vpop.permute.xlu0 %1572
        %v1575 = vsel %vm433, %v1507, %v1545
        %v1576 = vsel %vm435, %v1575, %v1549
        %v1577 = vsel %vm437, %v1576, %v1553
        %v1578 = vsel %vm439, %v1577, %v1557
        %v1579 = vsel %vm441, %v1578, %v1561
        %v1580 = vsel %vm443, %v1579, %v1565
        %v1581 = vsel %vm445, %v1580, %v1569
        %v1582 = vsel %vm433, %v1541, %v1573
        %s1583 = sadd.s32 %s656, 24
        %s1584 = scalar_lea.vmem %s334, %s1583
        %v1585 = vld [vmem:[%s1584] sm:$0xff]
        %v1586 = vcombine.high %v1585, 0.0
        %v1588 = vunpack.c.l.s4 1983009808
        %v1589 = vunpack.c.0.s8 %v1588
        %v1590 = vlaneseq
        %v1591 = vshrl.u32 %v1590, 7
        %v1592 = vsub.s32 %v1589, %v1591
        %v1593 = vrot.slane %v1585, %v1592
        %v1595 = vunpack.c.l.s4 1983009808
        %v1596 = vunpack.c.0.s8 %v1595
        %v1597 = vlaneseq
        %v1598 = vshrl.u32 %v1597, 7
        %v1599 = vsub.s32 %v1596, %v1598
        %v1600 = vrot.slane %v1586, %v1599
        %v1601 = vcombine.high %v1593, 0.0
        %v1603 = vunpack.c.l.s4 1934713408
        %v1604 = vunpack.c.0.s8 %v1603
        %v1605 = vlaneseq
        %v1606 = vshrl.u32 %v1605, 7
        %v1607 = vsub.s32 %v1604, %v1606
        %v1608 = vrot.slane %v1593, %v1607
        %v1610 = vunpack.c.l.s4 1934713408
        %v1611 = vunpack.c.0.s8 %v1610
        %v1612 = vlaneseq
        %v1613 = vshrl.u32 %v1612, 7
        %v1614 = vsub.s32 %v1611, %v1613
        %v1615 = vrot.slane %v1601, %v1614
        %v1616 = vcombine.high %v1600, 0.0
        %v1618 = vunpack.c.l.s4 1934713408
        %v1619 = vunpack.c.0.s8 %v1618
        %v1620 = vlaneseq
        %v1621 = vshrl.u32 %v1620, 7
        %v1622 = vsub.s32 %v1619, %v1621
        %v1623 = vrot.slane %v1600, %v1622
        %v1625 = vunpack.c.l.s4 1934713408
        %v1626 = vunpack.c.0.s8 %v1625
        %v1627 = vlaneseq
        %v1628 = vshrl.u32 %v1627, 7
        %v1629 = vsub.s32 %v1626, %v1628
        %v1630 = vrot.slane %v1616, %v1629
        %v1631 = vcombine.high %v1608, 0.0
        %v1632 = vcombine.high %v1615, 0.0
        %v1633 = vcombine.high %v1623, 0.0
        %v1634 = vcombine.high %v1630, 0.0
        %v1635 = vld [vmem:[%s1584 + $0x8] sm:$0x3]
        %v1637 = vunpack.c.l.s4 1934713408
        %v1638 = vunpack.c.0.s8 %v1637
        %v1639 = vlaneseq
        %v1640 = vshrl.u32 %v1639, 7
        %v1641 = vsub.s32 %v1638, %v1640
        %v1642 = vrot.slane %v1635, %v1641
        %v1643 = vcombine.high %v1642, 0.0
        %1645 = vrot.lane.b32.xlu0 %v1631, 16
        %v1646 = vpop.permute.xlu0 %1645
        %1649 = vrot.lane.b32.xlu0 %v1615, 32
        %v1650 = vpop.permute.xlu0 %1649
        %1653 = vrot.lane.b32.xlu0 %v1632, 48
        %v1654 = vpop.permute.xlu0 %1653
        %1657 = vrot.lane.b32.xlu0 %v1623, 64
        %v1658 = vpop.permute.xlu0 %1657
        %1661 = vrot.lane.b32.xlu0 %v1633, 80
        %v1662 = vpop.permute.xlu0 %1661
        %1665 = vrot.lane.b32.xlu0 %v1630, 96
        %v1666 = vpop.permute.xlu0 %1665
        %1669 = vrot.lane.b32.xlu0 %v1634, 112
        %v1670 = vpop.permute.xlu0 %1669
        %1673 = vrot.lane.b32.xlu0 %v1643, 16
        %v1674 = vpop.permute.xlu0 %1673
        %v1676 = vsel %vm433, %v1608, %v1646
        %v1677 = vsel %vm435, %v1676, %v1650
        %v1678 = vsel %vm437, %v1677, %v1654
        %v1679 = vsel %vm439, %v1678, %v1658
        %v1680 = vsel %vm441, %v1679, %v1662
        %v1681 = vsel %vm443, %v1680, %v1666
        %v1682 = vsel %vm445, %v1681, %v1670
        %v1683 = vsel %vm433, %v1642, %v1674
        %1686 = vrot.lane.b32.xlu0 %v1585, 127
        %v1687 = vpop.permute.xlu0 %1686
        %1688 = vrot.lane.b32.xlu0 %v1635, 127
        %v1689 = vpop.permute.xlu0 %1688
        %v1691 = vcombine.high %v1687, 0.0
        %v1693 = vunpack.c.l.s4 1983009808
        %v1694 = vunpack.c.0.s8 %v1693
        %v1695 = vlaneseq
        %v1696 = vshrl.u32 %v1695, 7
        %v1697 = vsub.s32 %v1694, %v1696
        %v1698 = vrot.slane %v1687, %v1697
        %v1700 = vunpack.c.l.s4 1983009808
        %v1701 = vunpack.c.0.s8 %v1700
        %v1702 = vlaneseq
        %v1703 = vshrl.u32 %v1702, 7
        %v1704 = vsub.s32 %v1701, %v1703
        %v1705 = vrot.slane %v1691, %v1704
        %v1706 = vcombine.high %v1698, 0.0
        %v1708 = vunpack.c.l.s4 1934713408
        %v1709 = vunpack.c.0.s8 %v1708
        %v1710 = vlaneseq
        %v1711 = vshrl.u32 %v1710, 7
        %v1712 = vsub.s32 %v1709, %v1711
        %v1713 = vrot.slane %v1698, %v1712
        %v1715 = vunpack.c.l.s4 1934713408
        %v1716 = vunpack.c.0.s8 %v1715
        %v1717 = vlaneseq
        %v1718 = vshrl.u32 %v1717, 7
        %v1719 = vsub.s32 %v1716, %v1718
        %v1720 = vrot.slane %v1706, %v1719
        %v1721 = vcombine.high %v1705, 0.0
        %v1723 = vunpack.c.l.s4 1934713408
        %v1724 = vunpack.c.0.s8 %v1723
        %v1725 = vlaneseq
        %v1726 = vshrl.u32 %v1725, 7
        %v1727 = vsub.s32 %v1724, %v1726
        %v1728 = vrot.slane %v1705, %v1727
        %v1730 = vunpack.c.l.s4 1934713408
        %v1731 = vunpack.c.0.s8 %v1730
        %v1732 = vlaneseq
        %v1733 = vshrl.u32 %v1732, 7
        %v1734 = vsub.s32 %v1731, %v1733
        %v1735 = vrot.slane %v1721, %v1734
        %v1736 = vcombine.high %v1713, 0.0
        %v1737 = vcombine.high %v1720, 0.0
        %v1738 = vcombine.high %v1728, 0.0
        %v1739 = vcombine.high %v1735, 0.0
        %v1742 = vunpack.c.l.s4 1934713408
        %v1743 = vunpack.c.0.s8 %v1742
        %v1744 = vlaneseq
        %v1745 = vshrl.u32 %v1744, 7
        %v1746 = vsub.s32 %v1743, %v1745
        %v1747 = vrot.slane %v1689, %v1746
        %v1748 = vcombine.high %v1747, 0.0
        %1750 = vrot.lane.b32.xlu0 %v1736, 16
        %v1751 = vpop.permute.xlu0 %1750
        %1754 = vrot.lane.b32.xlu0 %v1720, 32
        %v1755 = vpop.permute.xlu0 %1754
        %1758 = vrot.lane.b32.xlu0 %v1737, 48
        %v1759 = vpop.permute.xlu0 %1758
        %1762 = vrot.lane.b32.xlu0 %v1728, 64
        %v1763 = vpop.permute.xlu0 %1762
        %1766 = vrot.lane.b32.xlu0 %v1738, 80
        %v1767 = vpop.permute.xlu0 %1766
        %1770 = vrot.lane.b32.xlu0 %v1735, 96
        %v1771 = vpop.permute.xlu0 %1770
        %1774 = vrot.lane.b32.xlu0 %v1739, 112
        %v1775 = vpop.permute.xlu0 %1774
        %1778 = vrot.lane.b32.xlu0 %v1748, 16
        %v1779 = vpop.permute.xlu0 %1778
        %v1781 = vsel %vm433, %v1713, %v1751
        %v1782 = vsel %vm435, %v1781, %v1755
        %v1783 = vsel %vm437, %v1782, %v1759
        %v1784 = vsel %vm439, %v1783, %v1763
        %v1785 = vsel %vm441, %v1784, %v1767
        %v1786 = vsel %vm443, %v1785, %v1771
        %v1787 = vsel %vm445, %v1786, %v1775
        %v1788 = vsel %vm433, %v1747, %v1779
        %1789 = vrot.lane.b32.xlu0 %v1585, 126
        %v1790 = vpop.permute.xlu0 %1789
        %1791 = vrot.lane.b32.xlu0 %v1635, 126
        %v1792 = vpop.permute.xlu0 %1791
        %v1794 = vcombine.high %v1790, 0.0
        %v1796 = vunpack.c.l.s4 1983009808
        %v1797 = vunpack.c.0.s8 %v1796
        %v1798 = vlaneseq
        %v1799 = vshrl.u32 %v1798, 7
        %v1800 = vsub.s32 %v1797, %v1799
        %v1801 = vrot.slane %v1790, %v1800
        %v1803 = vunpack.c.l.s4 1983009808
        %v1804 = vunpack.c.0.s8 %v1803
        %v1805 = vlaneseq
        %v1806 = vshrl.u32 %v1805, 7
        %v1807 = vsub.s32 %v1804, %v1806
        %v1808 = vrot.slane %v1794, %v1807
        %v1809 = vcombine.high %v1801, 0.0
        %v1811 = vunpack.c.l.s4 1934713408
        %v1812 = vunpack.c.0.s8 %v1811
        %v1813 = vlaneseq
        %v1814 = vshrl.u32 %v1813, 7
        %v1815 = vsub.s32 %v1812, %v1814
        %v1816 = vrot.slane %v1801, %v1815
        %v1818 = vunpack.c.l.s4 1934713408
        %v1819 = vunpack.c.0.s8 %v1818
        %v1820 = vlaneseq
        %v1821 = vshrl.u32 %v1820, 7
        %v1822 = vsub.s32 %v1819, %v1821
        %v1823 = vrot.slane %v1809, %v1822
        %v1824 = vcombine.high %v1808, 0.0
        %v1826 = vunpack.c.l.s4 1934713408
        %v1827 = vunpack.c.0.s8 %v1826
        %v1828 = vlaneseq
        %v1829 = vshrl.u32 %v1828, 7
        %v1830 = vsub.s32 %v1827, %v1829
        %v1831 = vrot.slane %v1808, %v1830
        %v1833 = vunpack.c.l.s4 1934713408
        %v1834 = vunpack.c.0.s8 %v1833
        %v1835 = vlaneseq
        %v1836 = vshrl.u32 %v1835, 7
        %v1837 = vsub.s32 %v1834, %v1836
        %v1838 = vrot.slane %v1824, %v1837
        %v1839 = vcombine.high %v1816, 0.0
        %v1840 = vcombine.high %v1823, 0.0
        %v1841 = vcombine.high %v1831, 0.0
        %v1842 = vcombine.high %v1838, 0.0
        %v1845 = vunpack.c.l.s4 1934713408
        %v1846 = vunpack.c.0.s8 %v1845
        %v1847 = vlaneseq
        %v1848 = vshrl.u32 %v1847, 7
        %v1849 = vsub.s32 %v1846, %v1848
        %v1850 = vrot.slane %v1792, %v1849
        %v1851 = vcombine.high %v1850, 0.0
        %1853 = vrot.lane.b32.xlu0 %v1839, 16
        %v1854 = vpop.permute.xlu0 %1853
        %1857 = vrot.lane.b32.xlu0 %v1823, 32
        %v1858 = vpop.permute.xlu0 %1857
        %1861 = vrot.lane.b32.xlu0 %v1840, 48
        %v1862 = vpop.permute.xlu0 %1861
        %1865 = vrot.lane.b32.xlu0 %v1831, 64
        %v1866 = vpop.permute.xlu0 %1865
        %1869 = vrot.lane.b32.xlu0 %v1841, 80
        %v1870 = vpop.permute.xlu0 %1869
        %1873 = vrot.lane.b32.xlu0 %v1838, 96
        %v1874 = vpop.permute.xlu0 %1873
        %1877 = vrot.lane.b32.xlu0 %v1842, 112
        %v1878 = vpop.permute.xlu0 %1877
        %1881 = vrot.lane.b32.xlu0 %v1851, 16
        %v1882 = vpop.permute.xlu0 %1881
        %v1884 = vsel %vm433, %v1816, %v1854
        %v1885 = vsel %vm435, %v1884, %v1858
        %v1886 = vsel %vm437, %v1885, %v1862
        %v1887 = vsel %vm439, %v1886, %v1866
        %v1888 = vsel %vm441, %v1887, %v1870
        %v1889 = vsel %vm443, %v1888, %v1874
        %v1890 = vsel %vm445, %v1889, %v1878
        %v1891 = vsel %vm433, %v1850, %v1882
        %s1892 = sadd.s32 %s965, 24
        %s1893 = scalar_lea.vmem %s334, %s1892
        %v1894 = vld [vmem:[%s1893] sm:$0xff]
        %v1895 = vcombine.high %v1894, 0.0
        %v1897 = vunpack.c.l.s4 1983009808
        %v1898 = vunpack.c.0.s8 %v1897
        %v1899 = vlaneseq
        %v1900 = vshrl.u32 %v1899, 7
        %v1901 = vsub.s32 %v1898, %v1900
        %v1902 = vrot.slane %v1894, %v1901
        %v1904 = vunpack.c.l.s4 1983009808
        %v1905 = vunpack.c.0.s8 %v1904
        %v1906 = vlaneseq
        %v1907 = vshrl.u32 %v1906, 7
        %v1908 = vsub.s32 %v1905, %v1907
        %v1909 = vrot.slane %v1895, %v1908
        %v1910 = vcombine.high %v1902, 0.0
        %v1912 = vunpack.c.l.s4 1934713408
        %v1913 = vunpack.c.0.s8 %v1912
        %v1914 = vlaneseq
        %v1915 = vshrl.u32 %v1914, 7
        %v1916 = vsub.s32 %v1913, %v1915
        %v1917 = vrot.slane %v1902, %v1916
        %v1919 = vunpack.c.l.s4 1934713408
        %v1920 = vunpack.c.0.s8 %v1919
        %v1921 = vlaneseq
        %v1922 = vshrl.u32 %v1921, 7
        %v1923 = vsub.s32 %v1920, %v1922
        %v1924 = vrot.slane %v1910, %v1923
        %v1925 = vcombine.high %v1909, 0.0
        %v1927 = vunpack.c.l.s4 1934713408
        %v1928 = vunpack.c.0.s8 %v1927
        %v1929 = vlaneseq
        %v1930 = vshrl.u32 %v1929, 7
        %v1931 = vsub.s32 %v1928, %v1930
        %v1932 = vrot.slane %v1909, %v1931
        %v1934 = vunpack.c.l.s4 1934713408
        %v1935 = vunpack.c.0.s8 %v1934
        %v1936 = vlaneseq
        %v1937 = vshrl.u32 %v1936, 7
        %v1938 = vsub.s32 %v1935, %v1937
        %v1939 = vrot.slane %v1925, %v1938
        %v1940 = vcombine.high %v1917, 0.0
        %v1941 = vcombine.high %v1924, 0.0
        %v1942 = vcombine.high %v1932, 0.0
        %v1943 = vcombine.high %v1939, 0.0
        %v1944 = vld [vmem:[%s1893 + $0x8] sm:$0x3]
        %v1946 = vunpack.c.l.s4 1934713408
        %v1947 = vunpack.c.0.s8 %v1946
        %v1948 = vlaneseq
        %v1949 = vshrl.u32 %v1948, 7
        %v1950 = vsub.s32 %v1947, %v1949
        %v1951 = vrot.slane %v1944, %v1950
        %v1952 = vcombine.high %v1951, 0.0
        %1954 = vrot.lane.b32.xlu0 %v1940, 16
        %v1955 = vpop.permute.xlu0 %1954
        %1958 = vrot.lane.b32.xlu0 %v1924, 32
        %v1959 = vpop.permute.xlu0 %1958
        %1962 = vrot.lane.b32.xlu0 %v1941, 48
        %v1963 = vpop.permute.xlu0 %1962
        %1966 = vrot.lane.b32.xlu0 %v1932, 64
        %v1967 = vpop.permute.xlu0 %1966
        %1970 = vrot.lane.b32.xlu0 %v1942, 80
        %v1971 = vpop.permute.xlu0 %1970
        %1974 = vrot.lane.b32.xlu0 %v1939, 96
        %v1975 = vpop.permute.xlu0 %1974
        %1978 = vrot.lane.b32.xlu0 %v1943, 112
        %v1979 = vpop.permute.xlu0 %1978
        %1982 = vrot.lane.b32.xlu0 %v1952, 16
        %v1983 = vpop.permute.xlu0 %1982
        %v1985 = vsel %vm433, %v1917, %v1955
        %v1986 = vsel %vm435, %v1985, %v1959
        %v1987 = vsel %vm437, %v1986, %v1963
        %v1988 = vsel %vm439, %v1987, %v1967
        %v1989 = vsel %vm441, %v1988, %v1971
        %v1990 = vsel %vm443, %v1989, %v1975
        %v1991 = vsel %vm445, %v1990, %v1979
        %v1992 = vsel %vm433, %v1951, %v1983
        %1995 = vrot.lane.b32.xlu0 %v1894, 127
        %v1996 = vpop.permute.xlu0 %1995
        %1997 = vrot.lane.b32.xlu0 %v1944, 127
        %v1998 = vpop.permute.xlu0 %1997
        %v2000 = vcombine.high %v1996, 0.0
        %v2002 = vunpack.c.l.s4 1983009808
        %v2003 = vunpack.c.0.s8 %v2002
        %v2004 = vlaneseq
        %v2005 = vshrl.u32 %v2004, 7
        %v2006 = vsub.s32 %v2003, %v2005
        %v2007 = vrot.slane %v1996, %v2006
        %v2009 = vunpack.c.l.s4 1983009808
        %v2010 = vunpack.c.0.s8 %v2009
        %v2011 = vlaneseq
        %v2012 = vshrl.u32 %v2011, 7
        %v2013 = vsub.s32 %v2010, %v2012
        %v2014 = vrot.slane %v2000, %v2013
        %v2015 = vcombine.high %v2007, 0.0
        %v2017 = vunpack.c.l.s4 1934713408
        %v2018 = vunpack.c.0.s8 %v2017
        %v2019 = vlaneseq
        %v2020 = vshrl.u32 %v2019, 7
        %v2021 = vsub.s32 %v2018, %v2020
        %v2022 = vrot.slane %v2007, %v2021
        %v2024 = vunpack.c.l.s4 1934713408
        %v2025 = vunpack.c.0.s8 %v2024
        %v2026 = vlaneseq
        %v2027 = vshrl.u32 %v2026, 7
        %v2028 = vsub.s32 %v2025, %v2027
        %v2029 = vrot.slane %v2015, %v2028
        %v2030 = vcombine.high %v2014, 0.0
        %v2032 = vunpack.c.l.s4 1934713408
        %v2033 = vunpack.c.0.s8 %v2032
        %v2034 = vlaneseq
        %v2035 = vshrl.u32 %v2034, 7
        %v2036 = vsub.s32 %v2033, %v2035
        %v2037 = vrot.slane %v2014, %v2036
        %v2039 = vunpack.c.l.s4 1934713408
        %v2040 = vunpack.c.0.s8 %v2039
        %v2041 = vlaneseq
        %v2042 = vshrl.u32 %v2041, 7
        %v2043 = vsub.s32 %v2040, %v2042
        %v2044 = vrot.slane %v2030, %v2043
        %v2045 = vcombine.high %v2022, 0.0
        %v2046 = vcombine.high %v2029, 0.0
        %v2047 = vcombine.high %v2037, 0.0
        %v2048 = vcombine.high %v2044, 0.0
        %v2051 = vunpack.c.l.s4 1934713408
        %v2052 = vunpack.c.0.s8 %v2051
        %v2053 = vlaneseq
        %v2054 = vshrl.u32 %v2053, 7
        %v2055 = vsub.s32 %v2052, %v2054
        %v2056 = vrot.slane %v1998, %v2055
        %v2057 = vcombine.high %v2056, 0.0
        %2059 = vrot.lane.b32.xlu0 %v2045, 16
        %v2060 = vpop.permute.xlu0 %2059
        %2063 = vrot.lane.b32.xlu0 %v2029, 32
        %v2064 = vpop.permute.xlu0 %2063
        %2067 = vrot.lane.b32.xlu0 %v2046, 48
        %v2068 = vpop.permute.xlu0 %2067
        %2071 = vrot.lane.b32.xlu0 %v2037, 64
        %v2072 = vpop.permute.xlu0 %2071
        %2075 = vrot.lane.b32.xlu0 %v2047, 80
        %v2076 = vpop.permute.xlu0 %2075
        %2079 = vrot.lane.b32.xlu0 %v2044, 96
        %v2080 = vpop.permute.xlu0 %2079
        %2083 = vrot.lane.b32.xlu0 %v2048, 112
        %v2084 = vpop.permute.xlu0 %2083
        %2087 = vrot.lane.b32.xlu0 %v2057, 16
        %v2088 = vpop.permute.xlu0 %2087
        %v2090 = vsel %vm433, %v2022, %v2060
        %v2091 = vsel %vm435, %v2090, %v2064
        %v2092 = vsel %vm437, %v2091, %v2068
        %v2093 = vsel %vm439, %v2092, %v2072
        %v2094 = vsel %vm441, %v2093, %v2076
        %v2095 = vsel %vm443, %v2094, %v2080
        %v2096 = vsel %vm445, %v2095, %v2084
        %v2097 = vsel %vm433, %v2056, %v2088
        %2098 = vrot.lane.b32.xlu0 %v1894, 126
        %v2099 = vpop.permute.xlu0 %2098
        %2100 = vrot.lane.b32.xlu0 %v1944, 126
        %v2101 = vpop.permute.xlu0 %2100
        %v2103 = vcombine.high %v2099, 0.0
        %v2105 = vunpack.c.l.s4 1983009808
        %v2106 = vunpack.c.0.s8 %v2105
        %v2107 = vlaneseq
        %v2108 = vshrl.u32 %v2107, 7
        %v2109 = vsub.s32 %v2106, %v2108
        %v2110 = vrot.slane %v2099, %v2109
        %v2112 = vunpack.c.l.s4 1983009808
        %v2113 = vunpack.c.0.s8 %v2112
        %v2114 = vlaneseq
        %v2115 = vshrl.u32 %v2114, 7
        %v2116 = vsub.s32 %v2113, %v2115
        %v2117 = vrot.slane %v2103, %v2116
        %v2118 = vcombine.high %v2110, 0.0
        %v2120 = vunpack.c.l.s4 1934713408
        %v2121 = vunpack.c.0.s8 %v2120
        %v2122 = vlaneseq
        %v2123 = vshrl.u32 %v2122, 7
        %v2124 = vsub.s32 %v2121, %v2123
        %v2125 = vrot.slane %v2110, %v2124
        %v2127 = vunpack.c.l.s4 1934713408
        %v2128 = vunpack.c.0.s8 %v2127
        %v2129 = vlaneseq
        %v2130 = vshrl.u32 %v2129, 7
        %v2131 = vsub.s32 %v2128, %v2130
        %v2132 = vrot.slane %v2118, %v2131
        %v2133 = vcombine.high %v2117, 0.0
        %v2135 = vunpack.c.l.s4 1934713408
        %v2136 = vunpack.c.0.s8 %v2135
        %v2137 = vlaneseq
        %v2138 = vshrl.u32 %v2137, 7
        %v2139 = vsub.s32 %v2136, %v2138
        %v2140 = vrot.slane %v2117, %v2139
        %v2142 = vunpack.c.l.s4 1934713408
        %v2143 = vunpack.c.0.s8 %v2142
        %v2144 = vlaneseq
        %v2145 = vshrl.u32 %v2144, 7
        %v2146 = vsub.s32 %v2143, %v2145
        %v2147 = vrot.slane %v2133, %v2146
        %v2148 = vcombine.high %v2125, 0.0
        %v2149 = vcombine.high %v2132, 0.0
        %v2150 = vcombine.high %v2140, 0.0
        %v2151 = vcombine.high %v2147, 0.0
        %v2154 = vunpack.c.l.s4 1934713408
        %v2155 = vunpack.c.0.s8 %v2154
        %v2156 = vlaneseq
        %v2157 = vshrl.u32 %v2156, 7
        %v2158 = vsub.s32 %v2155, %v2157
        %v2159 = vrot.slane %v2101, %v2158
        %v2160 = vcombine.high %v2159, 0.0
        %2162 = vrot.lane.b32.xlu0 %v2148, 16
        %v2163 = vpop.permute.xlu0 %2162
        %2166 = vrot.lane.b32.xlu0 %v2132, 32
        %v2167 = vpop.permute.xlu0 %2166
        %2170 = vrot.lane.b32.xlu0 %v2149, 48
        %v2171 = vpop.permute.xlu0 %2170
        %2174 = vrot.lane.b32.xlu0 %v2140, 64
        %v2175 = vpop.permute.xlu0 %2174
        %2178 = vrot.lane.b32.xlu0 %v2150, 80
        %v2179 = vpop.permute.xlu0 %2178
        %2182 = vrot.lane.b32.xlu0 %v2147, 96
        %v2183 = vpop.permute.xlu0 %2182
        %2186 = vrot.lane.b32.xlu0 %v2151, 112
        %v2187 = vpop.permute.xlu0 %2186
        %2190 = vrot.lane.b32.xlu0 %v2160, 16
        %v2191 = vpop.permute.xlu0 %2190
        %v2193 = vsel %vm433, %v2125, %v2163
        %v2194 = vsel %vm435, %v2193, %v2167
        %v2195 = vsel %vm437, %v2194, %v2171
        %v2196 = vsel %vm439, %v2195, %v2175
        %v2197 = vsel %vm441, %v2196, %v2179
        %v2198 = vsel %vm443, %v2197, %v2183
        %v2199 = vsel %vm445, %v2198, %v2187
        %v2200 = vsel %vm433, %v2159, %v2191
        %s2201 = sadd.s32 %s340, 48
        %s2202 = scalar_lea.vmem %s334, %s2201
        %v2203 = vld [vmem:[%s2202] sm:$0xff]
        %v2204 = vcombine.high %v2203, 0.0
        %v2206 = vunpack.c.l.s4 1983009808
        %v2207 = vunpack.c.0.s8 %v2206
        %v2208 = vlaneseq
        %v2209 = vshrl.u32 %v2208, 7
        %v2210 = vsub.s32 %v2207, %v2209
        %v2211 = vrot.slane %v2203, %v2210
        %v2213 = vunpack.c.l.s4 1983009808
        %v2214 = vunpack.c.0.s8 %v2213
        %v2215 = vlaneseq
        %v2216 = vshrl.u32 %v2215, 7
        %v2217 = vsub.s32 %v2214, %v2216
        %v2218 = vrot.slane %v2204, %v2217
        %v2219 = vcombine.high %v2211, 0.0
        %v2221 = vunpack.c.l.s4 1934713408
        %v2222 = vunpack.c.0.s8 %v2221
        %v2223 = vlaneseq
        %v2224 = vshrl.u32 %v2223, 7
        %v2225 = vsub.s32 %v2222, %v2224
        %v2226 = vrot.slane %v2211, %v2225
        %v2228 = vunpack.c.l.s4 1934713408
        %v2229 = vunpack.c.0.s8 %v2228
        %v2230 = vlaneseq
        %v2231 = vshrl.u32 %v2230, 7
        %v2232 = vsub.s32 %v2229, %v2231
        %v2233 = vrot.slane %v2219, %v2232
        %v2234 = vcombine.high %v2218, 0.0
        %v2236 = vunpack.c.l.s4 1934713408
        %v2237 = vunpack.c.0.s8 %v2236
        %v2238 = vlaneseq
        %v2239 = vshrl.u32 %v2238, 7
        %v2240 = vsub.s32 %v2237, %v2239
        %v2241 = vrot.slane %v2218, %v2240
        %v2243 = vunpack.c.l.s4 1934713408
        %v2244 = vunpack.c.0.s8 %v2243
        %v2245 = vlaneseq
        %v2246 = vshrl.u32 %v2245, 7
        %v2247 = vsub.s32 %v2244, %v2246
        %v2248 = vrot.slane %v2234, %v2247
        %v2249 = vcombine.high %v2226, 0.0
        %v2250 = vcombine.high %v2233, 0.0
        %v2251 = vcombine.high %v2241, 0.0
        %v2252 = vcombine.high %v2248, 0.0
        %v2253 = vld [vmem:[%s2202 + $0x8] sm:$0x3]
        %v2255 = vunpack.c.l.s4 1934713408
        %v2256 = vunpack.c.0.s8 %v2255
        %v2257 = vlaneseq
        %v2258 = vshrl.u32 %v2257, 7
        %v2259 = vsub.s32 %v2256, %v2258
        %v2260 = vrot.slane %v2253, %v2259
        %v2261 = vcombine.high %v2260, 0.0
        %2263 = vrot.lane.b32.xlu0 %v2249, 16
        %v2264 = vpop.permute.xlu0 %2263
        %2267 = vrot.lane.b32.xlu0 %v2233, 32
        %v2268 = vpop.permute.xlu0 %2267
        %2271 = vrot.lane.b32.xlu0 %v2250, 48
        %v2272 = vpop.permute.xlu0 %2271
        %2275 = vrot.lane.b32.xlu0 %v2241, 64
        %v2276 = vpop.permute.xlu0 %2275
        %2279 = vrot.lane.b32.xlu0 %v2251, 80
        %v2280 = vpop.permute.xlu0 %2279
        %2283 = vrot.lane.b32.xlu0 %v2248, 96
        %v2284 = vpop.permute.xlu0 %2283
        %2287 = vrot.lane.b32.xlu0 %v2252, 112
        %v2288 = vpop.permute.xlu0 %2287
        %2291 = vrot.lane.b32.xlu0 %v2261, 16
        %v2292 = vpop.permute.xlu0 %2291
        %v2294 = vsel %vm433, %v2226, %v2264
        %v2295 = vsel %vm435, %v2294, %v2268
        %v2296 = vsel %vm437, %v2295, %v2272
        %v2297 = vsel %vm439, %v2296, %v2276
        %v2298 = vsel %vm441, %v2297, %v2280
        %v2299 = vsel %vm443, %v2298, %v2284
        %v2300 = vsel %vm445, %v2299, %v2288
        %v2301 = vsel %vm433, %v2260, %v2292
        %2304 = vrot.lane.b32.xlu0 %v2203, 127
        %v2305 = vpop.permute.xlu0 %2304
        %2306 = vrot.lane.b32.xlu0 %v2253, 127
        %v2307 = vpop.permute.xlu0 %2306
        %v2309 = vcombine.high %v2305, 0.0
        %v2311 = vunpack.c.l.s4 1983009808
        %v2312 = vunpack.c.0.s8 %v2311
        %v2313 = vlaneseq
        %v2314 = vshrl.u32 %v2313, 7
        %v2315 = vsub.s32 %v2312, %v2314
        %v2316 = vrot.slane %v2305, %v2315
        %v2318 = vunpack.c.l.s4 1983009808
        %v2319 = vunpack.c.0.s8 %v2318
        %v2320 = vlaneseq
        %v2321 = vshrl.u32 %v2320, 7
        %v2322 = vsub.s32 %v2319, %v2321
        %v2323 = vrot.slane %v2309, %v2322
        %v2324 = vcombine.high %v2316, 0.0
        %v2326 = vunpack.c.l.s4 1934713408
        %v2327 = vunpack.c.0.s8 %v2326
        %v2328 = vlaneseq
        %v2329 = vshrl.u32 %v2328, 7
        %v2330 = vsub.s32 %v2327, %v2329
        %v2331 = vrot.slane %v2316, %v2330
        %v2333 = vunpack.c.l.s4 1934713408
        %v2334 = vunpack.c.0.s8 %v2333
        %v2335 = vlaneseq
        %v2336 = vshrl.u32 %v2335, 7
        %v2337 = vsub.s32 %v2334, %v2336
        %v2338 = vrot.slane %v2324, %v2337
        %v2339 = vcombine.high %v2323, 0.0
        %v2341 = vunpack.c.l.s4 1934713408
        %v2342 = vunpack.c.0.s8 %v2341
        %v2343 = vlaneseq
        %v2344 = vshrl.u32 %v2343, 7
        %v2345 = vsub.s32 %v2342, %v2344
        %v2346 = vrot.slane %v2323, %v2345
        %v2348 = vunpack.c.l.s4 1934713408
        %v2349 = vunpack.c.0.s8 %v2348
        %v2350 = vlaneseq
        %v2351 = vshrl.u32 %v2350, 7
        %v2352 = vsub.s32 %v2349, %v2351
        %v2353 = vrot.slane %v2339, %v2352
        %v2354 = vcombine.high %v2331, 0.0
        %v2355 = vcombine.high %v2338, 0.0
        %v2356 = vcombine.high %v2346, 0.0
        %v2357 = vcombine.high %v2353, 0.0
        %v2360 = vunpack.c.l.s4 1934713408
        %v2361 = vunpack.c.0.s8 %v2360
        %v2362 = vlaneseq
        %v2363 = vshrl.u32 %v2362, 7
        %v2364 = vsub.s32 %v2361, %v2363
        %v2365 = vrot.slane %v2307, %v2364
        %v2366 = vcombine.high %v2365, 0.0
        %2368 = vrot.lane.b32.xlu0 %v2354, 16
        %v2369 = vpop.permute.xlu0 %2368
        %2372 = vrot.lane.b32.xlu0 %v2338, 32
        %v2373 = vpop.permute.xlu0 %2372
        %2376 = vrot.lane.b32.xlu0 %v2355, 48
        %v2377 = vpop.permute.xlu0 %2376
        %2380 = vrot.lane.b32.xlu0 %v2346, 64
        %v2381 = vpop.permute.xlu0 %2380
        %2384 = vrot.lane.b32.xlu0 %v2356, 80
        %v2385 = vpop.permute.xlu0 %2384
        %2388 = vrot.lane.b32.xlu0 %v2353, 96
        %v2389 = vpop.permute.xlu0 %2388
        %2392 = vrot.lane.b32.xlu0 %v2357, 112
        %v2393 = vpop.permute.xlu0 %2392
        %2396 = vrot.lane.b32.xlu0 %v2366, 16
        %v2397 = vpop.permute.xlu0 %2396
        %v2399 = vsel %vm433, %v2331, %v2369
        %v2400 = vsel %vm435, %v2399, %v2373
        %v2401 = vsel %vm437, %v2400, %v2377
        %v2402 = vsel %vm439, %v2401, %v2381
        %v2403 = vsel %vm441, %v2402, %v2385
        %v2404 = vsel %vm443, %v2403, %v2389
        %v2405 = vsel %vm445, %v2404, %v2393
        %v2406 = vsel %vm433, %v2365, %v2397
        %2407 = vrot.lane.b32.xlu0 %v2203, 126
        %v2408 = vpop.permute.xlu0 %2407
        %2409 = vrot.lane.b32.xlu0 %v2253, 126
        %v2410 = vpop.permute.xlu0 %2409
        %v2412 = vcombine.high %v2408, 0.0
        %v2414 = vunpack.c.l.s4 1983009808
        %v2415 = vunpack.c.0.s8 %v2414
        %v2416 = vlaneseq
        %v2417 = vshrl.u32 %v2416, 7
        %v2418 = vsub.s32 %v2415, %v2417
        %v2419 = vrot.slane %v2408, %v2418
        %v2421 = vunpack.c.l.s4 1983009808
        %v2422 = vunpack.c.0.s8 %v2421
        %v2423 = vlaneseq
        %v2424 = vshrl.u32 %v2423, 7
        %v2425 = vsub.s32 %v2422, %v2424
        %v2426 = vrot.slane %v2412, %v2425
        %v2427 = vcombine.high %v2419, 0.0
        %v2429 = vunpack.c.l.s4 1934713408
        %v2430 = vunpack.c.0.s8 %v2429
        %v2431 = vlaneseq
        %v2432 = vshrl.u32 %v2431, 7
        %v2433 = vsub.s32 %v2430, %v2432
        %v2434 = vrot.slane %v2419, %v2433
        %v2436 = vunpack.c.l.s4 1934713408
        %v2437 = vunpack.c.0.s8 %v2436
        %v2438 = vlaneseq
        %v2439 = vshrl.u32 %v2438, 7
        %v2440 = vsub.s32 %v2437, %v2439
        %v2441 = vrot.slane %v2427, %v2440
        %v2442 = vcombine.high %v2426, 0.0
        %v2444 = vunpack.c.l.s4 1934713408
        %v2445 = vunpack.c.0.s8 %v2444
        %v2446 = vlaneseq
        %v2447 = vshrl.u32 %v2446, 7
        %v2448 = vsub.s32 %v2445, %v2447
        %v2449 = vrot.slane %v2426, %v2448
        %v2451 = vunpack.c.l.s4 1934713408
        %v2452 = vunpack.c.0.s8 %v2451
        %v2453 = vlaneseq
        %v2454 = vshrl.u32 %v2453, 7
        %v2455 = vsub.s32 %v2452, %v2454
        %v2456 = vrot.slane %v2442, %v2455
        %v2457 = vcombine.high %v2434, 0.0
        %v2458 = vcombine.high %v2441, 0.0
        %v2459 = vcombine.high %v2449, 0.0
        %v2460 = vcombine.high %v2456, 0.0
        %v2463 = vunpack.c.l.s4 1934713408
        %v2464 = vunpack.c.0.s8 %v2463
        %v2465 = vlaneseq
        %v2466 = vshrl.u32 %v2465, 7
        %v2467 = vsub.s32 %v2464, %v2466
        %v2468 = vrot.slane %v2410, %v2467
        %v2469 = vcombine.high %v2468, 0.0
        %2471 = vrot.lane.b32.xlu0 %v2457, 16
        %v2472 = vpop.permute.xlu0 %2471
        %2475 = vrot.lane.b32.xlu0 %v2441, 32
        %v2476 = vpop.permute.xlu0 %2475
        %2479 = vrot.lane.b32.xlu0 %v2458, 48
        %v2480 = vpop.permute.xlu0 %2479
        %2483 = vrot.lane.b32.xlu0 %v2449, 64
        %v2484 = vpop.permute.xlu0 %2483
        %2487 = vrot.lane.b32.xlu0 %v2459, 80
        %v2488 = vpop.permute.xlu0 %2487
        %2491 = vrot.lane.b32.xlu0 %v2456, 96
        %v2492 = vpop.permute.xlu0 %2491
        %2495 = vrot.lane.b32.xlu0 %v2460, 112
        %v2496 = vpop.permute.xlu0 %2495
        %2499 = vrot.lane.b32.xlu0 %v2469, 16
        %v2500 = vpop.permute.xlu0 %2499
        %v2502 = vsel %vm433, %v2434, %v2472
        %v2503 = vsel %vm435, %v2502, %v2476
        %v2504 = vsel %vm437, %v2503, %v2480
        %v2505 = vsel %vm439, %v2504, %v2484
        %v2506 = vsel %vm441, %v2505, %v2488
        %v2507 = vsel %vm443, %v2506, %v2492
        %v2508 = vsel %vm445, %v2507, %v2496
        %v2509 = vsel %vm433, %v2468, %v2500
        %s2510 = sadd.s32 %s656, 48
        %s2511 = scalar_lea.vmem %s334, %s2510
        %v2512 = vld [vmem:[%s2511] sm:$0xff]
        %v2513 = vcombine.high %v2512, 0.0
        %v2515 = vunpack.c.l.s4 1983009808
        %v2516 = vunpack.c.0.s8 %v2515
        %v2517 = vlaneseq
        %v2518 = vshrl.u32 %v2517, 7
        %v2519 = vsub.s32 %v2516, %v2518
        %v2520 = vrot.slane %v2512, %v2519
        %v2522 = vunpack.c.l.s4 1983009808
        %v2523 = vunpack.c.0.s8 %v2522
        %v2524 = vlaneseq
        %v2525 = vshrl.u32 %v2524, 7
        %v2526 = vsub.s32 %v2523, %v2525
        %v2527 = vrot.slane %v2513, %v2526
        %v2528 = vcombine.high %v2520, 0.0
        %v2530 = vunpack.c.l.s4 1934713408
        %v2531 = vunpack.c.0.s8 %v2530
        %v2532 = vlaneseq
        %v2533 = vshrl.u32 %v2532, 7
        %v2534 = vsub.s32 %v2531, %v2533
        %v2535 = vrot.slane %v2520, %v2534
        %v2537 = vunpack.c.l.s4 1934713408
        %v2538 = vunpack.c.0.s8 %v2537
        %v2539 = vlaneseq
        %v2540 = vshrl.u32 %v2539, 7
        %v2541 = vsub.s32 %v2538, %v2540
        %v2542 = vrot.slane %v2528, %v2541
        %v2543 = vcombine.high %v2527, 0.0
        %v2545 = vunpack.c.l.s4 1934713408
        %v2546 = vunpack.c.0.s8 %v2545
        %v2547 = vlaneseq
        %v2548 = vshrl.u32 %v2547, 7
        %v2549 = vsub.s32 %v2546, %v2548
        %v2550 = vrot.slane %v2527, %v2549
        %v2552 = vunpack.c.l.s4 1934713408
        %v2553 = vunpack.c.0.s8 %v2552
        %v2554 = vlaneseq
        %v2555 = vshrl.u32 %v2554, 7
        %v2556 = vsub.s32 %v2553, %v2555
        %v2557 = vrot.slane %v2543, %v2556
        %v2558 = vcombine.high %v2535, 0.0
        %v2559 = vcombine.high %v2542, 0.0
        %v2560 = vcombine.high %v2550, 0.0
        %v2561 = vcombine.high %v2557, 0.0
        %v2562 = vld [vmem:[%s2511 + $0x8] sm:$0x3]
        %v2564 = vunpack.c.l.s4 1934713408
        %v2565 = vunpack.c.0.s8 %v2564
        %v2566 = vlaneseq
        %v2567 = vshrl.u32 %v2566, 7
        %v2568 = vsub.s32 %v2565, %v2567
        %v2569 = vrot.slane %v2562, %v2568
        %v2570 = vcombine.high %v2569, 0.0
        %2572 = vrot.lane.b32.xlu0 %v2558, 16
        %v2573 = vpop.permute.xlu0 %2572
        %2576 = vrot.lane.b32.xlu0 %v2542, 32
        %v2577 = vpop.permute.xlu0 %2576
        %2580 = vrot.lane.b32.xlu0 %v2559, 48
        %v2581 = vpop.permute.xlu0 %2580
        %2584 = vrot.lane.b32.xlu0 %v2550, 64
        %v2585 = vpop.permute.xlu0 %2584
        %2588 = vrot.lane.b32.xlu0 %v2560, 80
        %v2589 = vpop.permute.xlu0 %2588
        %2592 = vrot.lane.b32.xlu0 %v2557, 96
        %v2593 = vpop.permute.xlu0 %2592
        %2596 = vrot.lane.b32.xlu0 %v2561, 112
        %v2597 = vpop.permute.xlu0 %2596
        %2600 = vrot.lane.b32.xlu0 %v2570, 16
        %v2601 = vpop.permute.xlu0 %2600
        %v2603 = vsel %vm433, %v2535, %v2573
        %v2604 = vsel %vm435, %v2603, %v2577
        %v2605 = vsel %vm437, %v2604, %v2581
        %v2606 = vsel %vm439, %v2605, %v2585
        %v2607 = vsel %vm441, %v2606, %v2589
        %v2608 = vsel %vm443, %v2607, %v2593
        %v2609 = vsel %vm445, %v2608, %v2597
        %v2610 = vsel %vm433, %v2569, %v2601
        %2613 = vrot.lane.b32.xlu0 %v2512, 127
        %v2614 = vpop.permute.xlu0 %2613
        %2615 = vrot.lane.b32.xlu0 %v2562, 127
        %v2616 = vpop.permute.xlu0 %2615
        %v2618 = vcombine.high %v2614, 0.0
        %v2620 = vunpack.c.l.s4 1983009808
        %v2621 = vunpack.c.0.s8 %v2620
        %v2622 = vlaneseq
        %v2623 = vshrl.u32 %v2622, 7
        %v2624 = vsub.s32 %v2621, %v2623
        %v2625 = vrot.slane %v2614, %v2624
        %v2627 = vunpack.c.l.s4 1983009808
        %v2628 = vunpack.c.0.s8 %v2627
        %v2629 = vlaneseq
        %v2630 = vshrl.u32 %v2629, 7
        %v2631 = vsub.s32 %v2628, %v2630
        %v2632 = vrot.slane %v2618, %v2631
        %v2633 = vcombine.high %v2625, 0.0
        %v2635 = vunpack.c.l.s4 1934713408
        %v2636 = vunpack.c.0.s8 %v2635
        %v2637 = vlaneseq
        %v2638 = vshrl.u32 %v2637, 7
        %v2639 = vsub.s32 %v2636, %v2638
        %v2640 = vrot.slane %v2625, %v2639
        %v2642 = vunpack.c.l.s4 1934713408
        %v2643 = vunpack.c.0.s8 %v2642
        %v2644 = vlaneseq
        %v2645 = vshrl.u32 %v2644, 7
        %v2646 = vsub.s32 %v2643, %v2645
        %v2647 = vrot.slane %v2633, %v2646
        %v2648 = vcombine.high %v2632, 0.0
        %v2650 = vunpack.c.l.s4 1934713408
        %v2651 = vunpack.c.0.s8 %v2650
        %v2652 = vlaneseq
        %v2653 = vshrl.u32 %v2652, 7
        %v2654 = vsub.s32 %v2651, %v2653
        %v2655 = vrot.slane %v2632, %v2654
        %v2657 = vunpack.c.l.s4 1934713408
        %v2658 = vunpack.c.0.s8 %v2657
        %v2659 = vlaneseq
        %v2660 = vshrl.u32 %v2659, 7
        %v2661 = vsub.s32 %v2658, %v2660
        %v2662 = vrot.slane %v2648, %v2661
        %v2663 = vcombine.high %v2640, 0.0
        %v2664 = vcombine.high %v2647, 0.0
        %v2665 = vcombine.high %v2655, 0.0
        %v2666 = vcombine.high %v2662, 0.0
        %v2669 = vunpack.c.l.s4 1934713408
        %v2670 = vunpack.c.0.s8 %v2669
        %v2671 = vlaneseq
        %v2672 = vshrl.u32 %v2671, 7
        %v2673 = vsub.s32 %v2670, %v2672
        %v2674 = vrot.slane %v2616, %v2673
        %v2675 = vcombine.high %v2674, 0.0
        %2677 = vrot.lane.b32.xlu0 %v2663, 16
        %v2678 = vpop.permute.xlu0 %2677
        %2681 = vrot.lane.b32.xlu0 %v2647, 32
        %v2682 = vpop.permute.xlu0 %2681
        %2685 = vrot.lane.b32.xlu0 %v2664, 48
        %v2686 = vpop.permute.xlu0 %2685
        %2689 = vrot.lane.b32.xlu0 %v2655, 64
        %v2690 = vpop.permute.xlu0 %2689
        %2693 = vrot.lane.b32.xlu0 %v2665, 80
        %v2694 = vpop.permute.xlu0 %2693
        %2697 = vrot.lane.b32.xlu0 %v2662, 96
        %v2698 = vpop.permute.xlu0 %2697
        %2701 = vrot.lane.b32.xlu0 %v2666, 112
        %v2702 = vpop.permute.xlu0 %2701
        %2705 = vrot.lane.b32.xlu0 %v2675, 16
        %v2706 = vpop.permute.xlu0 %2705
        %v2708 = vsel %vm433, %v2640, %v2678
        %v2709 = vsel %vm435, %v2708, %v2682
        %v2710 = vsel %vm437, %v2709, %v2686
        %v2711 = vsel %vm439, %v2710, %v2690
        %v2712 = vsel %vm441, %v2711, %v2694
        %v2713 = vsel %vm443, %v2712, %v2698
        %v2714 = vsel %vm445, %v2713, %v2702
        %v2715 = vsel %vm433, %v2674, %v2706
        %2716 = vrot.lane.b32.xlu0 %v2512, 126
        %v2717 = vpop.permute.xlu0 %2716
        %2718 = vrot.lane.b32.xlu0 %v2562, 126
        %v2719 = vpop.permute.xlu0 %2718
        %v2721 = vcombine.high %v2717, 0.0
        %v2723 = vunpack.c.l.s4 1983009808
        %v2724 = vunpack.c.0.s8 %v2723
        %v2725 = vlaneseq
        %v2726 = vshrl.u32 %v2725, 7
        %v2727 = vsub.s32 %v2724, %v2726
        %v2728 = vrot.slane %v2717, %v2727
        %v2730 = vunpack.c.l.s4 1983009808
        %v2731 = vunpack.c.0.s8 %v2730
        %v2732 = vlaneseq
        %v2733 = vshrl.u32 %v2732, 7
        %v2734 = vsub.s32 %v2731, %v2733
        %v2735 = vrot.slane %v2721, %v2734
        %v2736 = vcombine.high %v2728, 0.0
        %v2738 = vunpack.c.l.s4 1934713408
        %v2739 = vunpack.c.0.s8 %v2738
        %v2740 = vlaneseq
        %v2741 = vshrl.u32 %v2740, 7
        %v2742 = vsub.s32 %v2739, %v2741
        %v2743 = vrot.slane %v2728, %v2742
        %v2745 = vunpack.c.l.s4 1934713408
        %v2746 = vunpack.c.0.s8 %v2745
        %v2747 = vlaneseq
        %v2748 = vshrl.u32 %v2747, 7
        %v2749 = vsub.s32 %v2746, %v2748
        %v2750 = vrot.slane %v2736, %v2749
        %v2751 = vcombine.high %v2735, 0.0
        %v2753 = vunpack.c.l.s4 1934713408
        %v2754 = vunpack.c.0.s8 %v2753
        %v2755 = vlaneseq
        %v2756 = vshrl.u32 %v2755, 7
        %v2757 = vsub.s32 %v2754, %v2756
        %v2758 = vrot.slane %v2735, %v2757
        %v2760 = vunpack.c.l.s4 1934713408
        %v2761 = vunpack.c.0.s8 %v2760
        %v2762 = vlaneseq
        %v2763 = vshrl.u32 %v2762, 7
        %v2764 = vsub.s32 %v2761, %v2763
        %v2765 = vrot.slane %v2751, %v2764
        %v2766 = vcombine.high %v2743, 0.0
        %v2767 = vcombine.high %v2750, 0.0
        %v2768 = vcombine.high %v2758, 0.0
        %v2769 = vcombine.high %v2765, 0.0
        %v2772 = vunpack.c.l.s4 1934713408
        %v2773 = vunpack.c.0.s8 %v2772
        %v2774 = vlaneseq
        %v2775 = vshrl.u32 %v2774, 7
        %v2776 = vsub.s32 %v2773, %v2775
        %v2777 = vrot.slane %v2719, %v2776
        %v2778 = vcombine.high %v2777, 0.0
        %2780 = vrot.lane.b32.xlu0 %v2766, 16
        %v2781 = vpop.permute.xlu0 %2780
        %2784 = vrot.lane.b32.xlu0 %v2750, 32
        %v2785 = vpop.permute.xlu0 %2784
        %2788 = vrot.lane.b32.xlu0 %v2767, 48
        %v2789 = vpop.permute.xlu0 %2788
        %2792 = vrot.lane.b32.xlu0 %v2758, 64
        %v2793 = vpop.permute.xlu0 %2792
        %2796 = vrot.lane.b32.xlu0 %v2768, 80
        %v2797 = vpop.permute.xlu0 %2796
        %2800 = vrot.lane.b32.xlu0 %v2765, 96
        %v2801 = vpop.permute.xlu0 %2800
        %2804 = vrot.lane.b32.xlu0 %v2769, 112
        %v2805 = vpop.permute.xlu0 %2804
        %2808 = vrot.lane.b32.xlu0 %v2778, 16
        %v2809 = vpop.permute.xlu0 %2808
        %v2811 = vsel %vm433, %v2743, %v2781
        %v2812 = vsel %vm435, %v2811, %v2785
        %v2813 = vsel %vm437, %v2812, %v2789
        %v2814 = vsel %vm439, %v2813, %v2793
        %v2815 = vsel %vm441, %v2814, %v2797
        %v2816 = vsel %vm443, %v2815, %v2801
        %v2817 = vsel %vm445, %v2816, %v2805
        %v2818 = vsel %vm433, %v2777, %v2809
        %s2819 = sadd.s32 %s965, 48
        %s2820 = scalar_lea.vmem %s334, %s2819
        %v2821 = vld [vmem:[%s2820] sm:$0xff]
        %v2822 = vcombine.high %v2821, 0.0
        %v2824 = vunpack.c.l.s4 1983009808
        %v2825 = vunpack.c.0.s8 %v2824
        %v2826 = vlaneseq
        %v2827 = vshrl.u32 %v2826, 7
        %v2828 = vsub.s32 %v2825, %v2827
        %v2829 = vrot.slane %v2821, %v2828
        %v2831 = vunpack.c.l.s4 1983009808
        %v2832 = vunpack.c.0.s8 %v2831
        %v2833 = vlaneseq
        %v2834 = vshrl.u32 %v2833, 7
        %v2835 = vsub.s32 %v2832, %v2834
        %v2836 = vrot.slane %v2822, %v2835
        %v2837 = vcombine.high %v2829, 0.0
        %v2839 = vunpack.c.l.s4 1934713408
        %v2840 = vunpack.c.0.s8 %v2839
        %v2841 = vlaneseq
        %v2842 = vshrl.u32 %v2841, 7
        %v2843 = vsub.s32 %v2840, %v2842
        %v2844 = vrot.slane %v2829, %v2843
        %v2846 = vunpack.c.l.s4 1934713408
        %v2847 = vunpack.c.0.s8 %v2846
        %v2848 = vlaneseq
        %v2849 = vshrl.u32 %v2848, 7
        %v2850 = vsub.s32 %v2847, %v2849
        %v2851 = vrot.slane %v2837, %v2850
        %v2852 = vcombine.high %v2836, 0.0
        %v2854 = vunpack.c.l.s4 1934713408
        %v2855 = vunpack.c.0.s8 %v2854
        %v2856 = vlaneseq
        %v2857 = vshrl.u32 %v2856, 7
        %v2858 = vsub.s32 %v2855, %v2857
        %v2859 = vrot.slane %v2836, %v2858
        %v2861 = vunpack.c.l.s4 1934713408
        %v2862 = vunpack.c.0.s8 %v2861
        %v2863 = vlaneseq
        %v2864 = vshrl.u32 %v2863, 7
        %v2865 = vsub.s32 %v2862, %v2864
        %v2866 = vrot.slane %v2852, %v2865
        %v2867 = vcombine.high %v2844, 0.0
        %v2868 = vcombine.high %v2851, 0.0
        %v2869 = vcombine.high %v2859, 0.0
        %v2870 = vcombine.high %v2866, 0.0
        %v2871 = vld [vmem:[%s2820 + $0x8] sm:$0x3]
        %v2873 = vunpack.c.l.s4 1934713408
        %v2874 = vunpack.c.0.s8 %v2873
        %v2875 = vlaneseq
        %v2876 = vshrl.u32 %v2875, 7
        %v2877 = vsub.s32 %v2874, %v2876
        %v2878 = vrot.slane %v2871, %v2877
        %v2879 = vcombine.high %v2878, 0.0
        %2881 = vrot.lane.b32.xlu0 %v2867, 16
        %v2882 = vpop.permute.xlu0 %2881
        %2885 = vrot.lane.b32.xlu0 %v2851, 32
        %v2886 = vpop.permute.xlu0 %2885
        %2889 = vrot.lane.b32.xlu0 %v2868, 48
        %v2890 = vpop.permute.xlu0 %2889
        %2893 = vrot.lane.b32.xlu0 %v2859, 64
        %v2894 = vpop.permute.xlu0 %2893
        %2897 = vrot.lane.b32.xlu0 %v2869, 80
        %v2898 = vpop.permute.xlu0 %2897
        %2901 = vrot.lane.b32.xlu0 %v2866, 96
        %v2902 = vpop.permute.xlu0 %2901
        %2905 = vrot.lane.b32.xlu0 %v2870, 112
        %v2906 = vpop.permute.xlu0 %2905
        %2909 = vrot.lane.b32.xlu0 %v2879, 16
        %v2910 = vpop.permute.xlu0 %2909
        %v2912 = vsel %vm433, %v2844, %v2882
        %v2913 = vsel %vm435, %v2912, %v2886
        %v2914 = vsel %vm437, %v2913, %v2890
        %v2915 = vsel %vm439, %v2914, %v2894
        %v2916 = vsel %vm441, %v2915, %v2898
        %v2917 = vsel %vm443, %v2916, %v2902
        %v2918 = vsel %vm445, %v2917, %v2906
        %v2919 = vsel %vm433, %v2878, %v2910
        %2922 = vrot.lane.b32.xlu0 %v2821, 127
        %v2923 = vpop.permute.xlu0 %2922
        %2924 = vrot.lane.b32.xlu0 %v2871, 127
        %v2925 = vpop.permute.xlu0 %2924
        %v2927 = vcombine.high %v2923, 0.0
        %v2929 = vunpack.c.l.s4 1983009808
        %v2930 = vunpack.c.0.s8 %v2929
        %v2931 = vlaneseq
        %v2932 = vshrl.u32 %v2931, 7
        %v2933 = vsub.s32 %v2930, %v2932
        %v2934 = vrot.slane %v2923, %v2933
        %v2936 = vunpack.c.l.s4 1983009808
        %v2937 = vunpack.c.0.s8 %v2936
        %v2938 = vlaneseq
        %v2939 = vshrl.u32 %v2938, 7
        %v2940 = vsub.s32 %v2937, %v2939
        %v2941 = vrot.slane %v2927, %v2940
        %v2942 = vcombine.high %v2934, 0.0
        %v2944 = vunpack.c.l.s4 1934713408
        %v2945 = vunpack.c.0.s8 %v2944
        %v2946 = vlaneseq
        %v2947 = vshrl.u32 %v2946, 7
        %v2948 = vsub.s32 %v2945, %v2947
        %v2949 = vrot.slane %v2934, %v2948
        %v2951 = vunpack.c.l.s4 1934713408
        %v2952 = vunpack.c.0.s8 %v2951
        %v2953 = vlaneseq
        %v2954 = vshrl.u32 %v2953, 7
        %v2955 = vsub.s32 %v2952, %v2954
        %v2956 = vrot.slane %v2942, %v2955
        %v2957 = vcombine.high %v2941, 0.0
        %v2959 = vunpack.c.l.s4 1934713408
        %v2960 = vunpack.c.0.s8 %v2959
        %v2961 = vlaneseq
        %v2962 = vshrl.u32 %v2961, 7
        %v2963 = vsub.s32 %v2960, %v2962
        %v2964 = vrot.slane %v2941, %v2963
        %v2966 = vunpack.c.l.s4 1934713408
        %v2967 = vunpack.c.0.s8 %v2966
        %v2968 = vlaneseq
        %v2969 = vshrl.u32 %v2968, 7
        %v2970 = vsub.s32 %v2967, %v2969
        %v2971 = vrot.slane %v2957, %v2970
        %v2972 = vcombine.high %v2949, 0.0
        %v2973 = vcombine.high %v2956, 0.0
        %v2974 = vcombine.high %v2964, 0.0
        %v2975 = vcombine.high %v2971, 0.0
        %v2978 = vunpack.c.l.s4 1934713408
        %v2979 = vunpack.c.0.s8 %v2978
        %v2980 = vlaneseq
        %v2981 = vshrl.u32 %v2980, 7
        %v2982 = vsub.s32 %v2979, %v2981
        %v2983 = vrot.slane %v2925, %v2982
        %v2984 = vcombine.high %v2983, 0.0
        %2986 = vrot.lane.b32.xlu0 %v2972, 16
        %v2987 = vpop.permute.xlu0 %2986
        %2990 = vrot.lane.b32.xlu0 %v2956, 32
        %v2991 = vpop.permute.xlu0 %2990
        %2994 = vrot.lane.b32.xlu0 %v2973, 48
        %v2995 = vpop.permute.xlu0 %2994
        %2998 = vrot.lane.b32.xlu0 %v2964, 64
        %v2999 = vpop.permute.xlu0 %2998
        %3002 = vrot.lane.b32.xlu0 %v2974, 80
        %v3003 = vpop.permute.xlu0 %3002
        %3006 = vrot.lane.b32.xlu0 %v2971, 96
        %v3007 = vpop.permute.xlu0 %3006
        %3010 = vrot.lane.b32.xlu0 %v2975, 112
        %v3011 = vpop.permute.xlu0 %3010
        %3014 = vrot.lane.b32.xlu0 %v2984, 16
        %v3015 = vpop.permute.xlu0 %3014
        %v3017 = vsel %vm433, %v2949, %v2987
        %v3018 = vsel %vm435, %v3017, %v2991
        %v3019 = vsel %vm437, %v3018, %v2995
        %v3020 = vsel %vm439, %v3019, %v2999
        %v3021 = vsel %vm441, %v3020, %v3003
        %v3022 = vsel %vm443, %v3021, %v3007
        %v3023 = vsel %vm445, %v3022, %v3011
        %v3024 = vsel %vm433, %v2983, %v3015
        %3025 = vrot.lane.b32.xlu0 %v2821, 126
        %v3026 = vpop.permute.xlu0 %3025
        %3027 = vrot.lane.b32.xlu0 %v2871, 126
        %v3028 = vpop.permute.xlu0 %3027
        %v3030 = vcombine.high %v3026, 0.0
        %v3032 = vunpack.c.l.s4 1983009808
        %v3033 = vunpack.c.0.s8 %v3032
        %v3034 = vlaneseq
        %v3035 = vshrl.u32 %v3034, 7
        %v3036 = vsub.s32 %v3033, %v3035
        %v3037 = vrot.slane %v3026, %v3036
        %v3039 = vunpack.c.l.s4 1983009808
        %v3040 = vunpack.c.0.s8 %v3039
        %v3041 = vlaneseq
        %v3042 = vshrl.u32 %v3041, 7
        %v3043 = vsub.s32 %v3040, %v3042
        %v3044 = vrot.slane %v3030, %v3043
        %v3045 = vcombine.high %v3037, 0.0
        %v3047 = vunpack.c.l.s4 1934713408
        %v3048 = vunpack.c.0.s8 %v3047
        %v3049 = vlaneseq
        %v3050 = vshrl.u32 %v3049, 7
        %v3051 = vsub.s32 %v3048, %v3050
        %v3052 = vrot.slane %v3037, %v3051
        %v3054 = vunpack.c.l.s4 1934713408
        %v3055 = vunpack.c.0.s8 %v3054
        %v3056 = vlaneseq
        %v3057 = vshrl.u32 %v3056, 7
        %v3058 = vsub.s32 %v3055, %v3057
        %v3059 = vrot.slane %v3045, %v3058
        %v3060 = vcombine.high %v3044, 0.0
        %v3062 = vunpack.c.l.s4 1934713408
        %v3063 = vunpack.c.0.s8 %v3062
        %v3064 = vlaneseq
        %v3065 = vshrl.u32 %v3064, 7
        %v3066 = vsub.s32 %v3063, %v3065
        %v3067 = vrot.slane %v3044, %v3066
        %v3069 = vunpack.c.l.s4 1934713408
        %v3070 = vunpack.c.0.s8 %v3069
        %v3071 = vlaneseq
        %v3072 = vshrl.u32 %v3071, 7
        %v3073 = vsub.s32 %v3070, %v3072
        %v3074 = vrot.slane %v3060, %v3073
        %v3075 = vcombine.high %v3052, 0.0
        %v3076 = vcombine.high %v3059, 0.0
        %v3077 = vcombine.high %v3067, 0.0
        %v3078 = vcombine.high %v3074, 0.0
        %v3081 = vunpack.c.l.s4 1934713408
        %v3082 = vunpack.c.0.s8 %v3081
        %v3083 = vlaneseq
        %v3084 = vshrl.u32 %v3083, 7
        %v3085 = vsub.s32 %v3082, %v3084
        %v3086 = vrot.slane %v3028, %v3085
        %v3087 = vcombine.high %v3086, 0.0
        %3089 = vrot.lane.b32.xlu0 %v3075, 16
        %v3090 = vpop.permute.xlu0 %3089
        %3093 = vrot.lane.b32.xlu0 %v3059, 32
        %v3094 = vpop.permute.xlu0 %3093
        %3097 = vrot.lane.b32.xlu0 %v3076, 48
        %v3098 = vpop.permute.xlu0 %3097
        %3101 = vrot.lane.b32.xlu0 %v3067, 64
        %v3102 = vpop.permute.xlu0 %3101
        %3105 = vrot.lane.b32.xlu0 %v3077, 80
        %v3106 = vpop.permute.xlu0 %3105
        %3109 = vrot.lane.b32.xlu0 %v3074, 96
        %v3110 = vpop.permute.xlu0 %3109
        %3113 = vrot.lane.b32.xlu0 %v3078, 112
        %v3114 = vpop.permute.xlu0 %3113
        %3117 = vrot.lane.b32.xlu0 %v3087, 16
        %v3118 = vpop.permute.xlu0 %3117
        %v3120 = vsel %vm433, %v3052, %v3090
        %v3121 = vsel %vm435, %v3120, %v3094
        %v3122 = vsel %vm437, %v3121, %v3098
        %v3123 = vsel %vm439, %v3122, %v3102
        %v3124 = vsel %vm441, %v3123, %v3106
        %v3125 = vsel %vm443, %v3124, %v3110
        %v3126 = vsel %vm445, %v3125, %v3114
        %v3127 = vsel %vm433, %v3086, %v3118
        %v3130 = vrot.slane %v551, 7
        %v3131 = vrot.slane %v552, 7
        %v3136 = vrot.slane %v654, 6
        %v3137 = vrot.slane %v655, 6
        %v3142 = vrot.slane %v755, 5
        %v3143 = vrot.slane %v756, 5
        %v3148 = vrot.slane %v860, 4
        %v3149 = vrot.slane %v861, 4
        %v3154 = vrot.slane %v963, 3
        %v3155 = vrot.slane %v964, 3
        %v3160 = vrot.slane %v1064, 2
        %v3161 = vrot.slane %v1065, 2
        %v3166 = vrot.slane %v1169, 1
        %v3167 = vrot.slane %v1170, 1
        %v3172 = vrot.slane %v1373, 7
        %v3173 = vrot.slane %v1374, 7
        %v3178 = vrot.slane %v1478, 6
        %v3179 = vrot.slane %v1479, 6
        %v3184 = vrot.slane %v1581, 5
        %v3185 = vrot.slane %v1582, 5
        %v3190 = vrot.slane %v1682, 4
        %v3191 = vrot.slane %v1683, 4
        %v3196 = vrot.slane %v1787, 3
        %v3197 = vrot.slane %v1788, 3
        %v3202 = vrot.slane %v1890, 2
        %v3203 = vrot.slane %v1891, 2
        %v3208 = vrot.slane %v1991, 1
        %v3209 = vrot.slane %v1992, 1
        %vm3212 = vcmask 1040384
        %v3213 = vsel %vm3212, %v446, %v3130
        %v3214 = vsel %vm3212, %v447, %v3131
        %vm3215 = vcmask 1041408
        %v3216 = vsel %vm3215, %v3213, %v3136
        %v3217 = vsel %vm3215, %v3214, %v3137
        %vm3218 = vcmask 1042432
        %v3219 = vsel %vm3218, %v3216, %v3142
        %v3220 = vsel %vm3218, %v3217, %v3143
        %vm3221 = vcmask 1043456
        %v3222 = vsel %vm3221, %v3219, %v3148
        %v3223 = vsel %vm3221, %v3220, %v3149
        %vm3224 = vcmask 1044480
        %v3225 = vsel %vm3224, %v3222, %v3154
        %v3226 = vsel %vm3224, %v3223, %v3155
        %vm3227 = vcmask 1045504
        %v3228 = vsel %vm3227, %v3225, %v3160
        %v3229 = vsel %vm3227, %v3226, %v3161
        %vm3230 = vcmask 1046528
        %v3231 = vsel %vm3230, %v3228, %v3166
        %v3232 = vsel %vm3230, %v3229, %v3167
        %v3233 = vsel %vm3212, %v1272, %v3172
        %v3234 = vsel %vm3212, %v1273, %v3173
        %v3235 = vsel %vm3215, %v3233, %v3178
        %v3236 = vsel %vm3215, %v3234, %v3179
        %v3237 = vsel %vm3218, %v3235, %v3184
        %v3238 = vsel %vm3218, %v3236, %v3185
        %v3239 = vsel %vm3221, %v3237, %v3190
        %v3240 = vsel %vm3221, %v3238, %v3191
        %v3241 = vsel %vm3224, %v3239, %v3196
        %v3242 = vsel %vm3224, %v3240, %v3197
        %v3243 = vsel %vm3227, %v3241, %v3202
        %v3244 = vsel %vm3227, %v3242, %v3203
        %v3245 = vsel %vm3230, %v3243, %v3208
        %v3246 = vsel %vm3230, %v3244, %v3209
        %v3249 = vrot.slane %v2199, 7
        %v3250 = vrot.slane %v2200, 7
        %v3255 = vrot.slane %v2300, 6
        %v3256 = vrot.slane %v2301, 6
        %v3261 = vrot.slane %v2405, 5
        %v3262 = vrot.slane %v2406, 5
        %v3267 = vrot.slane %v2508, 4
        %v3268 = vrot.slane %v2509, 4
        %v3273 = vrot.slane %v2609, 3
        %v3274 = vrot.slane %v2610, 3
        %v3279 = vrot.slane %v2714, 2
        %v3280 = vrot.slane %v2715, 2
        %v3285 = vrot.slane %v2817, 1
        %v3286 = vrot.slane %v2818, 1
        %v3291 = vrot.slane %v3023, 7
        %v3292 = vrot.slane %v3024, 7
        %v3297 = vrot.slane %v3126, 6
        %v3298 = vrot.slane %v3127, 6
        %v3301 = vsel %vm3212, %v2096, %v3249
        %v3302 = vsel %vm3212, %v2097, %v3250
        %v3303 = vsel %vm3215, %v3301, %v3255
        %v3304 = vsel %vm3215, %v3302, %v3256
        %v3305 = vsel %vm3218, %v3303, %v3261
        %v3306 = vsel %vm3218, %v3304, %v3262
        %v3307 = vsel %vm3221, %v3305, %v3267
        %v3308 = vsel %vm3221, %v3306, %v3268
        %v3309 = vsel %vm3224, %v3307, %v3273
        %v3310 = vsel %vm3224, %v3308, %v3274
        %v3311 = vsel %vm3227, %v3309, %v3279
        %v3312 = vsel %vm3227, %v3310, %v3280
        %v3313 = vsel %vm3230, %v3311, %v3285
        %v3314 = vsel %vm3230, %v3312, %v3286
        %v3315 = vsel %vm3212, %v2918, %v3291
        %v3316 = vsel %vm3212, %v2919, %v3292
        %v3317 = vsel %vm3215, %v3315, %v3297
        %v3318 = vsel %vm3215, %v3316, %v3298
        %v3319 = vpack.c.bf16 %v3245, %v3231
        %v3320 = vpack.c.bf16 %v3246, %v3232
        %v3321 = vpack.c.bf16 %v3317, %v3313
        %v3322 = vpack.c.bf16 %v3318, %v3314
        %v3323 = vld [vmem:[%s3] sm:$0xf]
        %v3324 = vld [vmem:[%s3 + $0x4] sm:$0xf]
        %v3325 = vld [vmem:[%s3 + $0x8] sm:$0xf]
        %v3326 = vld [vmem:[%s3 + $0xc] sm:$0xf]
        %v3327 = vld [vmem:[%s3 + $0x10] sm:$0xf]
        %v3328 = vld [vmem:[%s3 + $0x14] sm:$0xf]
        %v3329 = vld [vmem:[%s3 + $0x18] sm:$0xf]
        %v3330 = vld [vmem:[%s3 + $0x1c] sm:$0xf]
        %v3331 = vld [vmem:[%s3 + $0x20] sm:$0xf]
        %v3332 = vld [vmem:[%s3 + $0x24] sm:$0xf]
        %v3333 = vld [vmem:[%s3 + $0x28] sm:$0xf]
        %v3334 = vld [vmem:[%s3 + $0x2c] sm:$0xf]
        %v3335 = vld [vmem:[%s3 + $0x30] sm:$0xf]
        %v3336 = vld [vmem:[%s3 + $0x34] sm:$0xf]
        %v3337 = vld [vmem:[%s3 + $0x38] sm:$0xf]
        %v3338 = vld [vmem:[%s3 + $0x3c] sm:$0xf]
        %v3339 = vld [vmem:[%s4] sm:$0xff]
        %v3340 = vld [vmem:[%s4 + $0x8] sm:$0xff]
        %v3341 = vld [vmem:[%s4 + $0x10] sm:$0xff]
        %v3342 = vld [vmem:[%s4 + $0x18] sm:$0xff]
        %v3343 = vld [vmem:[%s4 + $0x20] sm:$0xff]
        %v3344 = vld [vmem:[%s4 + $0x28] sm:$0xff]
        %v3345 = vld [vmem:[%s4 + $0x30] sm:$0xff]
        %v3346 = vld [vmem:[%s4 + $0x38] sm:$0xff]
        %v3347 = vld [vmem:[%s4 + $0x40] sm:$0xff]
        %v3348 = vld [vmem:[%s4 + $0x48] sm:$0xff]
        %v3349 = vld [vmem:[%s4 + $0x50] sm:$0xff]
        %v3350 = vld [vmem:[%s4 + $0x58] sm:$0xff]
        %v3351 = vld [vmem:[%s4 + $0x60] sm:$0xff]
        %v3352 = vld [vmem:[%s4 + $0x68] sm:$0xff]
        %v3353 = vld [vmem:[%s4 + $0x70] sm:$0xff]
        %v3354 = vld [vmem:[%s4 + $0x78] sm:$0xff]
        %3356 = vset.pattern.permute.xlu0 0
        %3357 = vperm.xlu0 %3356, %v3339
        %v3358 = vpop.permute.xlu0 %3357
        %3361 = vset.pattern.permute.xlu0 0
        %3362 = vperm.xlu0 %3361, %v3340
        %v3363 = vpop.permute.xlu0 %3362
        %3366 = vset.pattern.permute.xlu0 0
        %3367 = vperm.xlu0 %3366, %v3341
        %v3368 = vpop.permute.xlu0 %3367
        %3371 = vset.pattern.permute.xlu0 0
        %3372 = vperm.xlu0 %3371, %v3342
        %v3373 = vpop.permute.xlu0 %3372
        %3376 = vset.pattern.permute.xlu0 0
        %3377 = vperm.xlu0 %3376, %v3343
        %v3378 = vpop.permute.xlu0 %3377
        %3381 = vset.pattern.permute.xlu0 0
        %3382 = vperm.xlu0 %3381, %v3344
        %v3383 = vpop.permute.xlu0 %3382
        %3386 = vset.pattern.permute.xlu0 0
        %3387 = vperm.xlu0 %3386, %v3345
        %v3388 = vpop.permute.xlu0 %3387
        %3391 = vset.pattern.permute.xlu0 0
        %3392 = vperm.xlu0 %3391, %v3346
        %v3393 = vpop.permute.xlu0 %3392
        %3396 = vset.pattern.permute.xlu0 0
        %3397 = vperm.xlu0 %3396, %v3347
        %v3398 = vpop.permute.xlu0 %3397
        %3401 = vset.pattern.permute.xlu0 0
        %3402 = vperm.xlu0 %3401, %v3348
        %v3403 = vpop.permute.xlu0 %3402
        %3406 = vset.pattern.permute.xlu0 0
        %3407 = vperm.xlu0 %3406, %v3349
        %v3408 = vpop.permute.xlu0 %3407
        %3411 = vset.pattern.permute.xlu0 0
        %3412 = vperm.xlu0 %3411, %v3350
        %v3413 = vpop.permute.xlu0 %3412
        %3416 = vset.pattern.permute.xlu0 0
        %3417 = vperm.xlu0 %3416, %v3351
        %v3418 = vpop.permute.xlu0 %3417
        %3421 = vset.pattern.permute.xlu0 0
        %3422 = vperm.xlu0 %3421, %v3352
        %v3423 = vpop.permute.xlu0 %3422
        %3426 = vset.pattern.permute.xlu0 0
        %3427 = vperm.xlu0 %3426, %v3353
        %v3428 = vpop.permute.xlu0 %3427
        %3431 = vset.pattern.permute.xlu0 0
        %3432 = vperm.xlu0 %3431, %v3354
        %v3433 = vpop.permute.xlu0 %3432
        %v3451 = vunpack.c.l.b16 %v3323
        %v3452 = vunpack.c.l.b16 %v3324
        %v3453 = vunpack.c.l.b16 %v3325
        %v3454 = vunpack.c.l.b16 %v3326
        %v3455 = vunpack.c.l.b16 %v3327
        %v3456 = vunpack.c.l.b16 %v3328
        %v3457 = vunpack.c.l.b16 %v3329
        %v3458 = vunpack.c.l.b16 %v3330
        %v3459 = vunpack.c.l.b16 %v3331
        %v3460 = vunpack.c.l.b16 %v3332
        %v3461 = vunpack.c.l.b16 %v3333
        %v3462 = vunpack.c.l.b16 %v3334
        %v3463 = vunpack.c.l.b16 %v3335
        %v3464 = vunpack.c.l.b16 %v3336
        %v3465 = vunpack.c.l.b16 %v3337
        %v3466 = vunpack.c.l.b16 %v3338
        %v3467 = vpack.c.b16 %v3452, %v3451
        %v3468 = vpack.c.b16 %v3454, %v3453
        %v3469 = vpack.c.b16 %v3456, %v3455
        %v3470 = vpack.c.b16 %v3458, %v3457
        %v3471 = vpack.c.b16 %v3460, %v3459
        %v3472 = vpack.c.b16 %v3462, %v3461
        %v3473 = vpack.c.b16 %v3464, %v3463
        %v3474 = vpack.c.b16 %v3466, %v3465
        %vm3475 = vcmask 220160
        %v3477 = vsel %vm3475, %v3467, 0
        %v3480 = vsel %vm3475, %v3468, 0
        %v3483 = vsel %vm3475, %v3469, 0
        %v3486 = vsel %vm3475, %v3470, 0
        %v3489 = vsel %vm3475, %v3471, 0
        %v3492 = vsel %vm3475, %v3472, 0
        %v3495 = vsel %vm3475, %v3473, 0
        %v3498 = vsel %vm3475, %v3474, 0
        %v3500 = vsel %vm3224, 4294967295, 65535
        %v3501 = vsel %vm3227, %v3500, 0
        %v3503 = vand.u32 %v3321, %v3501
        %v3506 = vand.u32 %v3322, %v3501
        %3508 = vmatprep.subr.bf16.mxu0 %v3320
        %3509 = vmatpush1.bf16.msra.mxu0 %v3319
        %3510 = vmatprep.subr.bf16.mxu0 %v3506
        %3511 = vmatpush1.bf16.msra.mxu0 %v3503
        %3512 = vmatprep.subr.bf16.mxu0 0
        %3513 = vmatpush1.bf16.msra.mxu0 0
        %3514 = vmatprep.subr.bf16.mxu0 0
        %3515 = vmatpush1.bf16.msra.mxu0 0
        %3516 = vmatprep.subr.bf16.mxu0 0
        %3517 = vmatpush1.bf16.msra.mxu0 0
        %3518 = vmatprep.subr.bf16.mxu0 0
        %3519 = vmatpush1.bf16.msra.mxu0 0
        %3520 = vmatprep.subr.bf16.mxu0 0
        %3521 = vmatpush1.bf16.msra.mxu0 0
        %3522 = vmatprep.subr.bf16.mxu0 0
        %3523 = vmatpush1.bf16.msra.mxu0 0
        %3524 = vmatprep.subr.bf16.mxu0 0
        %3525 = vmatpush1.bf16.msra.mxu0 0
        %3526 = vmatprep.subr.bf16.mxu0 0
        %3527 = vmatpush1.bf16.msra.mxu0 0
        %3528 = vmatprep.subr.bf16.mxu0 0
        %3529 = vmatpush1.bf16.msra.mxu0 0
        %3530 = vmatprep.subr.bf16.mxu0 0
        %3531 = vmatpush1.bf16.msra.mxu0 0
        %3532 = vmatprep.subr.bf16.mxu0 0
        %3533 = vmatpush1.bf16.msra.mxu0 0
        %3534 = vmatprep.subr.bf16.mxu0 0
        %3535 = vmatpush1.bf16.msra.mxu0 0
        %3536 = vmatprep.subr.bf16.mxu0 0
        %3537 = vmatpush1.bf16.msra.mxu0 0
        %3538 = vmatprep.subr.bf16.mxu0 0
        %3539 = vmatpush1.bf16.msra.mxu0 0
        %3540 = vmatprep.mubr.bf16.mxu0 0
        %3541 = vmatmul.mubr.bf16.gmra.mrb[0].mxu0 %v3477
        %v3542 = vpop.f32.mrb[0].mxu0
        %v3543 = vadd.f32 %v3358, %v3542
        %v3544 = vpop.f32.mrb[0].mxu0
        %v3545 = vadd.f32 %v3358, %v3544
        %v3546 = vpop.f32.mrb[0].mxu0
        %v3547 = vadd.f32 %v3363, %v3546
        %v3548 = vpop.f32.mrb[0].mxu0
        %v3549 = vadd.f32 %v3363, %v3548
        %3550 = vmatprep.mubr.bf16.mxu0 0
        %3551 = vmatmul.mubr.bf16.gmra.mrb[0].mxu0 %v3480
        %v3552 = vpop.f32.mrb[0].mxu0
        %v3553 = vadd.f32 %v3368, %v3552
        %v3554 = vpop.f32.mrb[0].mxu0
        %v3555 = vadd.f32 %v3368, %v3554
        %v3556 = vpop.f32.mrb[0].mxu0
        %v3557 = vadd.f32 %v3373, %v3556
        %v3558 = vpop.f32.mrb[0].mxu0
        %v3559 = vadd.f32 %v3373, %v3558
        %3560 = vmatprep.mubr.bf16.mxu0 0
        %3561 = vmatmul.mubr.bf16.gmra.mrb[0].mxu0 %v3483
        %v3562 = vpop.f32.mrb[0].mxu0
        %v3563 = vadd.f32 %v3378, %v3562
        %v3564 = vpop.f32.mrb[0].mxu0
        %v3565 = vadd.f32 %v3378, %v3564
        %v3566 = vpop.f32.mrb[0].mxu0
        %v3567 = vadd.f32 %v3383, %v3566
        %v3568 = vpop.f32.mrb[0].mxu0
        %v3569 = vadd.f32 %v3383, %v3568
        %3570 = vmatprep.mubr.bf16.mxu0 0
        %3571 = vmatmul.mubr.bf16.gmra.mrb[0].mxu0 %v3486
        %v3572 = vpop.f32.mrb[0].mxu0
        %v3573 = vadd.f32 %v3388, %v3572
        %v3574 = vpop.f32.mrb[0].mxu0
        %v3575 = vadd.f32 %v3388, %v3574
        %v3576 = vpop.f32.mrb[0].mxu0
        %v3577 = vadd.f32 %v3393, %v3576
        %v3578 = vpop.f32.mrb[0].mxu0
        %v3579 = vadd.f32 %v3393, %v3578
        %3580 = vmatprep.mubr.bf16.mxu0 0
        %3581 = vmatmul.mubr.bf16.gmra.mrb[0].mxu0 %v3489
        %v3582 = vpop.f32.mrb[0].mxu0
        %v3583 = vadd.f32 %v3398, %v3582
        %v3584 = vpop.f32.mrb[0].mxu0
        %v3585 = vadd.f32 %v3398, %v3584
        %v3586 = vpop.f32.mrb[0].mxu0
        %v3587 = vadd.f32 %v3403, %v3586
        %v3588 = vpop.f32.mrb[0].mxu0
        %v3589 = vadd.f32 %v3403, %v3588
        %3590 = vmatprep.mubr.bf16.mxu0 0
        %3591 = vmatmul.mubr.bf16.gmra.mrb[0].mxu0 %v3492
        %v3592 = vpop.f32.mrb[0].mxu0
        %v3593 = vadd.f32 %v3408, %v3592
        %v3594 = vpop.f32.mrb[0].mxu0
        %v3595 = vadd.f32 %v3408, %v3594
        %v3596 = vpop.f32.mrb[0].mxu0
        %v3597 = vadd.f32 %v3413, %v3596
        %v3598 = vpop.f32.mrb[0].mxu0
        %v3599 = vadd.f32 %v3413, %v3598
        %3600 = vmatprep.mubr.bf16.mxu0 0
        %3601 = vmatmul.mubr.bf16.gmra.mrb[0].mxu0 %v3495
        %v3602 = vpop.f32.mrb[0].mxu0
        %v3603 = vadd.f32 %v3418, %v3602
        %v3604 = vpop.f32.mrb[0].mxu0
        %v3605 = vadd.f32 %v3418, %v3604
        %v3606 = vpop.f32.mrb[0].mxu0
        %v3607 = vadd.f32 %v3423, %v3606
        %v3608 = vpop.f32.mrb[0].mxu0
        %v3609 = vadd.f32 %v3423, %v3608
        %3610 = vmatprep.mubr.bf16.mxu0 0
        %3611 = vmatmul.mubr.bf16.gmra.mrb[0].mxu0 %v3498
        %v3612 = vpop.f32.mrb[0].mxu0
        %v3613 = vadd.f32 %v3428, %v3612
        %v3614 = vpop.f32.mrb[0].mxu0
        %v3615 = vadd.f32 %v3428, %v3614
        %v3616 = vpop.f32.mrb[0].mxu0
        %v3617 = vadd.f32 %v3433, %v3616
        %v3618 = vpop.f32.mrb[0].mxu0
        %v3619 = vadd.f32 %v3433, %v3618
        %3620 = vdwg.mxu0
        %v3621 = vmax.f32 %v3543, 0.0
        %v3622 = vmax.f32 %v3545, 0.0
        %v3623 = vmax.f32 %v3547, 0.0
        %v3624 = vmax.f32 %v3549, 0.0
        %v3625 = vmax.f32 %v3553, 0.0
        %v3626 = vmax.f32 %v3555, 0.0
        %v3627 = vmax.f32 %v3557, 0.0
        %v3628 = vmax.f32 %v3559, 0.0
        %v3629 = vmax.f32 %v3563, 0.0
        %v3630 = vmax.f32 %v3565, 0.0
        %v3631 = vmax.f32 %v3567, 0.0
        %v3632 = vmax.f32 %v3569, 0.0
        %v3633 = vmax.f32 %v3573, 0.0
        %v3634 = vmax.f32 %v3575, 0.0
        %v3635 = vmax.f32 %v3577, 0.0
        %v3636 = vmax.f32 %v3579, 0.0
        %v3637 = vmax.f32 %v3583, 0.0
        %v3638 = vmax.f32 %v3585, 0.0
        %v3639 = vmax.f32 %v3587, 0.0
        %v3640 = vmax.f32 %v3589, 0.0
        %v3641 = vmax.f32 %v3593, 0.0
        %v3642 = vmax.f32 %v3595, 0.0
        %v3643 = vmax.f32 %v3597, 0.0
        %v3644 = vmax.f32 %v3599, 0.0
        %v3645 = vmax.f32 %v3603, 0.0
        %v3646 = vmax.f32 %v3605, 0.0
        %v3647 = vmax.f32 %v3607, 0.0
        %v3648 = vmax.f32 %v3609, 0.0
        %v3649 = vmax.f32 %v3613, 0.0
        %v3650 = vmax.f32 %v3615, 0.0
        %v3651 = vmax.f32 %v3617, 0.0
        %v3652 = vmax.f32 %v3619, 0.0
        %v3653 = vpack.c.bf16 %v3623, %v3621
        %v3654 = vpack.c.bf16 %v3624, %v3622
        %v3655 = vpack.c.bf16 %v3627, %v3625
        %v3656 = vpack.c.bf16 %v3628, %v3626
        %v3657 = vpack.c.bf16 %v3631, %v3629
        %v3658 = vpack.c.bf16 %v3632, %v3630
        %v3659 = vpack.c.bf16 %v3635, %v3633
        %v3660 = vpack.c.bf16 %v3636, %v3634
        %v3661 = vpack.c.bf16 %v3639, %v3637
        %v3662 = vpack.c.bf16 %v3640, %v3638
        %v3663 = vpack.c.bf16 %v3643, %v3641
        %v3664 = vpack.c.bf16 %v3644, %v3642
        %v3665 = vpack.c.bf16 %v3647, %v3645
        %v3666 = vpack.c.bf16 %v3648, %v3646
        %v3667 = vpack.c.bf16 %v3651, %v3649
        %v3668 = vpack.c.bf16 %v3652, %v3650
        %3669 = vxpose.xlu0.c.b16.start [1/8] %v3653, 128
        %3670 = vxpose.xlu0.c.b16.cont [2/8] %v3655, 128
        %3671 = vxpose.xlu0.c.b16.cont [3/8] %v3657, 128
        %3672 = vxpose.xlu0.c.b16.cont [4/8] %v3659, 128
        %3673 = vxpose.xlu0.c.b16.cont [5/8] %v3661, 128
        %3674 = vxpose.xlu0.c.b16.cont [6/8] %v3663, 128
        %3675 = vxpose.xlu0.c.b16.cont [7/8] %v3665, 128
        %3676 = vxpose.xlu0.c.b16.end [8/8] %v3667, 128
        %v3677 = vpop.trf.xlu0
        %v3678 = vpop.trf.xlu0
        %v3679 = vpop.trf.xlu0
        %v3680 = vpop.trf.xlu0
        %v3681 = vpop.trf.xlu0
        %v3682 = vpop.trf.xlu0
        %v3683 = vpop.trf.xlu0
        %v3684 = vpop.trf.xlu0
        %3685 = vxpose.xlu0.c.b16.start [1/8] %v3654, 128
        %3686 = vxpose.xlu0.c.b16.cont [2/8] %v3656, 128
        %3687 = vxpose.xlu0.c.b16.cont [3/8] %v3658, 128
        %3688 = vxpose.xlu0.c.b16.cont [4/8] %v3660, 128
        %3689 = vxpose.xlu0.c.b16.cont [5/8] %v3662, 128
        %3690 = vxpose.xlu0.c.b16.cont [6/8] %v3664, 128
        %3691 = vxpose.xlu0.c.b16.cont [7/8] %v3666, 128
        %3692 = vxpose.xlu0.c.b16.end [8/8] %v3668, 128
        %v3693 = vpop.trf.xlu0
        %v3694 = vpop.trf.xlu0
        %v3695 = vpop.trf.xlu0
        %v3696 = vpop.trf.xlu0
        %v3697 = vpop.trf.xlu0
        %v3698 = vpop.trf.xlu0
        %v3699 = vpop.trf.xlu0
        %v3700 = vpop.trf.xlu0
        %v3711 = vunpack.c.l.b16 %v3677
        %v3712 = vunpack.c.h.b16 %v3677
        %v3713 = vunpack.c.l.b16 %v3678
        %v3714 = vunpack.c.h.b16 %v3678
        %v3715 = vunpack.c.l.b16 %v3679
        %v3716 = vunpack.c.h.b16 %v3679
        %v3717 = vunpack.c.l.b16 %v3680
        %v3718 = vunpack.c.h.b16 %v3680
        %v3719 = vunpack.c.l.b16 %v3681
        %v3720 = vunpack.c.h.b16 %v3681
        %v3721 = vunpack.c.l.b16 %v3682
        %v3722 = vunpack.c.h.b16 %v3682
        %v3723 = vunpack.c.l.b16 %v3683
        %v3724 = vunpack.c.h.b16 %v3683
        %v3725 = vunpack.c.l.b16 %v3684
        %v3726 = vunpack.c.h.b16 %v3684
        %v3727 = vunpack.c.l.b16 %v3693
        %v3728 = vunpack.c.h.b16 %v3693
        %v3729 = vunpack.c.l.b16 %v3694
        %v3730 = vunpack.c.h.b16 %v3694
        %v3731 = vpack.c.b16 %v3711, %v3711
        %v3732 = vpack.c.b16 %v3712, %v3712
        %v3733 = vpack.c.b16 %v3713, %v3713
        %v3734 = vpack.c.b16 %v3714, %v3714
        %v3735 = vpack.c.b16 %v3715, %v3715
        %v3736 = vpack.c.b16 %v3716, %v3716
        %v3737 = vpack.c.b16 %v3717, %v3717
        %v3738 = vpack.c.b16 %v3718, %v3718
        %v3739 = vpack.c.b16 %v3719, %v3719
        %v3740 = vpack.c.b16 %v3720, %v3720
        %v3741 = vpack.c.b16 %v3721, %v3721
        %v3742 = vpack.c.b16 %v3722, %v3722
        %v3743 = vpack.c.b16 %v3723, %v3723
        %v3744 = vpack.c.b16 %v3724, %v3724
        %v3745 = vpack.c.b16 %v3725, %v3725
        %v3746 = vpack.c.b16 %v3726, %v3726
        %v3747 = vpack.c.b16 %v3727, %v3727
        %v3748 = vpack.c.b16 %v3728, %v3728
        %v3749 = vpack.c.b16 %v3729, %v3729
        %v3750 = vpack.c.b16 %v3730, %v3730
        %vm3751 = vsmask.f32 256
        %vm3752 = vsmask.f32 4368
        %vm3753 = vmor %vm3751, %vm3752
        %v3755 = vshrl.u32 %v3731, 16
        %v3757 = vrot.slane %v3755, 7
        %v3758 = vshll.u32 %v3731, 16
        %v3760 = vor.u32 %v3757, %v3758
        %v3761 = vrot.slane %v3757, 4
        %v3763 = vshrl.u32 %v3732, 16
        %v3765 = vrot.slane %v3763, 7
        %v3766 = vshll.u32 %v3732, 16
        %v3768 = vor.u32 %v3765, %v3766
        %v3769 = vsel %vm3753, %v3761, %v3768
        %v3770 = vrot.slane %v3765, 4
        %v3772 = vshrl.u32 %v3733, 16
        %v3774 = vrot.slane %v3772, 7
        %v3775 = vshll.u32 %v3733, 16
        %v3777 = vor.u32 %v3774, %v3775
        %v3778 = vrot.slane %v3774, 4
        %v3780 = vshrl.u32 %v3734, 16
        %v3782 = vrot.slane %v3780, 7
        %v3783 = vshll.u32 %v3734, 16
        %v3785 = vor.u32 %v3782, %v3783
        %v3786 = vsel %vm3753, %v3778, %v3785
        %v3787 = vrot.slane %v3782, 4
        %v3789 = vshrl.u32 %v3735, 16
        %v3791 = vrot.slane %v3789, 7
        %v3792 = vshll.u32 %v3735, 16
        %v3794 = vor.u32 %v3791, %v3792
        %v3795 = vrot.slane %v3791, 4
        %v3797 = vshrl.u32 %v3736, 16
        %v3799 = vrot.slane %v3797, 7
        %v3800 = vshll.u32 %v3736, 16
        %v3802 = vor.u32 %v3799, %v3800
        %v3803 = vsel %vm3753, %v3795, %v3802
        %v3804 = vrot.slane %v3799, 4
        %v3806 = vshrl.u32 %v3737, 16
        %v3808 = vrot.slane %v3806, 7
        %v3809 = vshll.u32 %v3737, 16
        %v3811 = vor.u32 %v3808, %v3809
        %v3812 = vrot.slane %v3808, 4
        %v3814 = vshrl.u32 %v3738, 16
        %v3816 = vrot.slane %v3814, 7
        %v3817 = vshll.u32 %v3738, 16
        %v3819 = vor.u32 %v3816, %v3817
        %v3820 = vsel %vm3753, %v3812, %v3819
        %v3821 = vrot.slane %v3816, 4
        %v3823 = vshrl.u32 %v3739, 16
        %v3825 = vrot.slane %v3823, 7
        %v3826 = vshll.u32 %v3739, 16
        %v3828 = vor.u32 %v3825, %v3826
        %v3829 = vrot.slane %v3825, 4
        %v3831 = vshrl.u32 %v3740, 16
        %v3833 = vrot.slane %v3831, 7
        %v3834 = vshll.u32 %v3740, 16
        %v3836 = vor.u32 %v3833, %v3834
        %v3837 = vsel %vm3753, %v3829, %v3836
        %v3838 = vrot.slane %v3833, 4
        %v3840 = vshrl.u32 %v3741, 16
        %v3842 = vrot.slane %v3840, 7
        %v3843 = vshll.u32 %v3741, 16
        %v3845 = vor.u32 %v3842, %v3843
        %v3846 = vrot.slane %v3842, 4
        %v3848 = vshrl.u32 %v3742, 16
        %v3850 = vrot.slane %v3848, 7
        %v3851 = vshll.u32 %v3742, 16
        %v3853 = vor.u32 %v3850, %v3851
        %v3854 = vsel %vm3753, %v3846, %v3853
        %v3855 = vrot.slane %v3850, 4
        %v3857 = vshrl.u32 %v3743, 16
        %v3859 = vrot.slane %v3857, 7
        %v3860 = vshll.u32 %v3743, 16
        %v3862 = vor.u32 %v3859, %v3860
        %v3863 = vrot.slane %v3859, 4
        %v3865 = vshrl.u32 %v3744, 16
        %v3867 = vrot.slane %v3865, 7
        %v3868 = vshll.u32 %v3744, 16
        %v3870 = vor.u32 %v3867, %v3868
        %v3871 = vsel %vm3753, %v3863, %v3870
        %v3872 = vrot.slane %v3867, 4
        %v3874 = vshrl.u32 %v3745, 16
        %v3876 = vrot.slane %v3874, 7
        %v3877 = vshll.u32 %v3745, 16
        %v3879 = vor.u32 %v3876, %v3877
        %v3880 = vrot.slane %v3876, 4
        %v3882 = vshrl.u32 %v3746, 16
        %v3884 = vrot.slane %v3882, 7
        %v3885 = vshll.u32 %v3746, 16
        %v3887 = vor.u32 %v3884, %v3885
        %v3888 = vsel %vm3753, %v3880, %v3887
        %v3889 = vrot.slane %v3884, 4
        %v3891 = vshrl.u32 %v3747, 16
        %v3893 = vrot.slane %v3891, 7
        %v3894 = vshll.u32 %v3747, 16
        %v3896 = vor.u32 %v3893, %v3894
        %v3897 = vrot.slane %v3893, 4
        %v3899 = vshrl.u32 %v3748, 16
        %v3901 = vrot.slane %v3899, 7
        %v3902 = vshll.u32 %v3748, 16
        %v3904 = vor.u32 %v3901, %v3902
        %v3905 = vsel %vm3753, %v3897, %v3904
        %v3906 = vrot.slane %v3901, 4
        %v3908 = vshrl.u32 %v3749, 16
        %v3910 = vrot.slane %v3908, 7
        %v3911 = vshll.u32 %v3749, 16
        %v3913 = vor.u32 %v3910, %v3911
        %v3914 = vrot.slane %v3910, 4
        %v3916 = vshrl.u32 %v3750, 16
        %v3918 = vrot.slane %v3916, 7
        %v3919 = vshll.u32 %v3750, 16
        %v3921 = vor.u32 %v3918, %v3919
        %v3922 = vsel %vm3753, %v3914, %v3921
        %v3923 = vrot.slane %v3918, 4
        %vm3954 = vcmask 1043456
        %vm3955 = vsmask.f32 7938
        %vm3956 = vmand %vm3954, %vm3955
        %v3957 = vld [vmem:[#allocation2] sm:$0xf]
        %v3958 = vsel %vm3956, %v3760, %v3957
        %3959 = vst [vmem:[#allocation2] sm:$0xf] %v3958
        %3960 = vst [vmem:[#allocation2 + $0x4] sm:$0xf] %v3769
        %vm3961 = vcmask 1040384
        %vm3962 = vmand %vm3961, %vm3751
        %v3963 = vld [vmem:[#allocation2 + $0x8] sm:$0x1]
        %v3964 = vsel %vm3962, %v3770, %v3963
        %3965 = vst [vmem:[#allocation2 + $0x8] sm:$0x1] %v3964
        %v3966 = vld [vmem:[#allocation2 + $0xc] sm:$0xf]
        %v3967 = vsel %vm3956, %v3777, %v3966
        %3968 = vst [vmem:[#allocation2 + $0xc] sm:$0xf] %v3967
        %3969 = vst [vmem:[#allocation2 + $0x10] sm:$0xf] %v3786
        %v3970 = vld [vmem:[#allocation2 + $0x14] sm:$0x1]
        %v3971 = vsel %vm3962, %v3787, %v3970
        %3972 = vst [vmem:[#allocation2 + $0x14] sm:$0x1] %v3971
        %v3973 = vld [vmem:[#allocation2 + $0x18] sm:$0xf]
        %v3974 = vsel %vm3956, %v3794, %v3973
        %3975 = vst [vmem:[#allocation2 + $0x18] sm:$0xf] %v3974
        %3976 = vst [vmem:[#allocation2 + $0x1c] sm:$0xf] %v3803
        %v3977 = vld [vmem:[#allocation2 + $0x20] sm:$0x1]
        %v3978 = vsel %vm3962, %v3804, %v3977
        %3979 = vst [vmem:[#allocation2 + $0x20] sm:$0x1] %v3978
        %v3980 = vld [vmem:[#allocation2 + $0x24] sm:$0xf]
        %v3981 = vsel %vm3956, %v3811, %v3980
        %3982 = vst [vmem:[#allocation2 + $0x24] sm:$0xf] %v3981
        %3983 = vst [vmem:[#allocation2 + $0x28] sm:$0xf] %v3820
        %v3984 = vld [vmem:[#allocation2 + $0x2c] sm:$0x1]
        %v3985 = vsel %vm3962, %v3821, %v3984
        %3986 = vst [vmem:[#allocation2 + $0x2c] sm:$0x1] %v3985
        %v3987 = vld [vmem:[#allocation2 + $0x30] sm:$0xf]
        %v3988 = vsel %vm3956, %v3828, %v3987
        %3989 = vst [vmem:[#allocation2 + $0x30] sm:$0xf] %v3988
        %3990 = vst [vmem:[#allocation2 + $0x34] sm:$0xf] %v3837
        %v3991 = vld [vmem:[#allocation2 + $0x38] sm:$0x1]
        %v3992 = vsel %vm3962, %v3838, %v3991
        %3993 = vst [vmem:[#allocation2 + $0x38] sm:$0x1] %v3992
        %v3994 = vld [vmem:[#allocation2 + $0x3c] sm:$0xf]
        %v3995 = vsel %vm3956, %v3845, %v3994
        %3996 = vst [vmem:[#allocation2 + $0x3c] sm:$0xf] %v3995
        %3997 = vst [vmem:[#allocation2 + $0x40] sm:$0xf] %v3854
        %v3998 = vld [vmem:[#allocation2 + $0x44] sm:$0x1]
        %v3999 = vsel %vm3962, %v3855, %v3998
        %4000 = vst [vmem:[#allocation2 + $0x44] sm:$0x1] %v3999
        %v4001 = vld [vmem:[#allocation2 + $0x48] sm:$0xf]
        %v4002 = vsel %vm3956, %v3862, %v4001
        %4003 = vst [vmem:[#allocation2 + $0x48] sm:$0xf] %v4002
        %4004 = vst [vmem:[#allocation2 + $0x4c] sm:$0xf] %v3871
        %v4005 = vld [vmem:[#allocation2 + $0x50] sm:$0x1]
        %v4006 = vsel %vm3962, %v3872, %v4005
        %4007 = vst [vmem:[#allocation2 + $0x50] sm:$0x1] %v4006
        %v4008 = vld [vmem:[#allocation2 + $0x54] sm:$0xf]
        %v4009 = vsel %vm3956, %v3879, %v4008
        %4010 = vst [vmem:[#allocation2 + $0x54] sm:$0xf] %v4009
        %4011 = vst [vmem:[#allocation2 + $0x58] sm:$0xf] %v3888
        %v4012 = vld [vmem:[#allocation2 + $0x5c] sm:$0x1]
        %v4013 = vsel %vm3962, %v3889, %v4012
        %4014 = vst [vmem:[#allocation2 + $0x5c] sm:$0x1] %v4013
        %v4015 = vld [vmem:[#allocation2 + $0x60] sm:$0xf]
        %v4016 = vsel %vm3956, %v3896, %v4015
        %4017 = vst [vmem:[#allocation2 + $0x60] sm:$0xf] %v4016
        %4018 = vst [vmem:[#allocation2 + $0x64] sm:$0xf] %v3905
        %v4019 = vld [vmem:[#allocation2 + $0x68] sm:$0x1]
        %v4020 = vsel %vm3962, %v3906, %v4019
        %4021 = vst [vmem:[#allocation2 + $0x68] sm:$0x1] %v4020
        %v4022 = vld [vmem:[#allocation2 + $0x6c] sm:$0xf]
        %v4023 = vsel %vm3956, %v3913, %v4022
        %4024 = vst [vmem:[#allocation2 + $0x6c] sm:$0xf] %v4023
        %4025 = vst [vmem:[#allocation2 + $0x70] sm:$0xf] %v3922
        %v4026 = vld [vmem:[#allocation2 + $0x74] sm:$0x1]
        %v4027 = vsel %vm3962, %v3923, %v4026
        %4028 = vst [vmem:[#allocation2 + $0x74] sm:$0x1] %v4027
        %v4029 = vld [vmem:[#allocation2] sm:$0x1]
        %v4030 = vsel %vm3962, 0, %v4029
        %4031 = vst [vmem:[#allocation2] sm:$0x1] %v4030
        %v4032 = vld [vmem:[#allocation2 + $0xc] sm:$0x1]
        %v4033 = vsel %vm3962, 0, %v4032
        %4034 = vst [vmem:[#allocation2 + $0xc] sm:$0x1] %v4033
        %v4035 = vld [vmem:[#allocation2 + $0x18] sm:$0x1]
        %v4036 = vsel %vm3962, 0, %v4035
        %4037 = vst [vmem:[#allocation2 + $0x18] sm:$0x1] %v4036
        %v4038 = vld [vmem:[#allocation2 + $0x24] sm:$0x1]
        %v4039 = vsel %vm3962, 0, %v4038
        %4040 = vst [vmem:[#allocation2 + $0x24] sm:$0x1] %v4039
        %v4041 = vld [vmem:[#allocation2 + $0x30] sm:$0x1]
        %v4042 = vsel %vm3962, 0, %v4041
        %4043 = vst [vmem:[#allocation2 + $0x30] sm:$0x1] %v4042
        %v4044 = vld [vmem:[#allocation2 + $0x3c] sm:$0x1]
        %v4045 = vsel %vm3962, 0, %v4044
        %4046 = vst [vmem:[#allocation2 + $0x3c] sm:$0x1] %v4045
        %v4047 = vld [vmem:[#allocation2 + $0x48] sm:$0x1]
        %v4048 = vsel %vm3962, 0, %v4047
        %4049 = vst [vmem:[#allocation2 + $0x48] sm:$0x1] %v4048
        %v4050 = vld [vmem:[#allocation2 + $0x54] sm:$0x1]
        %v4051 = vsel %vm3962, 0, %v4050
        %4052 = vst [vmem:[#allocation2 + $0x54] sm:$0x1] %v4051
        %v4053 = vld [vmem:[#allocation2 + $0x60] sm:$0x1]
        %v4054 = vsel %vm3962, 0, %v4053
        %4055 = vst [vmem:[#allocation2 + $0x60] sm:$0x1] %v4054
        %v4056 = vld [vmem:[#allocation2 + $0x6c] sm:$0x1]
        %v4057 = vsel %vm3962, 0, %v4056
        %4058 = vst [vmem:[#allocation2 + $0x6c] sm:$0x1] %v4057
        %vm4059 = vmand %vm3961, %vm3955
        %v4060 = vld [vmem:[#allocation2 + $0x8] sm:$0x1]
        %v4061 = vsel %vm4059, 0, %v4060
        %4062 = vst [vmem:[#allocation2 + $0x8] sm:$0x1] %v4061
        %v4063 = vld [vmem:[#allocation2 + $0x14] sm:$0x1]
        %v4064 = vsel %vm4059, 0, %v4063
        %4065 = vst [vmem:[#allocation2 + $0x14] sm:$0x1] %v4064
        %v4066 = vld [vmem:[#allocation2 + $0x20] sm:$0x1]
        %v4067 = vsel %vm4059, 0, %v4066
        %4068 = vst [vmem:[#allocation2 + $0x20] sm:$0x1] %v4067
        %v4069 = vld [vmem:[#allocation2 + $0x2c] sm:$0x1]
        %v4070 = vsel %vm4059, 0, %v4069
        %4071 = vst [vmem:[#allocation2 + $0x2c] sm:$0x1] %v4070
        %v4072 = vld [vmem:[#allocation2 + $0x38] sm:$0x1]
        %v4073 = vsel %vm4059, 0, %v4072
        %4074 = vst [vmem:[#allocation2 + $0x38] sm:$0x1] %v4073
        %v4075 = vld [vmem:[#allocation2 + $0x44] sm:$0x1]
        %v4076 = vsel %vm4059, 0, %v4075
        %4077 = vst [vmem:[#allocation2 + $0x44] sm:$0x1] %v4076
        %v4078 = vld [vmem:[#allocation2 + $0x50] sm:$0x1]
        %v4079 = vsel %vm4059, 0, %v4078
        %4080 = vst [vmem:[#allocation2 + $0x50] sm:$0x1] %v4079
        %v4081 = vld [vmem:[#allocation2 + $0x5c] sm:$0x1]
        %v4082 = vsel %vm4059, 0, %v4081
        %4083 = vst [vmem:[#allocation2 + $0x5c] sm:$0x1] %v4082
        %v4084 = vld [vmem:[#allocation2 + $0x68] sm:$0x1]
        %v4085 = vsel %vm4059, 0, %v4084
        %4086 = vst [vmem:[#allocation2 + $0x68] sm:$0x1] %v4085
        %v4087 = vld [vmem:[#allocation2 + $0x74] sm:$0x1]
        %v4088 = vsel %vm4059, 0, %v4087
        %4089 = vst [vmem:[#allocation2 + $0x74] sm:$0x1] %v4088
        %p4090 = scmp.eq.s32.totalorder %s26, 0
        // Predicated region
        $region49: #{tpu_custom_call.1} parent=47 // pred_check
          %p4091 = pneg %p4090
        $region50: #{tpu_custom_call.1} parent=47 // pred_check_branch
          %4093 = sbr.rel (%p4091) target = $region52
        $region51: #{tpu_custom_call.1} parent=47 // pred_region
          %4094 = vst [vmem:[#allocation2] sm:$0xf] 0
          %4095 = vst [vmem:[#allocation2 + $0x4] sm:$0xf] 0
          %4096 = vst [vmem:[#allocation2 + $0x8] sm:$0x1] 0
        $region52: #{tpu_custom_call.1} parent=47 // pred_fallthru
          _
        %p4097 = scmp.eq.s32.totalorder %s26, 1
        // Predicated region
        $region53: #{tpu_custom_call.1} parent=47 // pred_check
          %p4098 = pneg %p4097
        $region54: #{tpu_custom_call.1} parent=47 // pred_check_branch
          %4100 = sbr.rel (%p4098) target = $region56
        $region55: #{tpu_custom_call.1} parent=47 // pred_region
          %s4101 = scalar_lea.vmem [#allocation2], 108
          %4102 = vst [vmem:[%s4101] sm:$0xf] 0
          %4103 = vst [vmem:[%s4101 + $0x4] sm:$0xf] 0
          %4104 = vst [vmem:[%s4101 + $0x8] sm:$0x1] 0
        $region56: #{tpu_custom_call.1} parent=47 // pred_fallthru
          _
        %v4105 = vld [vmem:[#allocation2] sm:$0xf]
        %v4106 = vld [vmem:[#allocation2 + $0x4] sm:$0xf]
        %v4107 = vld [vmem:[#allocation2 + $0xc] sm:$0xf]
        %v4108 = vld [vmem:[#allocation2 + $0x10] sm:$0xf]
        %v4109 = vld [vmem:[#allocation2 + $0x18] sm:$0xf]
        %v4110 = vld [vmem:[#allocation2 + $0x1c] sm:$0xf]
        %v4111 = vld [vmem:[#allocation2 + $0x24] sm:$0xf]
        %v4112 = vld [vmem:[#allocation2 + $0x28] sm:$0xf]
        %v4113 = vld [vmem:[#allocation2 + $0x30] sm:$0xf]
        %v4114 = vld [vmem:[#allocation2 + $0x34] sm:$0xf]
        %v4115 = vld [vmem:[#allocation2 + $0x3c] sm:$0xf]
        %v4116 = vld [vmem:[#allocation2 + $0x40] sm:$0xf]
        %v4117 = vld [vmem:[#allocation2 + $0x48] sm:$0xf]
        %v4118 = vld [vmem:[#allocation2 + $0x4c] sm:$0xf]
        %v4119 = vld [vmem:[#allocation2 + $0x54] sm:$0xf]
        %v4120 = vld [vmem:[#allocation2 + $0x58] sm:$0xf]
        %v4121 = vld [vmem:[#allocation2 + $0x60] sm:$0xf]
        %v4122 = vld [vmem:[#allocation2 + $0x64] sm:$0xf]
        %v4123 = vld [vmem:[#allocation2 + $0x6c] sm:$0xf]
        %v4124 = vld [vmem:[#allocation2 + $0x70] sm:$0xf]
        %v4125 = vld [vmem:[#allocation2 + $0x8] sm:$0x1]
        %v4126 = vld [vmem:[#allocation2 + $0x14] sm:$0x1]
        %v4127 = vld [vmem:[#allocation2 + $0x20] sm:$0x1]
        %v4128 = vld [vmem:[#allocation2 + $0x2c] sm:$0x1]
        %v4129 = vld [vmem:[#allocation2 + $0x38] sm:$0x1]
        %v4130 = vld [vmem:[#allocation2 + $0x44] sm:$0x1]
        %v4131 = vld [vmem:[#allocation2 + $0x50] sm:$0x1]
        %v4132 = vld [vmem:[#allocation2 + $0x5c] sm:$0x1]
        %v4133 = vld [vmem:[#allocation2 + $0x68] sm:$0x1]
        %v4134 = vld [vmem:[#allocation2 + $0x74] sm:$0x1]
        %vm4135 = vsmask.f32 3328
        %vm4136 = vsmask.f32 7440
        %vm4137 = vmor %vm4135, %vm4136
        %v4139 = vshrl.u32 %v4105, 16
        %v4141 = vrot.slane %v4139, 4
        %v4142 = vshll.u32 %v4105, 16
        %v4144 = vrot.slane %v4142, 5
        %v4145 = vor.u32 %v4141, %v4144
        %v4146 = vrot.slane %v4145, 4
        %v4148 = vshll.u32 %v4106, 16
        %v4150 = vrot.slane %v4148, 5
        %v4151 = vsel %vm4137, %v4146, %v4150
        %v4152 = vshrl.u32 %v4106, 16
        %v4154 = vrot.slane %v4152, 4
        %v4155 = vor.u32 %v4154, %v4150
        %v4156 = vrot.slane %v4155, 4
        %v4158 = vshll.u32 %v4125, 16
        %v4160 = vrot.slane %v4158, 5
        %v4161 = vsel %vm4137, %v4156, %v4160
        %v4163 = vshrl.u32 %v4107, 16
        %v4165 = vrot.slane %v4163, 4
        %v4166 = vshll.u32 %v4107, 16
        %v4168 = vrot.slane %v4166, 5
        %v4169 = vor.u32 %v4165, %v4168
        %v4170 = vrot.slane %v4169, 4
        %v4172 = vshll.u32 %v4108, 16
        %v4174 = vrot.slane %v4172, 5
        %v4175 = vsel %vm4137, %v4170, %v4174
        %v4176 = vshrl.u32 %v4108, 16
        %v4178 = vrot.slane %v4176, 4
        %v4179 = vor.u32 %v4178, %v4174
        %v4180 = vrot.slane %v4179, 4
        %v4182 = vshll.u32 %v4126, 16
        %v4184 = vrot.slane %v4182, 5
        %v4185 = vsel %vm4137, %v4180, %v4184
        %v4187 = vshrl.u32 %v4109, 16
        %v4189 = vrot.slane %v4187, 4
        %v4190 = vshll.u32 %v4109, 16
        %v4192 = vrot.slane %v4190, 5
        %v4193 = vor.u32 %v4189, %v4192
        %v4194 = vrot.slane %v4193, 4
        %v4196 = vshll.u32 %v4110, 16
        %v4198 = vrot.slane %v4196, 5
        %v4199 = vsel %vm4137, %v4194, %v4198
        %v4200 = vshrl.u32 %v4110, 16
        %v4202 = vrot.slane %v4200, 4
        %v4203 = vor.u32 %v4202, %v4198
        %v4204 = vrot.slane %v4203, 4
        %v4206 = vshll.u32 %v4127, 16
        %v4208 = vrot.slane %v4206, 5
        %v4209 = vsel %vm4137, %v4204, %v4208
        %v4211 = vshrl.u32 %v4111, 16
        %v4213 = vrot.slane %v4211, 4
        %v4214 = vshll.u32 %v4111, 16
        %v4216 = vrot.slane %v4214, 5
        %v4217 = vor.u32 %v4213, %v4216
        %v4218 = vrot.slane %v4217, 4
        %v4220 = vshll.u32 %v4112, 16
        %v4222 = vrot.slane %v4220, 5
        %v4223 = vsel %vm4137, %v4218, %v4222
        %v4224 = vshrl.u32 %v4112, 16
        %v4226 = vrot.slane %v4224, 4
        %v4227 = vor.u32 %v4226, %v4222
        %v4228 = vrot.slane %v4227, 4
        %v4230 = vshll.u32 %v4128, 16
        %v4232 = vrot.slane %v4230, 5
        %v4233 = vsel %vm4137, %v4228, %v4232
        %v4235 = vshrl.u32 %v4113, 16
        %v4237 = vrot.slane %v4235, 4
        %v4238 = vshll.u32 %v4113, 16
        %v4240 = vrot.slane %v4238, 5
        %v4241 = vor.u32 %v4237, %v4240
        %v4242 = vrot.slane %v4241, 4
        %v4244 = vshll.u32 %v4114, 16
        %v4246 = vrot.slane %v4244, 5
        %v4247 = vsel %vm4137, %v4242, %v4246
        %v4248 = vshrl.u32 %v4114, 16
        %v4250 = vrot.slane %v4248, 4
        %v4251 = vor.u32 %v4250, %v4246
        %v4252 = vrot.slane %v4251, 4
        %v4254 = vshll.u32 %v4129, 16
        %v4256 = vrot.slane %v4254, 5
        %v4257 = vsel %vm4137, %v4252, %v4256
        %v4259 = vshrl.u32 %v4115, 16
        %v4261 = vrot.slane %v4259, 4
        %v4262 = vshll.u32 %v4115, 16
        %v4264 = vrot.slane %v4262, 5
        %v4265 = vor.u32 %v4261, %v4264
        %v4266 = vrot.slane %v4265, 4
        %v4268 = vshll.u32 %v4116, 16
        %v4270 = vrot.slane %v4268, 5
        %v4271 = vsel %vm4137, %v4266, %v4270
        %v4272 = vshrl.u32 %v4116, 16
        %v4274 = vrot.slane %v4272, 4
        %v4275 = vor.u32 %v4274, %v4270
        %v4276 = vrot.slane %v4275, 4
        %v4278 = vshll.u32 %v4130, 16
        %v4280 = vrot.slane %v4278, 5
        %v4281 = vsel %vm4137, %v4276, %v4280
        %v4283 = vshrl.u32 %v4117, 16
        %v4285 = vrot.slane %v4283, 4
        %v4286 = vshll.u32 %v4117, 16
        %v4288 = vrot.slane %v4286, 5
        %v4289 = vor.u32 %v4285, %v4288
        %v4290 = vrot.slane %v4289, 4
        %v4292 = vshll.u32 %v4118, 16
        %v4294 = vrot.slane %v4292, 5
        %v4295 = vsel %vm4137, %v4290, %v4294
        %v4296 = vshrl.u32 %v4118, 16
        %v4298 = vrot.slane %v4296, 4
        %v4299 = vor.u32 %v4298, %v4294
        %v4300 = vrot.slane %v4299, 4
        %v4302 = vshll.u32 %v4131, 16
        %v4304 = vrot.slane %v4302, 5
        %v4305 = vsel %vm4137, %v4300, %v4304
        %v4307 = vshrl.u32 %v4119, 16
        %v4309 = vrot.slane %v4307, 4
        %v4310 = vshll.u32 %v4119, 16
        %v4312 = vrot.slane %v4310, 5
        %v4313 = vor.u32 %v4309, %v4312
        %v4314 = vrot.slane %v4313, 4
        %v4316 = vshll.u32 %v4120, 16
        %v4318 = vrot.slane %v4316, 5
        %v4319 = vsel %vm4137, %v4314, %v4318
        %v4320 = vshrl.u32 %v4120, 16
        %v4322 = vrot.slane %v4320, 4
        %v4323 = vor.u32 %v4322, %v4318
        %v4324 = vrot.slane %v4323, 4
        %v4326 = vshll.u32 %v4132, 16
        %v4328 = vrot.slane %v4326, 5
        %v4329 = vsel %vm4137, %v4324, %v4328
        %v4331 = vshrl.u32 %v4121, 16
        %v4333 = vrot.slane %v4331, 4
        %v4334 = vshll.u32 %v4121, 16
        %v4336 = vrot.slane %v4334, 5
        %v4337 = vor.u32 %v4333, %v4336
        %v4338 = vrot.slane %v4337, 4
        %v4340 = vshll.u32 %v4122, 16
        %v4342 = vrot.slane %v4340, 5
        %v4343 = vsel %vm4137, %v4338, %v4342
        %v4344 = vshrl.u32 %v4122, 16
        %v4346 = vrot.slane %v4344, 4
        %v4347 = vor.u32 %v4346, %v4342
        %v4348 = vrot.slane %v4347, 4
        %v4350 = vshll.u32 %v4133, 16
        %v4352 = vrot.slane %v4350, 5
        %v4353 = vsel %vm4137, %v4348, %v4352
        %v4355 = vshrl.u32 %v4123, 16
        %v4357 = vrot.slane %v4355, 4
        %v4358 = vshll.u32 %v4123, 16
        %v4360 = vrot.slane %v4358, 5
        %v4361 = vor.u32 %v4357, %v4360
        %v4362 = vrot.slane %v4361, 4
        %v4364 = vshll.u32 %v4124, 16
        %v4366 = vrot.slane %v4364, 5
        %v4367 = vsel %vm4137, %v4362, %v4366
        %v4368 = vshrl.u32 %v4124, 16
        %v4370 = vrot.slane %v4368, 4
        %v4371 = vor.u32 %v4370, %v4366
        %v4372 = vrot.slane %v4371, 4
        %v4374 = vshll.u32 %v4134, 16
        %v4376 = vrot.slane %v4374, 5
        %v4377 = vsel %vm4137, %v4372, %v4376
        %v4378 = vld [vmem:[#allocation2] sm:$0xe]
        %v4379 = vld [vmem:[#allocation2 + $0xc] sm:$0xe]
        %v4380 = vld [vmem:[#allocation2 + $0x18] sm:$0xe]
        %v4381 = vld [vmem:[#allocation2 + $0x24] sm:$0xe]
        %v4382 = vld [vmem:[#allocation2 + $0x30] sm:$0xe]
        %v4383 = vld [vmem:[#allocation2 + $0x3c] sm:$0xe]
        %v4384 = vld [vmem:[#allocation2 + $0x48] sm:$0xe]
        %v4385 = vld [vmem:[#allocation2 + $0x54] sm:$0xe]
        %v4386 = vld [vmem:[#allocation2 + $0x60] sm:$0xe]
        %v4387 = vld [vmem:[#allocation2 + $0x6c] sm:$0xe]
        %vm4418 = vcmask 1042432
        %vm4419 = vcmask 1046532
        %vm4420 = vmor %vm4418, %vm4419
        %v4421 = vrot.slane %v4378, 5
        %v4422 = vrot.slane %v4421, 4
        %v4423 = vrot.slane %v4106, 5
        %v4424 = vsel %vm4420, %v4422, %v4423
        %v4425 = vrot.slane %v4423, 4
        %v4426 = vrot.slane %v4125, 5
        %v4427 = vsel %vm4420, %v4425, %v4426
        %v4428 = vrot.slane %v4379, 5
        %v4429 = vrot.slane %v4428, 4
        %v4430 = vrot.slane %v4108, 5
        %v4431 = vsel %vm4420, %v4429, %v4430
        %v4432 = vrot.slane %v4430, 4
        %v4433 = vrot.slane %v4126, 5
        %v4434 = vsel %vm4420, %v4432, %v4433
        %v4435 = vrot.slane %v4380, 5
        %v4436 = vrot.slane %v4435, 4
        %v4437 = vrot.slane %v4110, 5
        %v4438 = vsel %vm4420, %v4436, %v4437
        %v4439 = vrot.slane %v4437, 4
        %v4440 = vrot.slane %v4127, 5
        %v4441 = vsel %vm4420, %v4439, %v4440
        %v4442 = vrot.slane %v4381, 5
        %v4443 = vrot.slane %v4442, 4
        %v4444 = vrot.slane %v4112, 5
        %v4445 = vsel %vm4420, %v4443, %v4444
        %v4446 = vrot.slane %v4444, 4
        %v4447 = vrot.slane %v4128, 5
        %v4448 = vsel %vm4420, %v4446, %v4447
        %v4449 = vrot.slane %v4382, 5
        %v4450 = vrot.slane %v4449, 4
        %v4451 = vrot.slane %v4114, 5
        %v4452 = vsel %vm4420, %v4450, %v4451
        %v4453 = vrot.slane %v4451, 4
        %v4454 = vrot.slane %v4129, 5
        %v4455 = vsel %vm4420, %v4453, %v4454
        %v4456 = vrot.slane %v4383, 5
        %v4457 = vrot.slane %v4456, 4
        %v4458 = vrot.slane %v4116, 5
        %v4459 = vsel %vm4420, %v4457, %v4458
        %v4460 = vrot.slane %v4458, 4
        %v4461 = vrot.slane %v4130, 5
        %v4462 = vsel %vm4420, %v4460, %v4461
        %v4463 = vrot.slane %v4384, 5
        %v4464 = vrot.slane %v4463, 4
        %v4465 = vrot.slane %v4118, 5
        %v4466 = vsel %vm4420, %v4464, %v4465
        %v4467 = vrot.slane %v4465, 4
        %v4468 = vrot.slane %v4131, 5
        %v4469 = vsel %vm4420, %v4467, %v4468
        %v4470 = vrot.slane %v4385, 5
        %v4471 = vrot.slane %v4470, 4
        %v4472 = vrot.slane %v4120, 5
        %v4473 = vsel %vm4420, %v4471, %v4472
        %v4474 = vrot.slane %v4472, 4
        %v4475 = vrot.slane %v4132, 5
        %v4476 = vsel %vm4420, %v4474, %v4475
        %v4477 = vrot.slane %v4386, 5
        %v4478 = vrot.slane %v4477, 4
        %v4479 = vrot.slane %v4122, 5
        %v4480 = vsel %vm4420, %v4478, %v4479
        %v4481 = vrot.slane %v4479, 4
        %v4482 = vrot.slane %v4133, 5
        %v4483 = vsel %vm4420, %v4481, %v4482
        %v4484 = vrot.slane %v4387, 5
        %v4485 = vrot.slane %v4484, 4
        %v4486 = vrot.slane %v4124, 5
        %v4487 = vsel %vm4420, %v4485, %v4486
        %v4488 = vrot.slane %v4486, 4
        %v4489 = vrot.slane %v4134, 5
        %v4490 = vsel %vm4420, %v4488, %v4489
        %v4491 = vld [vmem:[%s5] sm:$0xf]
        %s4492 = scalar_lea.vmem %s5, 4
        %v4493 = vld [vmem:[%s4492] sm:$0xf]
        %v4494 = vunpack.c.l.b16 %v4151
        %v4495 = vunpack.c.l.b16 %v4161
        %v4496 = vunpack.c.l.b16 %v4175
        %v4497 = vunpack.c.l.b16 %v4185
        %v4498 = vunpack.c.l.b16 %v4199
        %v4499 = vunpack.c.l.b16 %v4209
        %v4500 = vunpack.c.l.b16 %v4223
        %v4501 = vunpack.c.l.b16 %v4233
        %v4502 = vunpack.c.l.b16 %v4247
        %v4503 = vunpack.c.l.b16 %v4257
        %v4504 = vunpack.c.l.b16 %v4271
        %v4505 = vunpack.c.l.b16 %v4281
        %v4506 = vunpack.c.l.b16 %v4295
        %v4507 = vunpack.c.l.b16 %v4305
        %v4508 = vunpack.c.l.b16 %v4319
        %v4509 = vunpack.c.l.b16 %v4329
        %v4510 = vpack.c.b16 %v4495, %v4494
        %v4511 = vpack.c.b16 %v4497, %v4496
        %v4512 = vpack.c.b16 %v4499, %v4498
        %v4513 = vpack.c.b16 %v4501, %v4500
        %v4514 = vpack.c.b16 %v4503, %v4502
        %v4515 = vpack.c.b16 %v4505, %v4504
        %v4516 = vpack.c.b16 %v4507, %v4506
        %v4517 = vpack.c.b16 %v4509, %v4508
        %4526 = vmatprep.subr.bf16.mxu0 0
        %4527 = vmatpush1.bf16.xpose.msra.mxu0 %v4510
        %4528 = vmatprep.subr.bf16.mxu0 0
        %4529 = vmatpush1.bf16.xpose.msra.mxu0 %v4511
        %4530 = vmatprep.subr.bf16.mxu0 0
        %4531 = vmatpush1.bf16.xpose.msra.mxu0 %v4512
        %4532 = vmatprep.subr.bf16.mxu0 0
        %4533 = vmatpush1.bf16.xpose.msra.mxu0 %v4513
        %4534 = vmatprep.subr.bf16.mxu0 0
        %4535 = vmatpush1.bf16.xpose.msra.mxu0 %v4514
        %4536 = vmatprep.subr.bf16.mxu0 0
        %4537 = vmatpush1.bf16.xpose.msra.mxu0 %v4515
        %4538 = vmatprep.subr.bf16.mxu0 0
        %4539 = vmatpush1.bf16.xpose.msra.mxu0 %v4516
        %4540 = vmatprep.subr.bf16.mxu0 0
        %4541 = vmatpush1.bf16.xpose.msra.mxu0 %v4517
        %4542 = vmatprep.subr.bf16.mxu0 0
        %4543 = vmatpush1.bf16.xpose.msra.mxu0 0
        %4544 = vmatprep.subr.bf16.mxu0 0
        %4545 = vmatpush1.bf16.xpose.msra.mxu0 0
        %4546 = vmatprep.subr.bf16.mxu0 0
        %4547 = vmatpush1.bf16.xpose.msra.mxu0 0
        %4548 = vmatprep.subr.bf16.mxu0 0
        %4549 = vmatpush1.bf16.xpose.msra.mxu0 0
        %4550 = vmatprep.subr.bf16.mxu0 0
        %4551 = vmatpush1.bf16.xpose.msra.mxu0 0
        %4552 = vmatprep.subr.bf16.mxu0 0
        %4553 = vmatpush1.bf16.xpose.msra.mxu0 0
        %4554 = vmatprep.subr.bf16.mxu0 0
        %4555 = vmatpush1.bf16.xpose.msra.mxu0 0
        %4556 = vmatprep.subr.bf16.mxu0 0
        %4557 = vmatpush1.bf16.xpose.msra.mxu0 0
        %4558 = vmatprep.mubr.bf16.mxu0 0
        %4559 = vmatmul.mubr.bf16.gmra.mrb[0].mxu0 %v4493
        %v4560 = vpop.f32.mrb[0].mxu0
        %v4561 = vadd.f32 0.0, %v4560
        %v4562 = vpop.f32.mrb[0].mxu0
        %v4563 = vpop.f32.mrb[0].mxu0
        %v4564 = vpop.f32.mrb[0].mxu0
        %4565 = vdwg.mxu0
        %v4574 = vunpack.c.l.b16 %v4105
        %v4575 = vunpack.c.l.b16 %v4106
        %v4576 = vunpack.c.l.b16 %v4107
        %v4577 = vunpack.c.l.b16 %v4108
        %v4578 = vunpack.c.l.b16 %v4109
        %v4579 = vunpack.c.l.b16 %v4110
        %v4580 = vunpack.c.l.b16 %v4111
        %v4581 = vunpack.c.l.b16 %v4112
        %v4582 = vunpack.c.l.b16 %v4113
        %v4583 = vunpack.c.l.b16 %v4114
        %v4584 = vunpack.c.l.b16 %v4115
        %v4585 = vunpack.c.l.b16 %v4116
        %v4586 = vunpack.c.l.b16 %v4117
        %v4587 = vunpack.c.l.b16 %v4118
        %v4588 = vunpack.c.l.b16 %v4119
        %v4589 = vunpack.c.l.b16 %v4120
        %v4590 = vpack.c.b16 %v4575, %v4574
        %v4591 = vpack.c.b16 %v4577, %v4576
        %v4592 = vpack.c.b16 %v4579, %v4578
        %v4593 = vpack.c.b16 %v4581, %v4580
        %v4594 = vpack.c.b16 %v4583, %v4582
        %v4595 = vpack.c.b16 %v4585, %v4584
        %v4596 = vpack.c.b16 %v4587, %v4586
        %v4597 = vpack.c.b16 %v4589, %v4588
        %4606 = vmatprep.subr.bf16.mxu0 0
        %4607 = vmatpush1.bf16.xpose.msra.mxu0 %v4590
        %4608 = vmatprep.subr.bf16.mxu0 0
        %4609 = vmatpush1.bf16.xpose.msra.mxu0 %v4591
        %4610 = vmatprep.subr.bf16.mxu0 0
        %4611 = vmatpush1.bf16.xpose.msra.mxu0 %v4592
        %4612 = vmatprep.subr.bf16.mxu0 0
        %4613 = vmatpush1.bf16.xpose.msra.mxu0 %v4593
        %4614 = vmatprep.subr.bf16.mxu0 0
        %4615 = vmatpush1.bf16.xpose.msra.mxu0 %v4594
        %4616 = vmatprep.subr.bf16.mxu0 0
        %4617 = vmatpush1.bf16.xpose.msra.mxu0 %v4595
        %4618 = vmatprep.subr.bf16.mxu0 0
        %4619 = vmatpush1.bf16.xpose.msra.mxu0 %v4596
        %4620 = vmatprep.subr.bf16.mxu0 0
        %4621 = vmatpush1.bf16.xpose.msra.mxu0 %v4597
        %4622 = vmatprep.subr.bf16.mxu0 0
        %4623 = vmatpush1.bf16.xpose.msra.mxu0 0
        %4624 = vmatprep.subr.bf16.mxu0 0
        %4625 = vmatpush1.bf16.xpose.msra.mxu0 0
        %4626 = vmatprep.subr.bf16.mxu0 0
        %4627 = vmatpush1.bf16.xpose.msra.mxu0 0
        %4628 = vmatprep.subr.bf16.mxu0 0
        %4629 = vmatpush1.bf16.xpose.msra.mxu0 0
        %4630 = vmatprep.subr.bf16.mxu0 0
        %4631 = vmatpush1.bf16.xpose.msra.mxu0 0
        %4632 = vmatprep.subr.bf16.mxu0 0
        %4633 = vmatpush1.bf16.xpose.msra.mxu0 0
        %4634 = vmatprep.subr.bf16.mxu0 0
        %4635 = vmatpush1.bf16.xpose.msra.mxu0 0
        %4636 = vmatprep.subr.bf16.mxu0 0
        %4637 = vmatpush1.bf16.xpose.msra.mxu0 0
        %4638 = vmatprep.mubr.bf16.mxu0 0
        %4639 = vmatmul.mubr.bf16.gmra.mrb[0].mxu0 %v4491
        %v4640 = vpop.f32.mrb[0].mxu0
        %v4641 = vadd.f32 %v4561, %v4640
        %v4642 = vpop.f32.mrb[0].mxu0
        %v4643 = vpop.f32.mrb[0].mxu0
        %v4644 = vpop.f32.mrb[0].mxu0
        %4645 = vdwg.mxu0
        %s4646 = scalar_lea.vmem %s5, 8
        %v4647 = vld [vmem:[%s4646] sm:$0xf]
        %v4648 = vunpack.c.l.b16 %v4424
        %v4649 = vunpack.c.l.b16 %v4427
        %v4650 = vunpack.c.l.b16 %v4431
        %v4651 = vunpack.c.l.b16 %v4434
        %v4652 = vunpack.c.l.b16 %v4438
        %v4653 = vunpack.c.l.b16 %v4441
        %v4654 = vunpack.c.l.b16 %v4445
        %v4655 = vunpack.c.l.b16 %v4448
        %v4656 = vunpack.c.l.b16 %v4452
        %v4657 = vunpack.c.l.b16 %v4455
        %v4658 = vunpack.c.l.b16 %v4459
        %v4659 = vunpack.c.l.b16 %v4462
        %v4660 = vunpack.c.l.b16 %v4466
        %v4661 = vunpack.c.l.b16 %v4469
        %v4662 = vunpack.c.l.b16 %v4473
        %v4663 = vunpack.c.l.b16 %v4476
        %v4664 = vpack.c.b16 %v4649, %v4648
        %v4665 = vpack.c.b16 %v4651, %v4650
        %v4666 = vpack.c.b16 %v4653, %v4652
        %v4667 = vpack.c.b16 %v4655, %v4654
        %v4668 = vpack.c.b16 %v4657, %v4656
        %v4669 = vpack.c.b16 %v4659, %v4658
        %v4670 = vpack.c.b16 %v4661, %v4660
        %v4671 = vpack.c.b16 %v4663, %v4662
        %4680 = vmatprep.subr.bf16.mxu0 0
        %4681 = vmatpush1.bf16.xpose.msra.mxu0 %v4664
        %4682 = vmatprep.subr.bf16.mxu0 0
        %4683 = vmatpush1.bf16.xpose.msra.mxu0 %v4665
        %4684 = vmatprep.subr.bf16.mxu0 0
        %4685 = vmatpush1.bf16.xpose.msra.mxu0 %v4666
        %4686 = vmatprep.subr.bf16.mxu0 0
        %4687 = vmatpush1.bf16.xpose.msra.mxu0 %v4667
        %4688 = vmatprep.subr.bf16.mxu0 0
        %4689 = vmatpush1.bf16.xpose.msra.mxu0 %v4668
        %4690 = vmatprep.subr.bf16.mxu0 0
        %4691 = vmatpush1.bf16.xpose.msra.mxu0 %v4669
        %4692 = vmatprep.subr.bf16.mxu0 0
        %4693 = vmatpush1.bf16.xpose.msra.mxu0 %v4670
        %4694 = vmatprep.subr.bf16.mxu0 0
        %4695 = vmatpush1.bf16.xpose.msra.mxu0 %v4671
        %4696 = vmatprep.subr.bf16.mxu0 0
        %4697 = vmatpush1.bf16.xpose.msra.mxu0 0
        %4698 = vmatprep.subr.bf16.mxu0 0
        %4699 = vmatpush1.bf16.xpose.msra.mxu0 0
        %4700 = vmatprep.subr.bf16.mxu0 0
        %4701 = vmatpush1.bf16.xpose.msra.mxu0 0
        %4702 = vmatprep.subr.bf16.mxu0 0
        %4703 = vmatpush1.bf16.xpose.msra.mxu0 0
        %4704 = vmatprep.subr.bf16.mxu0 0
        %4705 = vmatpush1.bf16.xpose.msra.mxu0 0
        %4706 = vmatprep.subr.bf16.mxu0 0
        %4707 = vmatpush1.bf16.xpose.msra.mxu0 0
        %4708 = vmatprep.subr.bf16.mxu0 0
        %4709 = vmatpush1.bf16.xpose.msra.mxu0 0
        %4710 = vmatprep.subr.bf16.mxu0 0
        %4711 = vmatpush1.bf16.xpose.msra.mxu0 0
        %4712 = vmatprep.mubr.bf16.mxu0 0
        %4713 = vmatmul.mubr.bf16.gmra.mrb[0].mxu0 %v4647
        %v4714 = vpop.f32.mrb[0].mxu0
        %v4715 = vadd.f32 0.0, %v4714
        %v4716 = vpop.f32.mrb[0].mxu0
        %v4717 = vpop.f32.mrb[0].mxu0
        %v4718 = vpop.f32.mrb[0].mxu0
        %4719 = vdwg.mxu0
        %v4720 = vadd.f32 %v4641, %v4715
        %s4721 = scalar_lea.vmem %s5, 12
        %v4722 = vld [vmem:[%s4721] sm:$0xf]
        %v4724 = vunpack.c.l.b16 %v4121
        %v4725 = vunpack.c.l.b16 %v4122
        %v4726 = vpack.c.b16 %v4725, %v4724
        %4728 = vmatprep.subr.bf16.mxu0 0
        %4729 = vmatpush1.bf16.xpose.msra.mxu0 %v4591
        %4730 = vmatprep.subr.bf16.mxu0 0
        %4731 = vmatpush1.bf16.xpose.msra.mxu0 %v4592
        %4732 = vmatprep.subr.bf16.mxu0 0
        %4733 = vmatpush1.bf16.xpose.msra.mxu0 %v4593
        %4734 = vmatprep.subr.bf16.mxu0 0
        %4735 = vmatpush1.bf16.xpose.msra.mxu0 %v4594
        %4736 = vmatprep.subr.bf16.mxu0 0
        %4737 = vmatpush1.bf16.xpose.msra.mxu0 %v4595
        %4738 = vmatprep.subr.bf16.mxu0 0
        %4739 = vmatpush1.bf16.xpose.msra.mxu0 %v4596
        %4740 = vmatprep.subr.bf16.mxu0 0
        %4741 = vmatpush1.bf16.xpose.msra.mxu0 %v4597
        %4742 = vmatprep.subr.bf16.mxu0 0
        %4743 = vmatpush1.bf16.xpose.msra.mxu0 %v4726
        %4744 = vmatprep.subr.bf16.mxu0 0
        %4745 = vmatpush1.bf16.xpose.msra.mxu0 0
        %4746 = vmatprep.subr.bf16.mxu0 0
        %4747 = vmatpush1.bf16.xpose.msra.mxu0 0
        %4748 = vmatprep.subr.bf16.mxu0 0
        %4749 = vmatpush1.bf16.xpose.msra.mxu0 0
        %4750 = vmatprep.subr.bf16.mxu0 0
        %4751 = vmatpush1.bf16.xpose.msra.mxu0 0
        %4752 = vmatprep.subr.bf16.mxu0 0
        %4753 = vmatpush1.bf16.xpose.msra.mxu0 0
        %4754 = vmatprep.subr.bf16.mxu0 0
        %4755 = vmatpush1.bf16.xpose.msra.mxu0 0
        %4756 = vmatprep.subr.bf16.mxu0 0
        %4757 = vmatpush1.bf16.xpose.msra.mxu0 0
        %4758 = vmatprep.subr.bf16.mxu0 0
        %4759 = vmatpush1.bf16.xpose.msra.mxu0 0
        %4760 = vmatprep.mubr.bf16.mxu0 0
        %4761 = vmatmul.mubr.bf16.gmra.mrb[0].mxu0 %v4722
        %v4762 = vpop.f32.mrb[0].mxu0
        %v4763 = vadd.f32 0.0, %v4762
        %v4764 = vpop.f32.mrb[0].mxu0
        %v4765 = vpop.f32.mrb[0].mxu0
        %v4766 = vpop.f32.mrb[0].mxu0
        %4767 = vdwg.mxu0
        %v4768 = vadd.f32 %v4720, %v4763
        %s4769 = scalar_lea.vmem %s5, 16
        %v4770 = vld [vmem:[%s4769] sm:$0xf]
        %v4771 = vunpack.c.l.b16 %v4343
        %v4772 = vunpack.c.l.b16 %v4353
        %v4773 = vpack.c.b16 %v4772, %v4771
        %4775 = vmatprep.subr.bf16.mxu0 0
        %4776 = vmatpush1.bf16.xpose.msra.mxu0 %v4511
        %4777 = vmatprep.subr.bf16.mxu0 0
        %4778 = vmatpush1.bf16.xpose.msra.mxu0 %v4512
        %4779 = vmatprep.subr.bf16.mxu0 0
        %4780 = vmatpush1.bf16.xpose.msra.mxu0 %v4513
        %4781 = vmatprep.subr.bf16.mxu0 0
        %4782 = vmatpush1.bf16.xpose.msra.mxu0 %v4514
        %4783 = vmatprep.subr.bf16.mxu0 0
        %4784 = vmatpush1.bf16.xpose.msra.mxu0 %v4515
        %4785 = vmatprep.subr.bf16.mxu0 0
        %4786 = vmatpush1.bf16.xpose.msra.mxu0 %v4516
        %4787 = vmatprep.subr.bf16.mxu0 0
        %4788 = vmatpush1.bf16.xpose.msra.mxu0 %v4517
        %4789 = vmatprep.subr.bf16.mxu0 0
        %4790 = vmatpush1.bf16.xpose.msra.mxu0 %v4773
        %4791 = vmatprep.subr.bf16.mxu0 0
        %4792 = vmatpush1.bf16.xpose.msra.mxu0 0
        %4793 = vmatprep.subr.bf16.mxu0 0
        %4794 = vmatpush1.bf16.xpose.msra.mxu0 0
        %4795 = vmatprep.subr.bf16.mxu0 0
        %4796 = vmatpush1.bf16.xpose.msra.mxu0 0
        %4797 = vmatprep.subr.bf16.mxu0 0
        %4798 = vmatpush1.bf16.xpose.msra.mxu0 0
        %4799 = vmatprep.subr.bf16.mxu0 0
        %4800 = vmatpush1.bf16.xpose.msra.mxu0 0
        %4801 = vmatprep.subr.bf16.mxu0 0
        %4802 = vmatpush1.bf16.xpose.msra.mxu0 0
        %4803 = vmatprep.subr.bf16.mxu0 0
        %4804 = vmatpush1.bf16.xpose.msra.mxu0 0
        %4805 = vmatprep.subr.bf16.mxu0 0
        %4806 = vmatpush1.bf16.xpose.msra.mxu0 0
        %4807 = vmatprep.mubr.bf16.mxu0 0
        %4808 = vmatmul.mubr.bf16.gmra.mrb[0].mxu0 %v4770
        %v4809 = vpop.f32.mrb[0].mxu0
        %v4810 = vadd.f32 0.0, %v4809
        %v4811 = vpop.f32.mrb[0].mxu0
        %v4812 = vpop.f32.mrb[0].mxu0
        %v4813 = vpop.f32.mrb[0].mxu0
        %4814 = vdwg.mxu0
        %v4815 = vadd.f32 %v4768, %v4810
        %s4816 = scalar_lea.vmem %s5, 20
        %v4817 = vld [vmem:[%s4816] sm:$0xf]
        %v4818 = vunpack.c.l.b16 %v4480
        %v4819 = vunpack.c.l.b16 %v4483
        %v4820 = vpack.c.b16 %v4819, %v4818
        %4822 = vmatprep.subr.bf16.mxu0 0
        %4823 = vmatpush1.bf16.xpose.msra.mxu0 %v4665
        %4824 = vmatprep.subr.bf16.mxu0 0
        %4825 = vmatpush1.bf16.xpose.msra.mxu0 %v4666
        %4826 = vmatprep.subr.bf16.mxu0 0
        %4827 = vmatpush1.bf16.xpose.msra.mxu0 %v4667
        %4828 = vmatprep.subr.bf16.mxu0 0
        %4829 = vmatpush1.bf16.xpose.msra.mxu0 %v4668
        %4830 = vmatprep.subr.bf16.mxu0 0
        %4831 = vmatpush1.bf16.xpose.msra.mxu0 %v4669
        %4832 = vmatprep.subr.bf16.mxu0 0
        %4833 = vmatpush1.bf16.xpose.msra.mxu0 %v4670
        %4834 = vmatprep.subr.bf16.mxu0 0
        %4835 = vmatpush1.bf16.xpose.msra.mxu0 %v4671
        %4836 = vmatprep.subr.bf16.mxu0 0
        %4837 = vmatpush1.bf16.xpose.msra.mxu0 %v4820
        %4838 = vmatprep.subr.bf16.mxu0 0
        %4839 = vmatpush1.bf16.xpose.msra.mxu0 0
        %4840 = vmatprep.subr.bf16.mxu0 0
        %4841 = vmatpush1.bf16.xpose.msra.mxu0 0
        %4842 = vmatprep.subr.bf16.mxu0 0
        %4843 = vmatpush1.bf16.xpose.msra.mxu0 0
        %4844 = vmatprep.subr.bf16.mxu0 0
        %4845 = vmatpush1.bf16.xpose.msra.mxu0 0
        %4846 = vmatprep.subr.bf16.mxu0 0
        %4847 = vmatpush1.bf16.xpose.msra.mxu0 0
        %4848 = vmatprep.subr.bf16.mxu0 0
        %4849 = vmatpush1.bf16.xpose.msra.mxu0 0
        %4850 = vmatprep.subr.bf16.mxu0 0
        %4851 = vmatpush1.bf16.xpose.msra.mxu0 0
        %4852 = vmatprep.subr.bf16.mxu0 0
        %4853 = vmatpush1.bf16.xpose.msra.mxu0 0
        %4854 = vmatprep.mubr.bf16.mxu0 0
        %4855 = vmatmul.mubr.bf16.gmra.mrb[0].mxu0 %v4817
        %v4856 = vpop.f32.mrb[0].mxu0
        %v4857 = vadd.f32 0.0, %v4856
        %v4858 = vpop.f32.mrb[0].mxu0
        %v4859 = vpop.f32.mrb[0].mxu0
        %v4860 = vpop.f32.mrb[0].mxu0
        %4861 = vdwg.mxu0
        %v4862 = vadd.f32 %v4815, %v4857
        %s4863 = scalar_lea.vmem %s5, 24
        %v4864 = vld [vmem:[%s4863] sm:$0xf]
        %v4866 = vunpack.c.l.b16 %v4123
        %v4867 = vunpack.c.l.b16 %v4124
        %v4868 = vpack.c.b16 %v4867, %v4866
        %4870 = vmatprep.subr.bf16.mxu0 0
        %4871 = vmatpush1.bf16.xpose.msra.mxu0 %v4592
        %4872 = vmatprep.subr.bf16.mxu0 0
        %4873 = vmatpush1.bf16.xpose.msra.mxu0 %v4593
        %4874 = vmatprep.subr.bf16.mxu0 0
        %4875 = vmatpush1.bf16.xpose.msra.mxu0 %v4594
        %4876 = vmatprep.subr.bf16.mxu0 0
        %4877 = vmatpush1.bf16.xpose.msra.mxu0 %v4595
        %4878 = vmatprep.subr.bf16.mxu0 0
        %4879 = vmatpush1.bf16.xpose.msra.mxu0 %v4596
        %4880 = vmatprep.subr.bf16.mxu0 0
        %4881 = vmatpush1.bf16.xpose.msra.mxu0 %v4597
        %4882 = vmatprep.subr.bf16.mxu0 0
        %4883 = vmatpush1.bf16.xpose.msra.mxu0 %v4726
        %4884 = vmatprep.subr.bf16.mxu0 0
        %4885 = vmatpush1.bf16.xpose.msra.mxu0 %v4868
        %4886 = vmatprep.subr.bf16.mxu0 0
        %4887 = vmatpush1.bf16.xpose.msra.mxu0 0
        %4888 = vmatprep.subr.bf16.mxu0 0
        %4889 = vmatpush1.bf16.xpose.msra.mxu0 0
        %4890 = vmatprep.subr.bf16.mxu0 0
        %4891 = vmatpush1.bf16.xpose.msra.mxu0 0
        %4892 = vmatprep.subr.bf16.mxu0 0
        %4893 = vmatpush1.bf16.xpose.msra.mxu0 0
        %4894 = vmatprep.subr.bf16.mxu0 0
        %4895 = vmatpush1.bf16.xpose.msra.mxu0 0
        %4896 = vmatprep.subr.bf16.mxu0 0
        %4897 = vmatpush1.bf16.xpose.msra.mxu0 0
        %4898 = vmatprep.subr.bf16.mxu0 0
        %4899 = vmatpush1.bf16.xpose.msra.mxu0 0
        %4900 = vmatprep.subr.bf16.mxu0 0
        %4901 = vmatpush1.bf16.xpose.msra.mxu0 0
        %4902 = vmatprep.mubr.bf16.mxu0 0
        %4903 = vmatmul.mubr.bf16.gmra.mrb[0].mxu0 %v4864
        %v4904 = vpop.f32.mrb[0].mxu0
        %v4905 = vadd.f32 0.0, %v4904
        %v4906 = vpop.f32.mrb[0].mxu0
        %v4907 = vpop.f32.mrb[0].mxu0
        %v4908 = vpop.f32.mrb[0].mxu0
        %4909 = vdwg.mxu0
        %v4910 = vadd.f32 %v4862, %v4905
        %s4911 = scalar_lea.vmem %s5, 28
        %v4912 = vld [vmem:[%s4911] sm:$0xf]
        %v4913 = vunpack.c.l.b16 %v4367
        %v4914 = vunpack.c.l.b16 %v4377
        %v4915 = vpack.c.b16 %v4914, %v4913
        %4917 = vmatprep.subr.bf16.mxu0 0
        %4918 = vmatpush1.bf16.xpose.msra.mxu0 %v4512
        %4919 = vmatprep.subr.bf16.mxu0 0
        %4920 = vmatpush1.bf16.xpose.msra.mxu0 %v4513
        %4921 = vmatprep.subr.bf16.mxu0 0
        %4922 = vmatpush1.bf16.xpose.msra.mxu0 %v4514
        %4923 = vmatprep.subr.bf16.mxu0 0
        %4924 = vmatpush1.bf16.xpose.msra.mxu0 %v4515
        %4925 = vmatprep.subr.bf16.mxu0 0
        %4926 = vmatpush1.bf16.xpose.msra.mxu0 %v4516
        %4927 = vmatprep.subr.bf16.mxu0 0
        %4928 = vmatpush1.bf16.xpose.msra.mxu0 %v4517
        %4929 = vmatprep.subr.bf16.mxu0 0
        %4930 = vmatpush1.bf16.xpose.msra.mxu0 %v4773
        %4931 = vmatprep.subr.bf16.mxu0 0
        %4932 = vmatpush1.bf16.xpose.msra.mxu0 %v4915
        %4933 = vmatprep.subr.bf16.mxu0 0
        %4934 = vmatpush1.bf16.xpose.msra.mxu0 0
        %4935 = vmatprep.subr.bf16.mxu0 0
        %4936 = vmatpush1.bf16.xpose.msra.mxu0 0
        %4937 = vmatprep.subr.bf16.mxu0 0
        %4938 = vmatpush1.bf16.xpose.msra.mxu0 0
        %4939 = vmatprep.subr.bf16.mxu0 0
        %4940 = vmatpush1.bf16.xpose.msra.mxu0 0
        %4941 = vmatprep.subr.bf16.mxu0 0
        %4942 = vmatpush1.bf16.xpose.msra.mxu0 0
        %4943 = vmatprep.subr.bf16.mxu0 0
        %4944 = vmatpush1.bf16.xpose.msra.mxu0 0
        %4945 = vmatprep.subr.bf16.mxu0 0
        %4946 = vmatpush1.bf16.xpose.msra.mxu0 0
        %4947 = vmatprep.subr.bf16.mxu0 0
        %4948 = vmatpush1.bf16.xpose.msra.mxu0 0
        %4949 = vmatprep.mubr.bf16.mxu0 0
        %4950 = vmatmul.mubr.bf16.gmra.mrb[0].mxu0 %v4912
        %v4951 = vpop.f32.mrb[0].mxu0
        %v4952 = vadd.f32 0.0, %v4951
        %v4953 = vpop.f32.mrb[0].mxu0
        %v4954 = vpop.f32.mrb[0].mxu0
        %v4955 = vpop.f32.mrb[0].mxu0
        %4956 = vdwg.mxu0
        %v4957 = vadd.f32 %v4910, %v4952
        %s4958 = scalar_lea.vmem %s5, 32
        %v4959 = vld [vmem:[%s4958] sm:$0xf]
        %v4960 = vunpack.c.l.b16 %v4487
        %v4961 = vunpack.c.l.b16 %v4490
        %v4962 = vpack.c.b16 %v4961, %v4960
        %4964 = vmatprep.subr.bf16.mxu0 0
        %4965 = vmatpush1.bf16.xpose.msra.mxu0 %v4666
        %4966 = vmatprep.subr.bf16.mxu0 0
        %4967 = vmatpush1.bf16.xpose.msra.mxu0 %v4667
        %4968 = vmatprep.subr.bf16.mxu0 0
        %4969 = vmatpush1.bf16.xpose.msra.mxu0 %v4668
        %4970 = vmatprep.subr.bf16.mxu0 0
        %4971 = vmatpush1.bf16.xpose.msra.mxu0 %v4669
        %4972 = vmatprep.subr.bf16.mxu0 0
        %4973 = vmatpush1.bf16.xpose.msra.mxu0 %v4670
        %4974 = vmatprep.subr.bf16.mxu0 0
        %4975 = vmatpush1.bf16.xpose.msra.mxu0 %v4671
        %4976 = vmatprep.subr.bf16.mxu0 0
        %4977 = vmatpush1.bf16.xpose.msra.mxu0 %v4820
        %4978 = vmatprep.subr.bf16.mxu0 0
        %4979 = vmatpush1.bf16.xpose.msra.mxu0 %v4962
        %4980 = vmatprep.subr.bf16.mxu0 0
        %4981 = vmatpush1.bf16.xpose.msra.mxu0 0
        %4982 = vmatprep.subr.bf16.mxu0 0
        %4983 = vmatpush1.bf16.xpose.msra.mxu0 0
        %4984 = vmatprep.subr.bf16.mxu0 0
        %4985 = vmatpush1.bf16.xpose.msra.mxu0 0
        %4986 = vmatprep.subr.bf16.mxu0 0
        %4987 = vmatpush1.bf16.xpose.msra.mxu0 0
        %4988 = vmatprep.subr.bf16.mxu0 0
        %4989 = vmatpush1.bf16.xpose.msra.mxu0 0
        %4990 = vmatprep.subr.bf16.mxu0 0
        %4991 = vmatpush1.bf16.xpose.msra.mxu0 0
        %4992 = vmatprep.subr.bf16.mxu0 0
        %4993 = vmatpush1.bf16.xpose.msra.mxu0 0
        %4994 = vmatprep.subr.bf16.mxu0 0
        %4995 = vmatpush1.bf16.xpose.msra.mxu0 0
        %4996 = vmatprep.mubr.bf16.mxu0 0
        %4997 = vmatmul.mubr.bf16.gmra.mrb[0].mxu0 %v4959
        %v4998 = vpop.f32.mrb[0].mxu0
        %v4999 = vadd.f32 0.0, %v4998
        %v5000 = vpop.f32.mrb[0].mxu0
        %v5001 = vpop.f32.mrb[0].mxu0
        %v5002 = vpop.f32.mrb[0].mxu0
        %5003 = vdwg.mxu0
        %v5004 = vadd.f32 %v4957, %v4999
        %v5005 = vld [vmem:[%s6] sm:$0xff]
        %5007 = vset.pattern.permute.xlu0 0
        %5008 = vperm.xlu0 %5007, %v5005
        %v5009 = vpop.permute.xlu0 %5008
        %v5011 = vadd.f32 %v5004, %v5009
        %v5012 = vld [vmem:[%s329] sm:$0xf]
        %v5013 = vld [vmem:[%s338] sm:$0xf]
        %5015 = vset.pattern.permute.xlu0 0
        %5016 = vperm.xlu0 %5015, %v5013
        %v5017 = vpop.permute.xlu0 %5016
        %v5019 = vsub.f32 %v5012, %v5017
        %v5020 = vld [vmem:[%s338 + $0x4] sm:$0xf]
        %5022 = vset.pattern.permute.xlu0 0
        %5023 = vperm.xlu0 %5022, %v5020
        %v5024 = vpop.permute.xlu0 %5023
        %v5026 = vmul.f32 %v5019, %v5024
        %v5027 = vadd.f32 %v5011, 1.0
        %v5028 = vmul.f32 %v5026, %v5027
        %v5030 = vrot.slane %v5011, 4
        %v5032 = vadd.f32 %v5028, %v5030
        %5033 = vst [vmem:[%s321] sm:$0xf] %v5032
        %s5034 = sand.u32 %s207, 1
        %s5035 = scalar_lea.sflag [#allocation4], %s5034
        %s5036 = sand.u32 %s207, 1
        %s5037 = smul.addr %s5036, 4
        %s5038 = scalar_lea.vmem [#allocation3], %s5037
        // Predicated region
        $region57: #{tpu_custom_call.1} parent=47 // pred_check
          %p5039 = pneg %p217
        $region58: #{tpu_custom_call.1} parent=47 // pred_check_branch
          %5041 = sbr.rel (%p5039) target = $region60
        $region59: #{tpu_custom_call.1} parent=47 // pred_region
          %s5043 = ssub.s32 64, 64
          %5044 = vsyncadd %s5035, %s5043
          %s5045 = smul.addr %s25, 2
          %s5046 = sadd.s32 %s26, %s5045
          %s5047 = smul.addr %s5046, 64
          %s5048 = scalar_lea.hbm %s7, %s5047
          %s5050 = sshll.u32 %s5038, 4
          %s5051 = int_to_ptr.vmem [resolvable:$true] %s5050
          %5053 = dma.vmem_to_hbm [thread:$0]  %s5051, 64, %s5048, %s5035
        $region60: #{tpu_custom_call.1} parent=47 // pred_fallthru
          _
      $region48: #{tpu_custom_call.1} parent=5 // pred_fallthru
        _
      %p5054 = scmp.le.s32.totalorder 2, %s16
      // Predicated region
      $region61: #{tpu_custom_call.1} parent=5 // pred_check
        %p5055 = pneg %p5054
      $region62: #{tpu_custom_call.1} parent=5 // pred_check_branch
        %5057 = sbr.rel (%p5055) target = $region64
      $region63: #{tpu_custom_call.1} parent=5 // pred_region
        %s5058 = ssub.s32 %s16, 2
        // Predicated region
        $region65: #{tpu_custom_call.1} parent=63 // pred_check
          %p5059 = pneg %p223
        $region66: #{tpu_custom_call.1} parent=63 // pred_check_branch
          %5061 = sbr.rel (%p5059) target = $region68
        $region67: #{tpu_custom_call.1} parent=63 // pred_region
          %s5062 = sand.u32 %s208, 1
          %s5063 = scalar_lea.sflag [#allocation4], %s5062
          %s5064 = sand.u32 %s208, 1
          %s5065 = smul.addr %s5064, 4
          %s5066 = scalar_lea.vmem [#allocation3], %s5065
          %5067 = dma.done %s5063, 64
        $region68: #{tpu_custom_call.1} parent=63 // pred_fallthru
          _
      $region64: #{tpu_custom_call.1} parent=5 // pred_fallthru
        _
    $region6: #{tpu_custom_call.1} parent=1 // loop_footer
      %s20 = sadd.s32 1, %s16
    $region7: #{tpu_custom_call.1} parent=1 // loop_footer_branch
      %15 = sbr.rel target = $region3
    $region8: #{tpu_custom_call.1} parent=1 // loop_exit
      _
    %5068 = vsyncpa [#allocation4], 1
    %s5069 = scalar_lea.sflag [#allocation4], 1
    %5070 = vsyncpa %s5069, 1

</llo_original>
